<compile_context>
chip_gen: v6e
topology: v6e:2x2x1
jax: 0.10.0
libtpu: 0.0.40
codegen_flags: <defaults>
</compile_context>

<pallas_src>
import functools

import jax
import jax.numpy as jnp
from jax import lax
from jax.experimental import pallas as pl
from jax.experimental.pallas import tpu as pltpu

LN_EPS = 1e-5  # nn.LayerNorm default


def _layernorm(h, gamma, beta):
    # Single-pass statistics (biased variance, matches nn.LayerNorm); clamp the
    # variance so f32 cancellation (|mu| >> sigma) can't go negative.
    mu = jnp.mean(h, axis=-1, keepdims=True)
    ms = jnp.mean(h * h, axis=-1, keepdims=True)
    var = jnp.maximum(ms - mu * mu, 0.0)
    return (h - mu) * lax.rsqrt(var + LN_EPS) * gamma + beta


def fnn_kernel(x_ref, w1_ref, p1_ref, w2_ref, p2_ref, o_ref):
    cdt = w1_ref.dtype  # compute dtype (bf16) -- set by prepare_params

    p1 = p1_ref[...]    # (3, d_h1) f32: [bias; gamma; beta]
    p2 = p2_ref[...]    # (3, d_h2) f32: [bias; gamma; beta]

    # fc1: cast x in-kernel, MXU matmul with f32 accumulation.
    x = x_ref[...].astype(cdt)
    h = jnp.dot(x, w1_ref[...], preferred_element_type=jnp.float32) + p1[0:1, :]
    h = _layernorm(h, p1[1:2, :], p1[2:3, :])   # ln1 (f32)
    h = jnp.maximum(h, 0.0)                     # relu1; dropout1 = identity

    # fc2
    h = jnp.dot(h.astype(cdt), w2_ref[...],
                preferred_element_type=jnp.float32) + p2[0:1, :]
    h = _layernorm(h, p2[1:2, :], p2[2:3, :])   # ln2 (f32)
    h = jnp.maximum(h, 0.0)                     # relu2; dropout2 = identity

    o_ref[...] = h.astype(o_ref.dtype)


def _vmem_limit_bytes():
    """Generation-aware scoped-VMEM limit: physical capacity minus headroom."""
    try:
        cap = pltpu.get_tpu_info().vmem_capacity_bytes
    except Exception:
        cap = 64 * 1024 * 1024  # conservative (v7x-sized) fallback
    return max(32 * 1024 * 1024, min(cap - 16 * 1024 * 1024, 112 * 1024 * 1024))


def _default_block_b():
    """256 rows fills the 2x256x256 MXU on v6e/v7x; 128 suffices elsewhere."""
    try:
        kind = jax.devices()[0].device_kind.lower()
    except Exception:
        return 128
    return 256 if ("v6" in kind or "v7" in kind) else 128


def prepare_params(params, compute_dtype=jnp.bfloat16):
    """One-time conversion at load time (NOT per forward call):
    weights -> compute_dtype, (bias, gamma, beta) folded into a (3, d_h) f32 slab."""
    return {
        "w1": params["w1"].astype(compute_dtype),
        "w2": params["w2"].astype(compute_dtype),
        "p1": jnp.stack([params["b1"], params["g1"], params["be1"]]).astype(jnp.float32),
        "p2": jnp.stack([params["b2"], params["g2"], params["be2"]]).astype(jnp.float32),
    }


@functools.partial(jax.jit,
                   static_argnames=("block_b", "out_dtype", "single_buffer_params"))
def _fnn_forward(x, prepared, *, block_b, out_dtype, single_buffer_params):
    w1, w2 = prepared["w1"], prepared["w2"]
    p1, p2 = prepared["p1"], prepared["p2"]
    d_in, d_h1 = w1.shape
    d_h2 = w2.shape[1]

    B = x.shape[0]
    B_pad = pl.cdiv(B, block_b) * block_b
    xin = jnp.pad(x, ((0, B_pad - B), (0, 0))) if B_pad != B else x

    # Constant index_map -> DMA'd once, VMEM-resident across the batch grid.
    # Buffered(1) drops the (useless) second pipeline buffer for these blocks.
    def const_spec(shape):
        if single_buffer_params:
            return pl.BlockSpec(shape, lambda i: (0, 0),
                                pipeline_mode=pl.Buffered(1))
        return pl.BlockSpec(shape, lambda i: (0, 0))

    out = pl.pallas_call(
        fnn_kernel,
        out_shape=jax.ShapeDtypeStruct((B_pad, d_h2), out_dtype),
        grid_spec=pltpu.PrefetchScalarGridSpec(
            num_scalar_prefetch=0,
            grid=(B_pad // block_b,),
            in_specs=[
                pl.BlockSpec((block_b, d_in), lambda i: (i, 0)),  # x tile (HBM dtype)
                const_spec((d_in, d_h1)),   # W1 (bf16)
                const_spec((3, d_h1)),      # [b1; gamma1; beta1] (f32)
                const_spec((d_h1, d_h2)),   # W2 (bf16)
                const_spec((3, d_h2)),      # [b2; gamma2; beta2] (f32)
            ],
            out_specs=pl.BlockSpec((block_b, d_h2), lambda i: (i, 0)),
        ),
        compiler_params=pltpu.CompilerParams(
            dimension_semantics=("parallel",),
            vmem_limit_bytes=_vmem_limit_bytes(),
        ),
    )(xin, w1, p1, w2, p2)

    return out[:B] if B_pad != B else out


def fnn_separated(x, prepared, block_b=None, out_dtype=None,
                  single_buffer_params=True):
    """x: (B, d_in). prepared: output of prepare_params. Returns (B, d_h2)."""
    if block_b is None:
        block_b = _default_block_b()
    if out_dtype is None:
        out_dtype = x.dtype  # pass jnp.bfloat16 here to halve output writeback
    return _fnn_forward(x, prepared, block_b=int(block_b),
                        out_dtype=jnp.dtype(out_dtype),
                        single_buffer_params=bool(single_buffer_params))


def init_params(key, d_in, d_h1, d_h2):
    """Deterministic init mimicking PyTorch defaults (uniform +-1/sqrt(fan_in))."""
    k1, k2, k3, k4 = jax.random.split(key, 4)
    lim1 = 1.0 / jnp.sqrt(d_in)
    lim2 = 1.0 / jnp.sqrt(d_h1)
    return {
        "w1": jax.random.uniform(k1, (d_in, d_h1), jnp.float32, -lim1, lim1),
        "b1": jax.random.uniform(k2, (d_h1,), jnp.float32, -lim1, lim1),
        "g1": jnp.ones((d_h1,), jnp.float32),
        "be1": jnp.zeros((d_h1,), jnp.float32),
        "w2": jax.random.uniform(k3, (d_h1, d_h2), jnp.float32, -lim2, lim2),
        "b2": jax.random.uniform(k4, (d_h2,), jnp.float32, -lim2, lim2),
        "g2": jnp.ones((d_h2,), jnp.float32),
        "be2": jnp.zeros((d_h2,), jnp.float32),
    }


def reference(x, prepared):
    """Pure-JAX reference with the same bf16-matmul / f32-LN numerics."""
    w1, w2 = prepared["w1"], prepared["w2"]
    b1, g1, be1 = prepared["p1"]
    b2, g2, be2 = prepared["p2"]
    cdt = w1.dtype
    h = jnp.dot(x.astype(cdt), w1, preferred_element_type=jnp.float32) + b1
    mu = h.mean(-1, keepdims=True)
    var = ((h - mu) ** 2).mean(-1, keepdims=True)
    h = (h - mu) / jnp.sqrt(var + LN_EPS) * g1 + be1
    h = jnp.maximum(h, 0.0)
    h = jnp.dot(h.astype(cdt), w2, preferred_element_type=jnp.float32) + b2
    mu = h.mean(-1, keepdims=True)
    var = ((h - mu) ** 2).mean(-1, keepdims=True)
    h = (h - mu) / jnp.sqrt(var + LN_EPS) * g2 + be2
    return jnp.maximum(h, 0.0)


if __name__ == "__main__":
    # Lane-dense dims (multiples of 128, contraction dims multiples of 256 where
    # possible) and a batch that gives a multi-step grid at block_b=128.
    d_in, d_h1, d_h2 = 256, 256, 128
    B = 256

    key = jax.random.PRNGKey(0)
    kx, kp = jax.random.split(key)
    x = jax.random.normal(kx, (B, d_in), jnp.float32)
    raw_params = init_params(kp, d_in, d_h1, d_h2)
    prepared = prepare_params(raw_params)   # one-time bf16 cast + param folding

    try:
        out = jax.block_until_ready(fnn_separated(x, prepared))
    except Exception:
        # Fallback: this jax build does not accept Buffered(1) single-buffering
        # for the resident weight blocks; run with default double buffering.
        out = jax.block_until_ready(
            fnn_separated(x, prepared, single_buffer_params=False))

    ref = reference(x, prepared)
    assert out.shape == (B, d_h2)
    out_f32 = out.astype(jnp.float32)
    max_err = float(jnp.max(jnp.abs(out_f32 - ref)))
    assert jnp.allclose(out_f32, ref, atol=5e-3, rtol=5e-3), (
        f"mismatch vs reference (max abs err={max_err})")

    print("KERNEL_OK")
</pallas_src>

<mosaic_0001>
module attributes {stable_mosaic.version = 11 : i64} {
  func.func @fnn_kernel(%arg0: i32, %arg1: memref<128x256xf32, #tpu.memory_space<vmem>>, %arg2: memref<256x256xbf16, #tpu.memory_space<vmem>>, %arg3: memref<3x256xf32, #tpu.memory_space<vmem>>, %arg4: memref<256x128xbf16, #tpu.memory_space<vmem>>, %arg5: memref<3x128xf32, #tpu.memory_space<vmem>>, %arg6: memref<128x128xf32, #tpu.memory_space<vmem>>) attributes {dimension_semantics = [#tpu.dimension_semantics<parallel>], iteration_bounds = array<i64: 2>, scalar_prefetch = 0 : i64, scratch_operands = 0 : i64, tpu.core_type = #tpu.core_type<tc>, window_params = [{transform_indices = @transform_0, window_bounds = array<i64: 128, 256>}, {pipeline_mode = #tpu.pipeline_mode<synchronous>, transform_indices = @transform_1, window_bounds = array<i64: 256, 256>}, {pipeline_mode = #tpu.pipeline_mode<synchronous>, transform_indices = @transform_2, window_bounds = array<i64: 3, 256>}, {pipeline_mode = #tpu.pipeline_mode<synchronous>, transform_indices = @transform_3, window_bounds = array<i64: 256, 128>}, {pipeline_mode = #tpu.pipeline_mode<synchronous>, transform_indices = @transform_4, window_bounds = array<i64: 3, 128>}, {transform_indices = @transform_5, window_bounds = array<i64: 128, 128>}]} {
    %c0 = arith.constant 0 : index
    %c0_0 = arith.constant 0 : index
    %0 = vector.load %arg3[%c0, %c0_0] : memref<3x256xf32, #tpu.memory_space<vmem>>, vector<3x256xf32>
    %c0_1 = arith.constant 0 : index
    %c0_2 = arith.constant 0 : index
    %1 = vector.load %arg5[%c0_1, %c0_2] : memref<3x128xf32, #tpu.memory_space<vmem>>, vector<3x128xf32>
    %c0_3 = arith.constant 0 : index
    %c0_4 = arith.constant 0 : index
    %2 = vector.load %arg1[%c0_3, %c0_4] : memref<128x256xf32, #tpu.memory_space<vmem>>, vector<128x256xf32>
    %3 = arith.truncf %2 : vector<128x256xf32> to vector<128x256xbf16>
    %c0_5 = arith.constant 0 : index
    %c0_6 = arith.constant 0 : index
    %4 = vector.load %arg2[%c0_5, %c0_6] : memref<256x256xbf16, #tpu.memory_space<vmem>>, vector<256x256xbf16>
    %cst = arith.constant dense<0.000000e+00> : vector<128x256xf32>
    %5 = tpu.matmul %3, %4, %cst {dimension_numbers = #tpu.dot_dimension_numbers<[1], [0], [0], [1], [0, 0, 1, 1], [], []>} : vector<128x256xbf16>, vector<256x256xbf16>, vector<128x256xf32> -> vector<128x256xf32>
    %6 = vector.extract_strided_slice %0 {offsets = [0, 0], sizes = [1, 256], strides = [1, 1]} : vector<3x256xf32> to vector<1x256xf32>
    %7 = vector.broadcast %6 : vector<1x256xf32> to vector<128x256xf32>
    %8 = arith.addf %5, %7 : vector<128x256xf32>
    %9 = vector.extract_strided_slice %0 {offsets = [1, 0], sizes = [1, 256], strides = [1, 1]} : vector<3x256xf32> to vector<1x256xf32>
    %10 = vector.extract_strided_slice %0 {offsets = [2, 0], sizes = [1, 256], strides = [1, 1]} : vector<3x256xf32> to vector<1x256xf32>
    %cst_7 = arith.constant dense<0.000000e+00> : vector<128xf32>
    %11 = vector.multi_reduction <add>, %8, %cst_7 [1] : vector<128x256xf32> to vector<128xf32>
    %12 = vector.shape_cast %11 : vector<128xf32> to vector<128x1xf32>
    %cst_8 = arith.constant 2.560000e+02 : f32
    %13 = vector.broadcast %cst_8 : f32 to vector<128x1xf32>
    %14 = arith.divf %12, %13 : vector<128x1xf32>
    %15 = arith.mulf %8, %8 : vector<128x256xf32>
    %cst_9 = arith.constant dense<0.000000e+00> : vector<128xf32>
    %16 = vector.multi_reduction <add>, %15, %cst_9 [1] : vector<128x256xf32> to vector<128xf32>
    %17 = vector.shape_cast %16 : vector<128xf32> to vector<128x1xf32>
    %cst_10 = arith.constant 2.560000e+02 : f32
    %18 = vector.broadcast %cst_10 : f32 to vector<128x1xf32>
    %19 = arith.divf %17, %18 : vector<128x1xf32>
    %20 = arith.mulf %14, %14 : vector<128x1xf32>
    %21 = arith.subf %19, %20 : vector<128x1xf32>
    %cst_11 = arith.constant 0.000000e+00 : f32
    %22 = vector.broadcast %cst_11 : f32 to vector<128x1xf32>
    %23 = arith.maximumf %21, %22 : vector<128x1xf32>
    %24 = vector.broadcast %14 : vector<128x1xf32> to vector<128x256xf32>
    %25 = arith.subf %8, %24 : vector<128x256xf32>
    %cst_12 = arith.constant 9.99999974E-6 : f32
    %26 = vector.broadcast %cst_12 : f32 to vector<128x1xf32>
    %27 = arith.addf %23, %26 : vector<128x1xf32>
    %28 = math.rsqrt %27 : vector<128x1xf32>
    %29 = vector.broadcast %28 : vector<128x1xf32> to vector<128x256xf32>
    %30 = arith.mulf %25, %29 : vector<128x256xf32>
    %31 = vector.broadcast %9 : vector<1x256xf32> to vector<128x256xf32>
    %32 = arith.mulf %30, %31 : vector<128x256xf32>
    %33 = vector.broadcast %10 : vector<1x256xf32> to vector<128x256xf32>
    %34 = arith.addf %32, %33 : vector<128x256xf32>
    %cst_13 = arith.constant 0.000000e+00 : f32
    %35 = vector.broadcast %cst_13 : f32 to vector<128x256xf32>
    %36 = arith.maximumf %34, %35 : vector<128x256xf32>
    %37 = arith.truncf %36 : vector<128x256xf32> to vector<128x256xbf16>
    %c0_14 = arith.constant 0 : index
    %c0_15 = arith.constant 0 : index
    %38 = vector.load %arg4[%c0_14, %c0_15] : memref<256x128xbf16, #tpu.memory_space<vmem>>, vector<256x128xbf16>
    %cst_16 = arith.constant dense<0.000000e+00> : vector<128x128xf32>
    %39 = tpu.matmul %37, %38, %cst_16 {dimension_numbers = #tpu.dot_dimension_numbers<[1], [0], [0], [1], [0, 0, 1, 1], [], []>} : vector<128x256xbf16>, vector<256x128xbf16>, vector<128x128xf32> -> vector<128x128xf32>
    %40 = vector.extract_strided_slice %1 {offsets = [0, 0], sizes = [1, 128], strides = [1, 1]} : vector<3x128xf32> to vector<1x128xf32>
    %41 = vector.broadcast %40 : vector<1x128xf32> to vector<128x128xf32>
    %42 = arith.addf %39, %41 : vector<128x128xf32>
    %43 = vector.extract_strided_slice %1 {offsets = [1, 0], sizes = [1, 128], strides = [1, 1]} : vector<3x128xf32> to vector<1x128xf32>
    %44 = vector.extract_strided_slice %1 {offsets = [2, 0], sizes = [1, 128], strides = [1, 1]} : vector<3x128xf32> to vector<1x128xf32>
    %cst_17 = arith.constant dense<0.000000e+00> : vector<128xf32>
    %45 = vector.multi_reduction <add>, %42, %cst_17 [1] : vector<128x128xf32> to vector<128xf32>
    %46 = vector.shape_cast %45 : vector<128xf32> to vector<128x1xf32>
    %cst_18 = arith.constant 1.280000e+02 : f32
    %47 = vector.broadcast %cst_18 : f32 to vector<128x1xf32>
    %48 = arith.divf %46, %47 : vector<128x1xf32>
    %49 = arith.mulf %42, %42 : vector<128x128xf32>
    %cst_19 = arith.constant dense<0.000000e+00> : vector<128xf32>
    %50 = vector.multi_reduction <add>, %49, %cst_19 [1] : vector<128x128xf32> to vector<128xf32>
    %51 = vector.shape_cast %50 : vector<128xf32> to vector<128x1xf32>
    %cst_20 = arith.constant 1.280000e+02 : f32
    %52 = vector.broadcast %cst_20 : f32 to vector<128x1xf32>
    %53 = arith.divf %51, %52 : vector<128x1xf32>
    %54 = arith.mulf %48, %48 : vector<128x1xf32>
    %55 = arith.subf %53, %54 : vector<128x1xf32>
    %cst_21 = arith.constant 0.000000e+00 : f32
    %56 = vector.broadcast %cst_21 : f32 to vector<128x1xf32>
    %57 = arith.maximumf %55, %56 : vector<128x1xf32>
    %58 = vector.broadcast %48 : vector<128x1xf32> to vector<128x128xf32>
    %59 = arith.subf %42, %58 : vector<128x128xf32>
    %cst_22 = arith.constant 9.99999974E-6 : f32
    %60 = vector.broadcast %cst_22 : f32 to vector<128x1xf32>
    %61 = arith.addf %57, %60 : vector<128x1xf32>
    %62 = math.rsqrt %61 : vector<128x1xf32>
    %63 = vector.broadcast %62 : vector<128x1xf32> to vector<128x128xf32>
    %64 = arith.mulf %59, %63 : vector<128x128xf32>
    %65 = vector.broadcast %43 : vector<1x128xf32> to vector<128x128xf32>
    %66 = arith.mulf %64, %65 : vector<128x128xf32>
    %67 = vector.broadcast %44 : vector<1x128xf32> to vector<128x128xf32>
    %68 = arith.addf %66, %67 : vector<128x128xf32>
    %cst_23 = arith.constant 0.000000e+00 : f32
    %69 = vector.broadcast %cst_23 : f32 to vector<128x128xf32>
    %70 = arith.maximumf %68, %69 : vector<128x128xf32>
    %c0_24 = arith.constant 0 : index
    %c0_25 = arith.constant 0 : index
    %71 = vector.load %arg6[%c0_24, %c0_25] : memref<128x128xf32, #tpu.memory_space<vmem>>, vector<128x128xf32>
    tpu.vector_store %arg6[%c0_24, %c0_25], %70 {strides = array<i32>} : memref<128x128xf32, #tpu.memory_space<vmem>>, vector<128x128xf32>,
    return
  }
  func.func @transform_0(%arg0: i32) -> (i32, i32) {
    %c0_i32 = arith.constant 0 : i32
    %c0_i32_0 = arith.constant 0 : i32
    return %arg0, %c0_i32 : i32, i32
  }
  func.func @transform_1(%arg0: i32) -> (i32, i32) {
    %c0_i32 = arith.constant 0 : i32
    %c0_i32_0 = arith.constant 0 : i32
    %c0_i32_1 = arith.constant 0 : i32
    return %c0_i32, %c0_i32_0 : i32, i32
  }
  func.func @transform_2(%arg0: i32) -> (i32, i32) {
    %c0_i32 = arith.constant 0 : i32
    %c0_i32_0 = arith.constant 0 : i32
    %c0_i32_1 = arith.constant 0 : i32
    return %c0_i32, %c0_i32_0 : i32, i32
  }
  func.func @transform_3(%arg0: i32) -> (i32, i32) {
    %c0_i32 = arith.constant 0 : i32
    %c0_i32_0 = arith.constant 0 : i32
    %c0_i32_1 = arith.constant 0 : i32
    return %c0_i32, %c0_i32_0 : i32, i32
  }
  func.func @transform_4(%arg0: i32) -> (i32, i32) {
    %c0_i32 = arith.constant 0 : i32
    %c0_i32_0 = arith.constant 0 : i32
    %c0_i32_1 = arith.constant 0 : i32
    return %c0_i32, %c0_i32_0 : i32, i32
  }
  func.func @transform_5(%arg0: i32) -> (i32, i32) {
    %c0_i32 = arith.constant 0 : i32
    %c0_i32_0 = arith.constant 0 : i32
    return %arg0, %c0_i32 : i32, i32
  }
}

module attributes {stable_mosaic.version = 11 : i64} {
  func.func @fnn_kernel(%arg0: i32, %arg1: memref<128x256xf32, #tpu.memory_space<vmem>>, %arg2: memref<256x256xbf16, #tpu.memory_space<vmem>>, %arg3: memref<3x256xf32, #tpu.memory_space<vmem>>, %arg4: memref<256x128xbf16, #tpu.memory_space<vmem>>, %arg5: memref<3x128xf32, #tpu.memory_space<vmem>>, %arg6: memref<128x128xf32, #tpu.memory_space<vmem>>) attributes {dimension_semantics = [#tpu.dimension_semantics<parallel>], iteration_bounds = array<i64: 2>, scalar_prefetch = 0 : i64, scratch_operands = 0 : i64, tpu.core_type = #tpu.core_type<tc>, window_params = [{transform_indices = @transform_0, window_bounds = array<i64: 128, 256>}, {pipeline_mode = #tpu.pipeline_mode<synchronous>, transform_indices = @transform_1, window_bounds = array<i64: 256, 256>}, {pipeline_mode = #tpu.pipeline_mode<synchronous>, transform_indices = @transform_2, window_bounds = array<i64: 3, 256>}, {pipeline_mode = #tpu.pipeline_mode<synchronous>, transform_indices = @transform_3, window_bounds = array<i64: 256, 128>}, {pipeline_mode = #tpu.pipeline_mode<synchronous>, transform_indices = @transform_4, window_bounds = array<i64: 3, 128>}, {transform_indices = @transform_5, window_bounds = array<i64: 128, 128>}]} {
    %c0 = arith.constant 0 : index
    %c0_0 = arith.constant 0 : index
    %0 = vector.load %arg3[%c0, %c0_0] : memref<3x256xf32, #tpu.memory_space<vmem>>, vector<3x256xf32>
    %c0_1 = arith.constant 0 : index
    %c0_2 = arith.constant 0 : index
    %1 = vector.load %arg5[%c0_1, %c0_2] : memref<3x128xf32, #tpu.memory_space<vmem>>, vector<3x128xf32>
    %c0_3 = arith.constant 0 : index
    %c0_4 = arith.constant 0 : index
    %2 = vector.load %arg1[%c0_3, %c0_4] : memref<128x256xf32, #tpu.memory_space<vmem>>, vector<128x256xf32>
    %3 = arith.truncf %2 : vector<128x256xf32> to vector<128x256xbf16>
    %c0_5 = arith.constant 0 : index
    %c0_6 = arith.constant 0 : index
    %4 = vector.load %arg2[%c0_5, %c0_6] : memref<256x256xbf16, #tpu.memory_space<vmem>>, vector<256x256xbf16>
    %cst = arith.constant dense<0.000000e+00> : vector<128x256xf32>
    %5 = tpu.matmul %3, %4, %cst {dimension_numbers = #tpu.dot_dimension_numbers<[1], [0], [0], [1], [0, 0, 1, 1], [], []>} : vector<128x256xbf16>, vector<256x256xbf16>, vector<128x256xf32> -> vector<128x256xf32>
    %6 = vector.extract_strided_slice %0 {offsets = [0, 0], sizes = [1, 256], strides = [1, 1]} : vector<3x256xf32> to vector<1x256xf32>
    %7 = vector.broadcast %6 : vector<1x256xf32> to vector<128x256xf32>
    %8 = arith.addf %5, %7 : vector<128x256xf32>
    %9 = vector.extract_strided_slice %0 {offsets = [1, 0], sizes = [1, 256], strides = [1, 1]} : vector<3x256xf32> to vector<1x256xf32>
    %10 = vector.extract_strided_slice %0 {offsets = [2, 0], sizes = [1, 256], strides = [1, 1]} : vector<3x256xf32> to vector<1x256xf32>
    %cst_7 = arith.constant dense<0.000000e+00> : vector<128xf32>
    %11 = vector.multi_reduction <add>, %8, %cst_7 [1] : vector<128x256xf32> to vector<128xf32>
    %12 = vector.shape_cast %11 : vector<128xf32> to vector<128x1xf32>
    %cst_8 = arith.constant 2.560000e+02 : f32
    %13 = vector.broadcast %cst_8 : f32 to vector<128x1xf32>
    %14 = arith.divf %12, %13 : vector<128x1xf32>
    %15 = arith.mulf %8, %8 : vector<128x256xf32>
    %cst_9 = arith.constant dense<0.000000e+00> : vector<128xf32>
    %16 = vector.multi_reduction <add>, %15, %cst_9 [1] : vector<128x256xf32> to vector<128xf32>
    %17 = vector.shape_cast %16 : vector<128xf32> to vector<128x1xf32>
    %cst_10 = arith.constant 2.560000e+02 : f32
    %18 = vector.broadcast %cst_10 : f32 to vector<128x1xf32>
    %19 = arith.divf %17, %18 : vector<128x1xf32>
    %20 = arith.mulf %14, %14 : vector<128x1xf32>
    %21 = arith.subf %19, %20 : vector<128x1xf32>
    %cst_11 = arith.constant 0.000000e+00 : f32
    %22 = vector.broadcast %cst_11 : f32 to vector<128x1xf32>
    %23 = arith.maximumf %21, %22 : vector<128x1xf32>
    %24 = vector.broadcast %14 : vector<128x1xf32> to vector<128x256xf32>
    %25 = arith.subf %8, %24 : vector<128x256xf32>
    %cst_12 = arith.constant 9.99999974E-6 : f32
    %26 = vector.broadcast %cst_12 : f32 to vector<128x1xf32>
    %27 = arith.addf %23, %26 : vector<128x1xf32>
    %28 = math.rsqrt %27 : vector<128x1xf32>
    %29 = vector.broadcast %28 : vector<128x1xf32> to vector<128x256xf32>
    %30 = arith.mulf %25, %29 : vector<128x256xf32>
    %31 = vector.broadcast %9 : vector<1x256xf32> to vector<128x256xf32>
    %32 = arith.mulf %30, %31 : vector<128x256xf32>
    %33 = vector.broadcast %10 : vector<1x256xf32> to vector<128x256xf32>
    %34 = arith.addf %32, %33 : vector<128x256xf32>
    %cst_13 = arith.constant 0.000000e+00 : f32
    %35 = vector.broadcast %cst_13 : f32 to vector<128x256xf32>
    %36 = arith.maximumf %34, %35 : vector<128x256xf32>
    %37 = arith.truncf %36 : vector<128x256xf32> to vector<128x256xbf16>
    %c0_14 = arith.constant 0 : index
    %c0_15 = arith.constant 0 : index
    %38 = vector.load %arg4[%c0_14, %c0_15] : memref<256x128xbf16, #tpu.memory_space<vmem>>, vector<256x128xbf16>
    %cst_16 = arith.constant dense<0.000000e+00> : vector<128x128xf32>
    %39 = tpu.matmul %37, %38, %cst_16 {dimension_numbers = #tpu.dot_dimension_numbers<[1], [0], [0], [1], [0, 0, 1, 1], [], []>} : vector<128x256xbf16>, vector<256x128xbf16>, vector<128x128xf32> -> vector<128x128xf32>
    %40 = vector.extract_strided_slice %1 {offsets = [0, 0], sizes = [1, 128], strides = [1, 1]} : vector<3x128xf32> to vector<1x128xf32>
    %41 = vector.broadcast %40 : vector<1x128xf32> to vector<128x128xf32>
    %42 = arith.addf %39, %41 : vector<128x128xf32>
    %43 = vector.extract_strided_slice %1 {offsets = [1, 0], sizes = [1, 128], strides = [1, 1]} : vector<3x128xf32> to vector<1x128xf32>
    %44 = vector.extract_strided_slice %1 {offsets = [2, 0], sizes = [1, 128], strides = [1, 1]} : vector<3x128xf32> to vector<1x128xf32>
    %cst_17 = arith.constant dense<0.000000e+00> : vector<128xf32>
    %45 = vector.multi_reduction <add>, %42, %cst_17 [1] : vector<128x128xf32> to vector<128xf32>
    %46 = vector.shape_cast %45 : vector<128xf32> to vector<128x1xf32>
    %cst_18 = arith.constant 1.280000e+02 : f32
    %47 = vector.broadcast %cst_18 : f32 to vector<128x1xf32>
    %48 = arith.divf %46, %47 : vector<128x1xf32>
    %49 = arith.mulf %42, %42 : vector<128x128xf32>
    %cst_19 = arith.constant dense<0.000000e+00> : vector<128xf32>
    %50 = vector.multi_reduction <add>, %49, %cst_19 [1] : vector<128x128xf32> to vector<128xf32>
    %51 = vector.shape_cast %50 : vector<128xf32> to vector<128x1xf32>
    %cst_20 = arith.constant 1.280000e+02 : f32
    %52 = vector.broadcast %cst_20 : f32 to vector<128x1xf32>
    %53 = arith.divf %51, %52 : vector<128x1xf32>
    %54 = arith.mulf %48, %48 : vector<128x1xf32>
    %55 = arith.subf %53, %54 : vector<128x1xf32>
    %cst_21 = arith.constant 0.000000e+00 : f32
    %56 = vector.broadcast %cst_21 : f32 to vector<128x1xf32>
    %57 = arith.maximumf %55, %56 : vector<128x1xf32>
    %58 = vector.broadcast %48 : vector<128x1xf32> to vector<128x128xf32>
    %59 = arith.subf %42, %58 : vector<128x128xf32>
    %cst_22 = arith.constant 9.99999974E-6 : f32
    %60 = vector.broadcast %cst_22 : f32 to vector<128x1xf32>
    %61 = arith.addf %57, %60 : vector<128x1xf32>
    %62 = math.rsqrt %61 : vector<128x1xf32>
    %63 = vector.broadcast %62 : vector<128x1xf32> to vector<128x128xf32>
    %64 = arith.mulf %59, %63 : vector<128x128xf32>
    %65 = vector.broadcast %43 : vector<1x128xf32> to vector<128x128xf32>
    %66 = arith.mulf %64, %65 : vector<128x128xf32>
    %67 = vector.broadcast %44 : vector<1x128xf32> to vector<128x128xf32>
    %68 = arith.addf %66, %67 : vector<128x128xf32>
    %cst_23 = arith.constant 0.000000e+00 : f32
    %69 = vector.broadcast %cst_23 : f32 to vector<128x128xf32>
    %70 = arith.maximumf %68, %69 : vector<128x128xf32>
    %c0_24 = arith.constant 0 : index
    %c0_25 = arith.constant 0 : index
    %71 = vector.load %arg6[%c0_24, %c0_25] : memref<128x128xf32, #tpu.memory_space<vmem>>, vector<128x128xf32>
    tpu.vector_store %arg6[%c0_24, %c0_25], %70 {strides = array<i32>} : memref<128x128xf32, #tpu.memory_space<vmem>>, vector<128x128xf32>,
    return
  }
  func.func @transform_0(%arg0: i32) -> (i32, i32) {
    %c0_i32 = arith.constant 0 : i32
    %c0_i32_0 = arith.constant 0 : i32
    return %arg0, %c0_i32 : i32, i32
  }
  func.func @transform_1(%arg0: i32) -> (i32, i32) {
    %c0_i32 = arith.constant 0 : i32
    %c0_i32_0 = arith.constant 0 : i32
    %c0_i32_1 = arith.constant 0 : i32
    return %c0_i32, %c0_i32_0 : i32, i32
  }
  func.func @transform_2(%arg0: i32) -> (i32, i32) {
    %c0_i32 = arith.constant 0 : i32
    %c0_i32_0 = arith.constant 0 : i32
    %c0_i32_1 = arith.constant 0 : i32
    return %c0_i32, %c0_i32_0 : i32, i32
  }
  func.func @transform_3(%arg0: i32) -> (i32, i32) {
    %c0_i32 = arith.constant 0 : i32
    %c0_i32_0 = arith.constant 0 : i32
    %c0_i32_1 = arith.constant 0 : i32
    return %c0_i32, %c0_i32_0 : i32, i32
  }
  func.func @transform_4(%arg0: i32) -> (i32, i32) {
    %c0_i32 = arith.constant 0 : i32
    %c0_i32_0 = arith.constant 0 : i32
    %c0_i32_1 = arith.constant 0 : i32
    return %c0_i32, %c0_i32_0 : i32, i32
  }
  func.func @transform_5(%arg0: i32) -> (i32, i32) {
    %c0_i32 = arith.constant 0 : i32
    %c0_i32_0 = arith.constant 0 : i32
    return %arg0, %c0_i32 : i32, i32
  }
}

</mosaic_0001>

<llo_original>
// kernel: _fnn_forward.1
$region0: #{_fnn_forward.1}
  #allocation0 [shape = 'u32[]', space=smem, size = 0x4, offset = 0x4, fixed_abs, tag = 'smem constant byte address 0x4 - core index']
  #allocation1 [shape = 'u32[144,128]{1,0:T(1,128)}', space=vmem, size = 0x12000, scoped, tag = 'internal scratch']
  %s0 = inlined_call_operand.hbm [shape: f32[256,256], index: 0, kind: input, shape index: {}]
  %s1 = inlined_call_operand.hbm [shape: bf16[256,256], index: 1, kind: input, shape index: {}]
  %s2 = inlined_call_operand.hbm [shape: f32[3,256], index: 2, kind: input, shape index: {}]
  %s3 = inlined_call_operand.hbm [shape: bf16[256,128], index: 3, kind: input, shape index: {}]
  %s4 = inlined_call_operand.hbm [shape: f32[3,128], index: 4, kind: input, shape index: {}]
  %s5 = inlined_call_operand.hbm [shape: f32[256,128], index: 5, kind: output, shape index: {}]
  %s6 = sld [smem:[#allocation0]]
  $region73: #{_fnn_forward.1} parent=0
    _
  %s8 = ssub.s32 1, %s6
  %s9 = scalar_select 0, %s8, %s6
  $region1: #{_fnn_forward.1} parent=0
    #allocation2 [shape = 'u8[262144]{0}', space=vmem, size = 0x40000, scoped, tag = 'input window, operand 0']
    #allocation3 [shape = 's32[2]{0}', space=sflag, size = 0x8, scoped, tag = 'scoped memory for _fnn_forward.1']
    #allocation4 [shape = 's32[2]{0}', space=sflag, size = 0x8, scoped, tag = 'scoped memory for _fnn_forward.1']
    #allocation5 [shape = 'u8[131072]{0}', space=vmem, size = 0x20000, scoped, tag = 'input window, operand 1, single buffered']
    #allocation6 [shape = 's32[1]{0}', space=sflag, size = 0x4, scoped, tag = 'scoped memory for _fnn_forward.1']
    #allocation7 [shape = 'u8[4096]{0}', space=vmem, size = 0x1000, scoped, tag = 'input window, operand 2, single buffered']
    #allocation8 [shape = 'u8[65536]{0}', space=vmem, size = 0x10000, scoped, tag = 'input window, operand 3, single buffered']
    #allocation9 [shape = 's32[1]{0}', space=sflag, size = 0x4, scoped, tag = 'scoped memory for _fnn_forward.1']
    #allocation10 [shape = 'u8[2048]{0}', space=vmem, size = 0x800, scoped, tag = 'input window, operand 4, single buffered']
    #allocation11 [shape = 'u8[131072]{0}', space=vmem, size = 0x20000, scoped, tag = 'output window, operand 0']
    %10 = vsyncpa [#allocation3], 0
    %s11 = scalar_lea.sflag [#allocation3], 1
    %12 = vsyncpa %s11, 0
    %13 = vsyncpa [#allocation6], 0
    %14 = vsyncpa [#allocation9], 0
    %15 = vsyncpa [#allocation4], 0
    %s16 = scalar_lea.sflag [#allocation4], 1
    %17 = vsyncpa %s16, 0
    loop: start=0, step=1, limit=4
    $region2: #{_fnn_forward.1} parent=1 // loop_pre_header
      _
    $region3: #{_fnn_forward.1} parent=1 // loop_header
      %s19 = sphi 0, %s23
      %p20 = scmp.ge.s32.totalorder %s19, 4
      %s29 = sphi 0, %s31
      %s32 = sphi 0, %s29
      %s33 = sphi 0, %s32
      %s49 = sphi 0, %s33
      %s53 = sphi 0, %s53
      %s55 = sphi 0, %s53
      %s56 = sphi 0, %s55
      %s70 = sphi 0, %s56
      %s74 = sphi 0, %s74
      %s76 = sphi 0, %s74
      %s77 = sphi 0, %s76
      %s91 = sphi 0, %s77
      %s95 = sphi 0, %s95
      %s97 = sphi 0, %s95
      %s98 = sphi 0, %s97
      %s112 = sphi 0, %s98
      %s116 = sphi 0, %s116
      %s118 = sphi 0, %s116
      %s119 = sphi 0, %s118
      %s133 = sphi 0, %s119
      %s139 = sphi 0, %s141
      %s142 = sphi 0, %s139
      %s143 = sphi 0, %s142
      %s159 = sphi 0, %s143
    $region4: #{_fnn_forward.1} parent=1 // loop_header_branch
      %22 = sbr.rel (%p20) target = $region8
    $region5: #{_fnn_forward.1} parent=1 // loop_body
      %s24 = ssub.s32 %s19, 1
      %s25 = ssub.s32 %s19, 2
      %s26 = sadd.s32 %s19, 1
      %s27 = ssub.s32 %s19, %s26
      %p28 = scmp.eq.s32.totalorder %s27, 0
      %s30 = sadd.s32 %s29, 1
      %s31 = scalar_select %p28, %s29, %s30
      %p34 = pneg %p28
      %p35 = scmp.eq.s32.totalorder %s19, 1
      %p36 = por %p34, %p35
      %p37 = scmp.ne.s32.totalorder %s29, %s32
      %p38 = scmp.eq.s32.totalorder %s19, 0
      %p39 = por %p37, %p38
      %p40 = scmp.ne.s32.totalorder %s29, %s32
      %p41 = scmp.eq.s32.totalorder %s24, 1
      %p42 = por %p40, %p41
      %p43 = scmp.ne.s32.totalorder %s32, %s33
      %p44 = scmp.eq.s32.totalorder %s24, 0
      %p45 = por %p43, %p44
      %p46 = scmp.ne.s32.totalorder %s32, %s33
      %p47 = scmp.eq.s32.totalorder %s25, 1
      %p48 = por %p46, %p47
      %p50 = scmp.ne.s32.totalorder %s33, %s49
      %p51 = scmp.eq.s32.totalorder %s25, 0
      %p52 = por %p50, %p51
      %s54 = sadd.s32 %s53, 1
      %p57 = scmp.eq.s32.totalorder %s19, 1
      %p58 = scmp.ne.s32.totalorder %s53, %s55
      %p59 = scmp.eq.s32.totalorder %s19, 0
      %p60 = por %p58, %p59
      %p61 = scmp.ne.s32.totalorder %s53, %s55
      %p62 = scmp.eq.s32.totalorder %s24, 1
      %p63 = por %p61, %p62
      %p64 = scmp.ne.s32.totalorder %s55, %s56
      %p65 = scmp.eq.s32.totalorder %s24, 0
      %p66 = por %p64, %p65
      %p67 = scmp.ne.s32.totalorder %s55, %s56
      %p68 = scmp.eq.s32.totalorder %s25, 1
      %p69 = por %p67, %p68
      %p71 = scmp.ne.s32.totalorder %s56, %s70
      %p72 = scmp.eq.s32.totalorder %s25, 0
      %p73 = por %p71, %p72
      %s75 = sadd.s32 %s74, 1
      %p78 = scmp.eq.s32.totalorder %s19, 1
      %p79 = scmp.ne.s32.totalorder %s74, %s76
      %p80 = scmp.eq.s32.totalorder %s19, 0
      %p81 = por %p79, %p80
      %p82 = scmp.ne.s32.totalorder %s74, %s76
      %p83 = scmp.eq.s32.totalorder %s24, 1
      %p84 = por %p82, %p83
      %p85 = scmp.ne.s32.totalorder %s76, %s77
      %p86 = scmp.eq.s32.totalorder %s24, 0
      %p87 = por %p85, %p86
      %p88 = scmp.ne.s32.totalorder %s76, %s77
      %p89 = scmp.eq.s32.totalorder %s25, 1
      %p90 = por %p88, %p89
      %p92 = scmp.ne.s32.totalorder %s77, %s91
      %p93 = scmp.eq.s32.totalorder %s25, 0
      %p94 = por %p92, %p93
      %s96 = sadd.s32 %s95, 1
      %p99 = scmp.eq.s32.totalorder %s19, 1
      %p100 = scmp.ne.s32.totalorder %s95, %s97
      %p101 = scmp.eq.s32.totalorder %s19, 0
      %p102 = por %p100, %p101
      %p103 = scmp.ne.s32.totalorder %s95, %s97
      %p104 = scmp.eq.s32.totalorder %s24, 1
      %p105 = por %p103, %p104
      %p106 = scmp.ne.s32.totalorder %s97, %s98
      %p107 = scmp.eq.s32.totalorder %s24, 0
      %p108 = por %p106, %p107
      %p109 = scmp.ne.s32.totalorder %s97, %s98
      %p110 = scmp.eq.s32.totalorder %s25, 1
      %p111 = por %p109, %p110
      %p113 = scmp.ne.s32.totalorder %s98, %s112
      %p114 = scmp.eq.s32.totalorder %s25, 0
      %p115 = por %p113, %p114
      %s117 = sadd.s32 %s116, 1
      %p120 = scmp.eq.s32.totalorder %s19, 1
      %p121 = scmp.ne.s32.totalorder %s116, %s118
      %p122 = scmp.eq.s32.totalorder %s19, 0
      %p123 = por %p121, %p122
      %p124 = scmp.ne.s32.totalorder %s116, %s118
      %p125 = scmp.eq.s32.totalorder %s24, 1
      %p126 = por %p124, %p125
      %p127 = scmp.ne.s32.totalorder %s118, %s119
      %p128 = scmp.eq.s32.totalorder %s24, 0
      %p129 = por %p127, %p128
      %p130 = scmp.ne.s32.totalorder %s118, %s119
      %p131 = scmp.eq.s32.totalorder %s25, 1
      %p132 = por %p130, %p131
      %p134 = scmp.ne.s32.totalorder %s119, %s133
      %p135 = scmp.eq.s32.totalorder %s25, 0
      %p136 = por %p134, %p135
      %s137 = ssub.s32 %s19, %s26
      %p138 = scmp.eq.s32.totalorder %s137, 0
      %s140 = sadd.s32 %s139, 1
      %s141 = scalar_select %p138, %s139, %s140
      %p144 = pneg %p138
      %p145 = scmp.eq.s32.totalorder %s19, 1
      %p146 = por %p144, %p145
      %p147 = scmp.ne.s32.totalorder %s139, %s142
      %p148 = scmp.eq.s32.totalorder %s19, 0
      %p149 = por %p147, %p148
      %p150 = scmp.ne.s32.totalorder %s139, %s142
      %p151 = scmp.eq.s32.totalorder %s24, 1
      %p152 = por %p150, %p151
      %p153 = scmp.ne.s32.totalorder %s142, %s143
      %p154 = scmp.eq.s32.totalorder %s24, 0
      %p155 = por %p153, %p154
      %p156 = scmp.ne.s32.totalorder %s142, %s143
      %p157 = scmp.eq.s32.totalorder %s25, 1
      %p158 = por %p156, %p157
      %p160 = scmp.ne.s32.totalorder %s143, %s159
      %p161 = scmp.eq.s32.totalorder %s25, 0
      %p162 = por %p160, %p161
      %p163 = scmp.le.s32.totalorder 1, %s19
      %p164 = scmp.lt.s32.totalorder %s19, 3
      %p165 = pnand %p163, %p164
      %p166 = pneg %p165
      // Predicated region
      $region9: #{_fnn_forward.1} parent=5 // pred_check
        _
      $region10: #{_fnn_forward.1} parent=5 // pred_check_branch
        %168 = sbr.rel (%p165) target = $region12
      $region11: #{_fnn_forward.1} parent=5 // pred_region
        %s169 = ssub.s32 %s19, 1
        // Predicated region
        $region13: #{_fnn_forward.1} parent=11 // pred_check
          %p170 = pneg %p66
        $region14: #{_fnn_forward.1} parent=11 // pred_check_branch
          %172 = sbr.rel (%p170) target = $region16
        $region15: #{_fnn_forward.1} parent=11 // pred_region
          %s174 = ssub.s32 4096, 4096
          %175 = vsyncadd [#allocation6], %s174
          %s176 = sshll.u32 [#allocation5], 4
          %s177 = int_to_ptr.vmem [resolvable:$true] %s176
          %182 = dma.hbm_to_vmem [thread:$0]  %s1, 4096, %s177, [#allocation6], 128, 128, 8
        $region16: #{_fnn_forward.1} parent=11 // pred_fallthru
          _
        // Predicated region
        $region17: #{_fnn_forward.1} parent=11 // pred_check
          %p183 = pneg %p87
        $region18: #{_fnn_forward.1} parent=11 // pred_check_branch
          %185 = sbr.rel (%p183) target = $region20
        $region19: #{_fnn_forward.1} parent=11 // pred_region
          %s187 = ssub.s32 128, 128
          %188 = vsyncadd [#allocation6], %s187
          %s190 = sshll.u32 [#allocation7], 4
          %s191 = int_to_ptr.vmem [resolvable:$true] %s190
          %193 = dma.hbm_to_vmem [thread:$0]  %s2, 128, %s191, [#allocation6]
        $region20: #{_fnn_forward.1} parent=11 // pred_fallthru
          _
        // Predicated region
        $region21: #{_fnn_forward.1} parent=11 // pred_check
          %p194 = pneg %p108
        $region22: #{_fnn_forward.1} parent=11 // pred_check_branch
          %196 = sbr.rel (%p194) target = $region24
        $region23: #{_fnn_forward.1} parent=11 // pred_region
          %s198 = ssub.s32 2048, 2048
          %199 = vsyncadd [#allocation9], %s198
          %s200 = sshll.u32 [#allocation8], 4
          %s201 = int_to_ptr.vmem [resolvable:$true] %s200
          %206 = dma.hbm_to_vmem [thread:$0]  %s3, 2048, %s201, [#allocation9], 64, 64, 4
        $region24: #{_fnn_forward.1} parent=11 // pred_fallthru
          _
        // Predicated region
        $region25: #{_fnn_forward.1} parent=11 // pred_check
          %p207 = pneg %p129
        $region26: #{_fnn_forward.1} parent=11 // pred_check_branch
          %209 = sbr.rel (%p207) target = $region28
        $region27: #{_fnn_forward.1} parent=11 // pred_region
          %s211 = ssub.s32 64, 64
          %212 = vsyncadd [#allocation9], %s211
          %s214 = sshll.u32 [#allocation10], 4
          %s215 = int_to_ptr.vmem [resolvable:$true] %s214
          %217 = dma.hbm_to_vmem [thread:$0]  %s4, 64, %s215, [#allocation9]
        $region28: #{_fnn_forward.1} parent=11 // pred_fallthru
          _
      $region12: #{_fnn_forward.1} parent=5 // pred_fallthru
        _
      %p218 = scmp.lt.s32.totalorder %s19, 2
      // Predicated region
      $region29: #{_fnn_forward.1} parent=5 // pred_check
        %p219 = pneg %p218
      $region30: #{_fnn_forward.1} parent=5 // pred_check_branch
        %221 = sbr.rel (%p219) target = $region32
      $region31: #{_fnn_forward.1} parent=5 // pred_region
        // Predicated region
        $region33: #{_fnn_forward.1} parent=31 // pred_check
          %p222 = pneg %p39
        $region34: #{_fnn_forward.1} parent=31 // pred_check_branch
          %224 = sbr.rel (%p222) target = $region36
        $region35: #{_fnn_forward.1} parent=31 // pred_region
          %s225 = sand.u32 %s29, 1
          %s226 = scalar_lea.sflag [#allocation3], %s225
          %s227 = sand.u32 %s29, 1
          %s228 = smul.addr %s227, 256
          %s229 = scalar_lea.vmem [#allocation2], %s228
          %s230 = smul.u32 16, %s19
          %s232 = ssub.s32 4096, 4096
          %233 = vsyncadd %s226, %s232
          %s234 = smul.addr %s230, 2
          %s235 = smul.addr %s234, 128
          %s236 = scalar_lea.hbm %s0, %s235
          %s237 = sshll.u32 %s229, 4
          %s238 = int_to_ptr.vmem [resolvable:$true] %s237
          %243 = dma.hbm_to_vmem [thread:$0]  %s236, 4096, %s238, %s226, 256, 256, 16
        $region36: #{_fnn_forward.1} parent=31 // pred_fallthru
          _
      $region32: #{_fnn_forward.1} parent=5 // pred_fallthru
        _
      %p244 = scmp.le.s32.totalorder 1, %s19
      %p245 = scmp.lt.s32.totalorder %s19, 3
      %p246 = pnand %p244, %p245
      %p247 = pneg %p246
      // Predicated region
      $region37: #{_fnn_forward.1} parent=5 // pred_check
        _
      $region38: #{_fnn_forward.1} parent=5 // pred_check_branch
        %249 = sbr.rel (%p246) target = $region40
      $region39: #{_fnn_forward.1} parent=5 // pred_region
        %s250 = ssub.s32 %s19, 1
        %s251 = sand.u32 %s32, 1
        %s252 = scalar_lea.sflag [#allocation3], %s251
        %s253 = sand.u32 %s32, 1
        %s254 = smul.addr %s253, 256
        %s255 = scalar_lea.vmem [#allocation2], %s254
        // Predicated region
        $region41: #{_fnn_forward.1} parent=39 // pred_check
          %p256 = pneg %p45
        $region42: #{_fnn_forward.1} parent=39 // pred_check_branch
          %258 = sbr.rel (%p256) target = $region44
        $region43: #{_fnn_forward.1} parent=39 // pred_region
          %259 = dma.done %s252, 4096
        $region44: #{_fnn_forward.1} parent=39 // pred_fallthru
          _
        // Predicated region
        $region45: #{_fnn_forward.1} parent=39 // pred_check
          %p260 = pneg %p66
        $region46: #{_fnn_forward.1} parent=39 // pred_check_branch
          %262 = sbr.rel (%p260) target = $region48
        $region47: #{_fnn_forward.1} parent=39 // pred_region
          %263 = dma.done [#allocation6], 4096
        $region48: #{_fnn_forward.1} parent=39 // pred_fallthru
          _
        // Predicated region
        $region49: #{_fnn_forward.1} parent=39 // pred_check
          %p264 = pneg %p87
        $region50: #{_fnn_forward.1} parent=39 // pred_check_branch
          %266 = sbr.rel (%p264) target = $region52
        $region51: #{_fnn_forward.1} parent=39 // pred_region
          %267 = dma.done [#allocation6], 128
        $region52: #{_fnn_forward.1} parent=39 // pred_fallthru
          _
        // Predicated region
        $region53: #{_fnn_forward.1} parent=39 // pred_check
          %p268 = pneg %p108
        $region54: #{_fnn_forward.1} parent=39 // pred_check_branch
          %270 = sbr.rel (%p268) target = $region56
        $region55: #{_fnn_forward.1} parent=39 // pred_region
          %271 = dma.done [#allocation9], 2048
        $region56: #{_fnn_forward.1} parent=39 // pred_fallthru
          _
        // Predicated region
        $region57: #{_fnn_forward.1} parent=39 // pred_check
          %p272 = pneg %p129
        $region58: #{_fnn_forward.1} parent=39 // pred_check_branch
          %274 = sbr.rel (%p272) target = $region60
        $region59: #{_fnn_forward.1} parent=39 // pred_region
          %275 = dma.done [#allocation9], 64
        $region60: #{_fnn_forward.1} parent=39 // pred_fallthru
          _
        %s276 = sand.u32 %s32, 1
        %s277 = scalar_lea.sflag [#allocation3], %s276
        %s278 = sand.u32 %s32, 1
        %s279 = smul.addr %s278, 256
        %s280 = scalar_lea.vmem [#allocation2], %s279
        %p281 = pneg %p45
        %p282 = pneg %p42
        %p283 = pneg %p66
        %p284 = pneg %p63
        %p285 = pneg %p87
        %p286 = pneg %p84
        %p287 = pneg %p108
        %p288 = pneg %p105
        %p289 = pneg %p129
        %p290 = pneg %p126
        %p291 = pneg %p155
        %p292 = pneg %p152
        %s293 = sand.u32 %s142, 1
        %s294 = scalar_lea.sflag [#allocation4], %s293
        %s295 = sand.u32 %s142, 1
        %s296 = smul.addr %s295, 128
        %s297 = scalar_lea.vmem [#allocation11], %s296
        %s298 = smul.u32 16, %s24
        %s299 = smul.u32 16, %s24
        %v301 = vld [vmem:[#allocation7] sm:$0x77]
        %v302 = vld [vmem:[#allocation10] sm:$0x7]
        %v303 = vld [vmem:[%s255] sm:$0xff]
        %v304 = vld [vmem:[%s255 + $0x8] sm:$0xff]
        %v305 = vld [vmem:[%s255 + $0x10] sm:$0xff]
        %v306 = vld [vmem:[%s255 + $0x18] sm:$0xff]
        %v307 = vld [vmem:[%s255 + $0x20] sm:$0xff]
        %v308 = vld [vmem:[%s255 + $0x28] sm:$0xff]
        %v309 = vld [vmem:[%s255 + $0x30] sm:$0xff]
        %v310 = vld [vmem:[%s255 + $0x38] sm:$0xff]
        %v311 = vld [vmem:[%s255 + $0x40] sm:$0xff]
        %v312 = vld [vmem:[%s255 + $0x48] sm:$0xff]
        %v313 = vld [vmem:[%s255 + $0x50] sm:$0xff]
        %v314 = vld [vmem:[%s255 + $0x58] sm:$0xff]
        %v315 = vld [vmem:[%s255 + $0x60] sm:$0xff]
        %v316 = vld [vmem:[%s255 + $0x68] sm:$0xff]
        %v317 = vld [vmem:[%s255 + $0x70] sm:$0xff]
        %v318 = vld [vmem:[%s255 + $0x78] sm:$0xff]
        %v319 = vld [vmem:[%s255 + $0x80] sm:$0xff]
        %v320 = vld [vmem:[%s255 + $0x88] sm:$0xff]
        %v321 = vld [vmem:[%s255 + $0x90] sm:$0xff]
        %v322 = vld [vmem:[%s255 + $0x98] sm:$0xff]
        %v323 = vld [vmem:[%s255 + $0xa0] sm:$0xff]
        %v324 = vld [vmem:[%s255 + $0xa8] sm:$0xff]
        %v325 = vld [vmem:[%s255 + $0xb0] sm:$0xff]
        %v326 = vld [vmem:[%s255 + $0xb8] sm:$0xff]
        %v327 = vld [vmem:[%s255 + $0xc0] sm:$0xff]
        %v328 = vld [vmem:[%s255 + $0xc8] sm:$0xff]
        %v329 = vld [vmem:[%s255 + $0xd0] sm:$0xff]
        %v330 = vld [vmem:[%s255 + $0xd8] sm:$0xff]
        %v331 = vld [vmem:[%s255 + $0xe0] sm:$0xff]
        %v332 = vld [vmem:[%s255 + $0xe8] sm:$0xff]
        %v333 = vld [vmem:[%s255 + $0xf0] sm:$0xff]
        %v334 = vld [vmem:[%s255 + $0xf8] sm:$0xff]
        %v335 = vpack.c.bf16 %v305, %v303
        %v336 = vpack.c.bf16 %v306, %v304
        %v337 = vpack.c.bf16 %v309, %v307
        %v338 = vpack.c.bf16 %v310, %v308
        %v339 = vpack.c.bf16 %v313, %v311
        %v340 = vpack.c.bf16 %v314, %v312
        %v341 = vpack.c.bf16 %v317, %v315
        %v342 = vpack.c.bf16 %v318, %v316
        %v343 = vpack.c.bf16 %v321, %v319
        %v344 = vpack.c.bf16 %v322, %v320
        %v345 = vpack.c.bf16 %v325, %v323
        %v346 = vpack.c.bf16 %v326, %v324
        %v347 = vpack.c.bf16 %v329, %v327
        %v348 = vpack.c.bf16 %v330, %v328
        %v349 = vpack.c.bf16 %v333, %v331
        %v350 = vpack.c.bf16 %v334, %v332
        %v351 = vld [vmem:[#allocation5] sm:$0xff]
        %v352 = vld [vmem:[#allocation5 + $0x8] sm:$0xff]
        %v353 = vld [vmem:[#allocation5 + $0x10] sm:$0xff]
        %v354 = vld [vmem:[#allocation5 + $0x18] sm:$0xff]
        %v355 = vld [vmem:[#allocation5 + $0x20] sm:$0xff]
        %v356 = vld [vmem:[#allocation5 + $0x28] sm:$0xff]
        %v357 = vld [vmem:[#allocation5 + $0x30] sm:$0xff]
        %v358 = vld [vmem:[#allocation5 + $0x38] sm:$0xff]
        %v359 = vld [vmem:[#allocation5 + $0x40] sm:$0xff]
        %v360 = vld [vmem:[#allocation5 + $0x48] sm:$0xff]
        %v361 = vld [vmem:[#allocation5 + $0x50] sm:$0xff]
        %v362 = vld [vmem:[#allocation5 + $0x58] sm:$0xff]
        %v363 = vld [vmem:[#allocation5 + $0x60] sm:$0xff]
        %v364 = vld [vmem:[#allocation5 + $0x68] sm:$0xff]
        %v365 = vld [vmem:[#allocation5 + $0x70] sm:$0xff]
        %v366 = vld [vmem:[#allocation5 + $0x78] sm:$0xff]
        %v367 = vld [vmem:[#allocation5 + $0x80] sm:$0xff]
        %v368 = vld [vmem:[#allocation5 + $0x88] sm:$0xff]
        %v369 = vld [vmem:[#allocation5 + $0x90] sm:$0xff]
        %v370 = vld [vmem:[#allocation5 + $0x98] sm:$0xff]
        %v371 = vld [vmem:[#allocation5 + $0xa0] sm:$0xff]
        %v372 = vld [vmem:[#allocation5 + $0xa8] sm:$0xff]
        %v373 = vld [vmem:[#allocation5 + $0xb0] sm:$0xff]
        %v374 = vld [vmem:[#allocation5 + $0xb8] sm:$0xff]
        %v375 = vld [vmem:[#allocation5 + $0xc0] sm:$0xff]
        %v376 = vld [vmem:[#allocation5 + $0xc8] sm:$0xff]
        %v377 = vld [vmem:[#allocation5 + $0xd0] sm:$0xff]
        %v378 = vld [vmem:[#allocation5 + $0xd8] sm:$0xff]
        %v379 = vld [vmem:[#allocation5 + $0xe0] sm:$0xff]
        %v380 = vld [vmem:[#allocation5 + $0xe8] sm:$0xff]
        %v381 = vld [vmem:[#allocation5 + $0xf0] sm:$0xff]
        %v382 = vld [vmem:[#allocation5 + $0xf8] sm:$0xff]
        %v384 = vlaneseq
        %v385 = vshrl.u32 %v384, 7
        %v386 = vsub.s32 0, %v385
        %v387 = vrot.slane %v301, %v386
        %v388 = vlaneseq
        %v389 = vshrl.u32 %v388, 7
        %v390 = vsub.s32 4, %v389
        %v391 = vrot.slane %v301, %v390
        %v394 = vlaneseq
        %v395 = vshrl.u32 %v394, 7
        %v396 = vsub.s32 0, %v395
        %v397 = vrot.slane %v387, %v396
        %v398 = vlaneseq
        %v399 = vshrl.u32 %v398, 7
        %v400 = vsub.s32 0, %v399
        %v401 = vrot.slane %v391, %v400
        %v434 = vunpack.c.l.b16 %v351
        %v435 = vunpack.c.h.b16 %v351
        %v436 = vunpack.c.l.b16 %v352
        %v437 = vunpack.c.h.b16 %v352
        %v438 = vunpack.c.l.b16 %v353
        %v439 = vunpack.c.h.b16 %v353
        %v440 = vunpack.c.l.b16 %v354
        %v441 = vunpack.c.h.b16 %v354
        %v442 = vunpack.c.l.b16 %v355
        %v443 = vunpack.c.h.b16 %v355
        %v444 = vunpack.c.l.b16 %v356
        %v445 = vunpack.c.h.b16 %v356
        %v446 = vunpack.c.l.b16 %v357
        %v447 = vunpack.c.h.b16 %v357
        %v448 = vunpack.c.l.b16 %v358
        %v449 = vunpack.c.h.b16 %v358
        %v450 = vunpack.c.l.b16 %v359
        %v451 = vunpack.c.h.b16 %v359
        %v452 = vunpack.c.l.b16 %v360
        %v453 = vunpack.c.h.b16 %v360
        %v454 = vunpack.c.l.b16 %v361
        %v455 = vunpack.c.h.b16 %v361
        %v456 = vunpack.c.l.b16 %v362
        %v457 = vunpack.c.h.b16 %v362
        %v458 = vunpack.c.l.b16 %v363
        %v459 = vunpack.c.h.b16 %v363
        %v460 = vunpack.c.l.b16 %v364
        %v461 = vunpack.c.h.b16 %v364
        %v462 = vunpack.c.l.b16 %v365
        %v463 = vunpack.c.h.b16 %v365
        %v464 = vunpack.c.l.b16 %v366
        %v465 = vunpack.c.h.b16 %v366
        %v466 = vunpack.c.l.b16 %v367
        %v467 = vunpack.c.h.b16 %v367
        %v468 = vunpack.c.l.b16 %v368
        %v469 = vunpack.c.h.b16 %v368
        %v470 = vunpack.c.l.b16 %v369
        %v471 = vunpack.c.h.b16 %v369
        %v472 = vunpack.c.l.b16 %v370
        %v473 = vunpack.c.h.b16 %v370
        %v474 = vunpack.c.l.b16 %v371
        %v475 = vunpack.c.h.b16 %v371
        %v476 = vunpack.c.l.b16 %v372
        %v477 = vunpack.c.h.b16 %v372
        %v478 = vunpack.c.l.b16 %v373
        %v479 = vunpack.c.h.b16 %v373
        %v480 = vunpack.c.l.b16 %v374
        %v481 = vunpack.c.h.b16 %v374
        %v482 = vunpack.c.l.b16 %v375
        %v483 = vunpack.c.h.b16 %v375
        %v484 = vunpack.c.l.b16 %v376
        %v485 = vunpack.c.h.b16 %v376
        %v486 = vunpack.c.l.b16 %v377
        %v487 = vunpack.c.h.b16 %v377
        %v488 = vunpack.c.l.b16 %v378
        %v489 = vunpack.c.h.b16 %v378
        %v490 = vunpack.c.l.b16 %v379
        %v491 = vunpack.c.h.b16 %v379
        %v492 = vunpack.c.l.b16 %v380
        %v493 = vunpack.c.h.b16 %v380
        %v494 = vunpack.c.l.b16 %v381
        %v495 = vunpack.c.h.b16 %v381
        %v496 = vunpack.c.l.b16 %v382
        %v497 = vunpack.c.h.b16 %v382
        %v498 = vpack.c.b16 %v436, %v434
        %v499 = vpack.c.b16 %v437, %v435
        %v500 = vpack.c.b16 %v440, %v438
        %v501 = vpack.c.b16 %v441, %v439
        %v502 = vpack.c.b16 %v444, %v442
        %v503 = vpack.c.b16 %v445, %v443
        %v504 = vpack.c.b16 %v448, %v446
        %v505 = vpack.c.b16 %v449, %v447
        %v506 = vpack.c.b16 %v452, %v450
        %v507 = vpack.c.b16 %v453, %v451
        %v508 = vpack.c.b16 %v456, %v454
        %v509 = vpack.c.b16 %v457, %v455
        %v510 = vpack.c.b16 %v460, %v458
        %v511 = vpack.c.b16 %v461, %v459
        %v512 = vpack.c.b16 %v464, %v462
        %v513 = vpack.c.b16 %v465, %v463
        %v514 = vpack.c.b16 %v468, %v466
        %v515 = vpack.c.b16 %v469, %v467
        %v516 = vpack.c.b16 %v472, %v470
        %v517 = vpack.c.b16 %v473, %v471
        %v518 = vpack.c.b16 %v476, %v474
        %v519 = vpack.c.b16 %v477, %v475
        %v520 = vpack.c.b16 %v480, %v478
        %v521 = vpack.c.b16 %v481, %v479
        %v522 = vpack.c.b16 %v484, %v482
        %v523 = vpack.c.b16 %v485, %v483
        %v524 = vpack.c.b16 %v488, %v486
        %v525 = vpack.c.b16 %v489, %v487
        %v526 = vpack.c.b16 %v492, %v490
        %v527 = vpack.c.b16 %v493, %v491
        %v528 = vpack.c.b16 %v496, %v494
        %v529 = vpack.c.b16 %v497, %v495
        %562 = vmatprep.subr.bf16.mxu0 %v513
        %563 = vmatpush1.bf16.msra.mxu0 %v512
        %564 = vmatprep.subr.bf16.mxu0 %v511
        %565 = vmatpush1.bf16.msra.mxu0 %v510
        %566 = vmatprep.subr.bf16.mxu0 %v509
        %567 = vmatpush1.bf16.msra.mxu0 %v508
        %568 = vmatprep.subr.bf16.mxu0 %v507
        %569 = vmatpush1.bf16.msra.mxu0 %v506
        %570 = vmatprep.subr.bf16.mxu0 %v505
        %571 = vmatpush1.bf16.msra.mxu0 %v504
        %572 = vmatprep.subr.bf16.mxu0 %v503
        %573 = vmatpush1.bf16.msra.mxu0 %v502
        %574 = vmatprep.subr.bf16.mxu0 %v501
        %575 = vmatpush1.bf16.msra.mxu0 %v500
        %576 = vmatprep.subr.bf16.mxu0 %v499
        %577 = vmatpush1.bf16.msra.mxu0 %v498
        %578 = vmatprep.subr.bf16.mxu0 %v529
        %579 = vmatpush2.bf16.msra.mxu0 %v528
        %580 = vmatprep.subr.bf16.mxu0 %v527
        %581 = vmatpush2.bf16.msra.mxu0 %v526
        %582 = vmatprep.subr.bf16.mxu0 %v525
        %583 = vmatpush2.bf16.msra.mxu0 %v524
        %584 = vmatprep.subr.bf16.mxu0 %v523
        %585 = vmatpush2.bf16.msra.mxu0 %v522
        %586 = vmatprep.subr.bf16.mxu0 %v521
        %587 = vmatpush2.bf16.msra.mxu0 %v520
        %588 = vmatprep.subr.bf16.mxu0 %v519
        %589 = vmatpush2.bf16.msra.mxu0 %v518
        %590 = vmatprep.subr.bf16.mxu0 %v517
        %591 = vmatpush2.bf16.msra.mxu0 %v516
        %592 = vmatprep.subr.bf16.mxu0 %v515
        %593 = vmatpush2.bf16.msra.mxu0 %v514
        %594 = vmatprep.mubr.bf16.mxu0 %v336
        %595 = vmatmul.mubr.bf16.gmra.mxu0 %v335
        %v596 = vpop.f32.mrf.mxu0
        %v597 = vadd.f32 %v397, %v596
        %v598 = vpop.f32.mrf.mxu0
        %v599 = vadd.f32 %v401, %v598
        %v600 = vpop.f32.mrf.mxu0
        %v601 = vadd.f32 %v397, %v600
        %v602 = vpop.f32.mrf.mxu0
        %v603 = vadd.f32 %v401, %v602
        %604 = vmatprep.mubr.bf16.mxu0 %v338
        %605 = vmatmul.mubr.bf16.gmra.mxu0 %v337
        %v606 = vpop.f32.mrf.mxu0
        %v607 = vadd.f32 %v397, %v606
        %v608 = vpop.f32.mrf.mxu0
        %v609 = vadd.f32 %v401, %v608
        %v610 = vpop.f32.mrf.mxu0
        %v611 = vadd.f32 %v397, %v610
        %v612 = vpop.f32.mrf.mxu0
        %v613 = vadd.f32 %v401, %v612
        %614 = vmatprep.mubr.bf16.mxu0 %v340
        %615 = vmatmul.mubr.bf16.gmra.mxu0 %v339
        %v616 = vpop.f32.mrf.mxu0
        %v617 = vadd.f32 %v397, %v616
        %v618 = vpop.f32.mrf.mxu0
        %v619 = vadd.f32 %v401, %v618
        %v620 = vpop.f32.mrf.mxu0
        %v621 = vadd.f32 %v397, %v620
        %v622 = vpop.f32.mrf.mxu0
        %v623 = vadd.f32 %v401, %v622
        %624 = vmatprep.mubr.bf16.mxu0 %v342
        %625 = vmatmul.mubr.bf16.gmra.mxu0 %v341
        %v626 = vpop.f32.mrf.mxu0
        %v627 = vadd.f32 %v397, %v626
        %v628 = vpop.f32.mrf.mxu0
        %v629 = vadd.f32 %v401, %v628
        %v630 = vpop.f32.mrf.mxu0
        %v631 = vadd.f32 %v397, %v630
        %v632 = vpop.f32.mrf.mxu0
        %v633 = vadd.f32 %v401, %v632
        %634 = vmatprep.mubr.bf16.mxu0 %v344
        %635 = vmatmul.mubr.bf16.gmra.mxu0 %v343
        %v636 = vpop.f32.mrf.mxu0
        %v637 = vadd.f32 %v397, %v636
        %v638 = vpop.f32.mrf.mxu0
        %v639 = vadd.f32 %v401, %v638
        %v640 = vpop.f32.mrf.mxu0
        %v641 = vadd.f32 %v397, %v640
        %v642 = vpop.f32.mrf.mxu0
        %v643 = vadd.f32 %v401, %v642
        %644 = vmatprep.mubr.bf16.mxu0 %v346
        %645 = vmatmul.mubr.bf16.gmra.mxu0 %v345
        %v646 = vpop.f32.mrf.mxu0
        %v647 = vadd.f32 %v397, %v646
        %v648 = vpop.f32.mrf.mxu0
        %v649 = vadd.f32 %v401, %v648
        %v650 = vpop.f32.mrf.mxu0
        %v651 = vadd.f32 %v397, %v650
        %v652 = vpop.f32.mrf.mxu0
        %v653 = vadd.f32 %v401, %v652
        %654 = vmatprep.mubr.bf16.mxu0 %v348
        %655 = vmatmul.mubr.bf16.gmra.mxu0 %v347
        %v656 = vpop.f32.mrf.mxu0
        %v657 = vadd.f32 %v397, %v656
        %v658 = vpop.f32.mrf.mxu0
        %v659 = vadd.f32 %v401, %v658
        %v660 = vpop.f32.mrf.mxu0
        %v661 = vadd.f32 %v397, %v660
        %v662 = vpop.f32.mrf.mxu0
        %v663 = vadd.f32 %v401, %v662
        %664 = vmatprep.mubr.bf16.mxu0 %v350
        %665 = vmatmul.mubr.bf16.gmra.mxu0 %v349
        %v666 = vpop.f32.mrf.mxu0
        %v667 = vadd.f32 %v397, %v666
        %v668 = vpop.f32.mrf.mxu0
        %v669 = vadd.f32 %v401, %v668
        %v670 = vpop.f32.mrf.mxu0
        %v671 = vadd.f32 %v397, %v670
        %v672 = vpop.f32.mrf.mxu0
        %v673 = vadd.f32 %v401, %v672
        %674 = vdwg.mxu0
        %v675 = vadd.f32 %v597, %v599
        %676 = vadd.xlane.f32.xlu0 %v675
        %v677 = vpop.xlane.xlu0 %676
        %v678 = vadd.f32 %v601, %v603
        %679 = vadd.xlane.f32.xlu0 %v678
        %v680 = vpop.xlane.xlu0 %679
        %v681 = vadd.f32 %v607, %v609
        %682 = vadd.xlane.f32.xlu0 %v681
        %v683 = vpop.xlane.xlu0 %682
        %v684 = vadd.f32 %v611, %v613
        %685 = vadd.xlane.f32.xlu0 %v684
        %v686 = vpop.xlane.xlu0 %685
        %v687 = vadd.f32 %v617, %v619
        %688 = vadd.xlane.f32.xlu0 %v687
        %v689 = vpop.xlane.xlu0 %688
        %v690 = vadd.f32 %v621, %v623
        %691 = vadd.xlane.f32.xlu0 %v690
        %v692 = vpop.xlane.xlu0 %691
        %v693 = vadd.f32 %v627, %v629
        %694 = vadd.xlane.f32.xlu0 %v693
        %v695 = vpop.xlane.xlu0 %694
        %v696 = vadd.f32 %v631, %v633
        %697 = vadd.xlane.f32.xlu0 %v696
        %v698 = vpop.xlane.xlu0 %697
        %v699 = vadd.f32 %v637, %v639
        %700 = vadd.xlane.f32.xlu0 %v699
        %v701 = vpop.xlane.xlu0 %700
        %v702 = vadd.f32 %v641, %v643
        %703 = vadd.xlane.f32.xlu0 %v702
        %v704 = vpop.xlane.xlu0 %703
        %v705 = vadd.f32 %v647, %v649
        %706 = vadd.xlane.f32.xlu0 %v705
        %v707 = vpop.xlane.xlu0 %706
        %v708 = vadd.f32 %v651, %v653
        %709 = vadd.xlane.f32.xlu0 %v708
        %v710 = vpop.xlane.xlu0 %709
        %v711 = vadd.f32 %v657, %v659
        %712 = vadd.xlane.f32.xlu0 %v711
        %v713 = vpop.xlane.xlu0 %712
        %v714 = vadd.f32 %v661, %v663
        %715 = vadd.xlane.f32.xlu0 %v714
        %v716 = vpop.xlane.xlu0 %715
        %v717 = vadd.f32 %v667, %v669
        %718 = vadd.xlane.f32.xlu0 %v717
        %v719 = vpop.xlane.xlu0 %718
        %v720 = vadd.f32 %v671, %v673
        %721 = vadd.xlane.f32.xlu0 %v720
        %v722 = vpop.xlane.xlu0 %721
        %v723 = vrcp.pop 256.0
        %v724 = vmul.f32 %v677, %v723
        %v725 = vmul.f32 %v680, %v723
        %v726 = vmul.f32 %v683, %v723
        %v727 = vmul.f32 %v686, %v723
        %v728 = vmul.f32 %v689, %v723
        %v729 = vmul.f32 %v692, %v723
        %v730 = vmul.f32 %v695, %v723
        %v731 = vmul.f32 %v698, %v723
        %v732 = vmul.f32 %v701, %v723
        %v733 = vmul.f32 %v704, %v723
        %v734 = vmul.f32 %v707, %v723
        %v735 = vmul.f32 %v710, %v723
        %v736 = vmul.f32 %v713, %v723
        %v737 = vmul.f32 %v716, %v723
        %v738 = vmul.f32 %v719, %v723
        %v739 = vmul.f32 %v722, %v723
        %v740 = vmul.f32 %v597, %v597
        %v741 = vmul.f32 %v599, %v599
        %v742 = vmul.f32 %v601, %v601
        %v743 = vmul.f32 %v603, %v603
        %v744 = vmul.f32 %v607, %v607
        %v745 = vmul.f32 %v609, %v609
        %v746 = vmul.f32 %v611, %v611
        %v747 = vmul.f32 %v613, %v613
        %v748 = vmul.f32 %v617, %v617
        %v749 = vmul.f32 %v619, %v619
        %v750 = vmul.f32 %v621, %v621
        %v751 = vmul.f32 %v623, %v623
        %v752 = vmul.f32 %v627, %v627
        %v753 = vmul.f32 %v629, %v629
        %v754 = vmul.f32 %v631, %v631
        %v755 = vmul.f32 %v633, %v633
        %v756 = vmul.f32 %v637, %v637
        %v757 = vmul.f32 %v639, %v639
        %v758 = vmul.f32 %v641, %v641
        %v759 = vmul.f32 %v643, %v643
        %v760 = vmul.f32 %v647, %v647
        %v761 = vmul.f32 %v649, %v649
        %v762 = vmul.f32 %v651, %v651
        %v763 = vmul.f32 %v653, %v653
        %v764 = vmul.f32 %v657, %v657
        %v765 = vmul.f32 %v659, %v659
        %v766 = vmul.f32 %v661, %v661
        %v767 = vmul.f32 %v663, %v663
        %v768 = vmul.f32 %v667, %v667
        %v769 = vmul.f32 %v669, %v669
        %v770 = vmul.f32 %v671, %v671
        %v771 = vmul.f32 %v673, %v673
        %v772 = vadd.f32 %v740, %v741
        %773 = vadd.xlane.f32.xlu0 %v772
        %v774 = vpop.xlane.xlu0 %773
        %v775 = vadd.f32 %v742, %v743
        %776 = vadd.xlane.f32.xlu0 %v775
        %v777 = vpop.xlane.xlu0 %776
        %v778 = vadd.f32 %v744, %v745
        %779 = vadd.xlane.f32.xlu0 %v778
        %v780 = vpop.xlane.xlu0 %779
        %v781 = vadd.f32 %v746, %v747
        %782 = vadd.xlane.f32.xlu0 %v781
        %v783 = vpop.xlane.xlu0 %782
        %v784 = vadd.f32 %v748, %v749
        %785 = vadd.xlane.f32.xlu0 %v784
        %v786 = vpop.xlane.xlu0 %785
        %v787 = vadd.f32 %v750, %v751
        %788 = vadd.xlane.f32.xlu0 %v787
        %v789 = vpop.xlane.xlu0 %788
        %v790 = vadd.f32 %v752, %v753
        %791 = vadd.xlane.f32.xlu0 %v790
        %v792 = vpop.xlane.xlu0 %791
        %v793 = vadd.f32 %v754, %v755
        %794 = vadd.xlane.f32.xlu0 %v793
        %v795 = vpop.xlane.xlu0 %794
        %v796 = vadd.f32 %v756, %v757
        %797 = vadd.xlane.f32.xlu0 %v796
        %v798 = vpop.xlane.xlu0 %797
        %v799 = vadd.f32 %v758, %v759
        %800 = vadd.xlane.f32.xlu0 %v799
        %v801 = vpop.xlane.xlu0 %800
        %v802 = vadd.f32 %v760, %v761
        %803 = vadd.xlane.f32.xlu0 %v802
        %v804 = vpop.xlane.xlu0 %803
        %v805 = vadd.f32 %v762, %v763
        %806 = vadd.xlane.f32.xlu0 %v805
        %v807 = vpop.xlane.xlu0 %806
        %v808 = vadd.f32 %v764, %v765
        %809 = vadd.xlane.f32.xlu0 %v808
        %v810 = vpop.xlane.xlu0 %809
        %v811 = vadd.f32 %v766, %v767
        %812 = vadd.xlane.f32.xlu0 %v811
        %v813 = vpop.xlane.xlu0 %812
        %v814 = vadd.f32 %v768, %v769
        %815 = vadd.xlane.f32.xlu0 %v814
        %v816 = vpop.xlane.xlu0 %815
        %v817 = vadd.f32 %v770, %v771
        %818 = vadd.xlane.f32.xlu0 %v817
        %v819 = vpop.xlane.xlu0 %818
        %v820 = vmul.f32 %v774, %v723
        %v821 = vmul.f32 %v777, %v723
        %v822 = vmul.f32 %v780, %v723
        %v823 = vmul.f32 %v783, %v723
        %v824 = vmul.f32 %v786, %v723
        %v825 = vmul.f32 %v789, %v723
        %v826 = vmul.f32 %v792, %v723
        %v827 = vmul.f32 %v795, %v723
        %v828 = vmul.f32 %v798, %v723
        %v829 = vmul.f32 %v801, %v723
        %v830 = vmul.f32 %v804, %v723
        %v831 = vmul.f32 %v807, %v723
        %v832 = vmul.f32 %v810, %v723
        %v833 = vmul.f32 %v813, %v723
        %v834 = vmul.f32 %v816, %v723
        %v835 = vmul.f32 %v819, %v723
        %v836 = vmul.f32 %v724, %v724
        %v837 = vmul.f32 %v725, %v725
        %v838 = vmul.f32 %v726, %v726
        %v839 = vmul.f32 %v727, %v727
        %v840 = vmul.f32 %v728, %v728
        %v841 = vmul.f32 %v729, %v729
        %v842 = vmul.f32 %v730, %v730
        %v843 = vmul.f32 %v731, %v731
        %v844 = vmul.f32 %v732, %v732
        %v845 = vmul.f32 %v733, %v733
        %v846 = vmul.f32 %v734, %v734
        %v847 = vmul.f32 %v735, %v735
        %v848 = vmul.f32 %v736, %v736
        %v849 = vmul.f32 %v737, %v737
        %v850 = vmul.f32 %v738, %v738
        %v851 = vmul.f32 %v739, %v739
        %v852 = vsub.f32 %v820, %v836
        %v853 = vsub.f32 %v821, %v837
        %v854 = vsub.f32 %v822, %v838
        %v855 = vsub.f32 %v823, %v839
        %v856 = vsub.f32 %v824, %v840
        %v857 = vsub.f32 %v825, %v841
        %v858 = vsub.f32 %v826, %v842
        %v859 = vsub.f32 %v827, %v843
        %v860 = vsub.f32 %v828, %v844
        %v861 = vsub.f32 %v829, %v845
        %v862 = vsub.f32 %v830, %v846
        %v863 = vsub.f32 %v831, %v847
        %v864 = vsub.f32 %v832, %v848
        %v865 = vsub.f32 %v833, %v849
        %v866 = vsub.f32 %v834, %v850
        %v867 = vsub.f32 %v835, %v851
        %v868 = vmax.f32 %v852, 0.0
        %v869 = vmax.f32 %v853, 0.0
        %v870 = vmax.f32 %v854, 0.0
        %v871 = vmax.f32 %v855, 0.0
        %v872 = vmax.f32 %v856, 0.0
        %v873 = vmax.f32 %v857, 0.0
        %v874 = vmax.f32 %v858, 0.0
        %v875 = vmax.f32 %v859, 0.0
        %v876 = vmax.f32 %v860, 0.0
        %v877 = vmax.f32 %v861, 0.0
        %v878 = vmax.f32 %v862, 0.0
        %v879 = vmax.f32 %v863, 0.0
        %v880 = vmax.f32 %v864, 0.0
        %v881 = vmax.f32 %v865, 0.0
        %v882 = vmax.f32 %v866, 0.0
        %v883 = vmax.f32 %v867, 0.0
        %v884 = vsub.f32 %v597, %v724
        %v885 = vsub.f32 %v599, %v724
        %v886 = vsub.f32 %v601, %v725
        %v887 = vsub.f32 %v603, %v725
        %v888 = vsub.f32 %v607, %v726
        %v889 = vsub.f32 %v609, %v726
        %v890 = vsub.f32 %v611, %v727
        %v891 = vsub.f32 %v613, %v727
        %v892 = vsub.f32 %v617, %v728
        %v893 = vsub.f32 %v619, %v728
        %v894 = vsub.f32 %v621, %v729
        %v895 = vsub.f32 %v623, %v729
        %v896 = vsub.f32 %v627, %v730
        %v897 = vsub.f32 %v629, %v730
        %v898 = vsub.f32 %v631, %v731
        %v899 = vsub.f32 %v633, %v731
        %v900 = vsub.f32 %v637, %v732
        %v901 = vsub.f32 %v639, %v732
        %v902 = vsub.f32 %v641, %v733
        %v903 = vsub.f32 %v643, %v733
        %v904 = vsub.f32 %v647, %v734
        %v905 = vsub.f32 %v649, %v734
        %v906 = vsub.f32 %v651, %v735
        %v907 = vsub.f32 %v653, %v735
        %v908 = vsub.f32 %v657, %v736
        %v909 = vsub.f32 %v659, %v736
        %v910 = vsub.f32 %v661, %v737
        %v911 = vsub.f32 %v663, %v737
        %v912 = vsub.f32 %v667, %v738
        %v913 = vsub.f32 %v669, %v738
        %v914 = vsub.f32 %v671, %v739
        %v915 = vsub.f32 %v673, %v739
        %v916 = vadd.f32 %v868, 1e-05
        %v917 = vadd.f32 %v869, 1e-05
        %v918 = vadd.f32 %v870, 1e-05
        %v919 = vadd.f32 %v871, 1e-05
        %v920 = vadd.f32 %v872, 1e-05
        %v921 = vadd.f32 %v873, 1e-05
        %v922 = vadd.f32 %v874, 1e-05
        %v923 = vadd.f32 %v875, 1e-05
        %v924 = vadd.f32 %v876, 1e-05
        %v925 = vadd.f32 %v877, 1e-05
        %v926 = vadd.f32 %v878, 1e-05
        %v927 = vadd.f32 %v879, 1e-05
        %v928 = vadd.f32 %v880, 1e-05
        %v929 = vadd.f32 %v881, 1e-05
        %v930 = vadd.f32 %v882, 1e-05
        %v931 = vadd.f32 %v883, 1e-05
        %v932 = vrsqrt.pop %v916
        %v933 = vrsqrt.pop %v917
        %v934 = vrsqrt.pop %v918
        %v935 = vrsqrt.pop %v919
        %v936 = vrsqrt.pop %v920
        %v937 = vrsqrt.pop %v921
        %v938 = vrsqrt.pop %v922
        %v939 = vrsqrt.pop %v923
        %v940 = vrsqrt.pop %v924
        %v941 = vrsqrt.pop %v925
        %v942 = vrsqrt.pop %v926
        %v943 = vrsqrt.pop %v927
        %v944 = vrsqrt.pop %v928
        %v945 = vrsqrt.pop %v929
        %v946 = vrsqrt.pop %v930
        %v947 = vrsqrt.pop %v931
        %v948 = vmul.f32 %v884, %v932
        %v949 = vmul.f32 %v885, %v932
        %v950 = vmul.f32 %v886, %v933
        %v951 = vmul.f32 %v887, %v933
        %v952 = vmul.f32 %v888, %v934
        %v953 = vmul.f32 %v889, %v934
        %v954 = vmul.f32 %v890, %v935
        %v955 = vmul.f32 %v891, %v935
        %v956 = vmul.f32 %v892, %v936
        %v957 = vmul.f32 %v893, %v936
        %v958 = vmul.f32 %v894, %v937
        %v959 = vmul.f32 %v895, %v937
        %v960 = vmul.f32 %v896, %v938
        %v961 = vmul.f32 %v897, %v938
        %v962 = vmul.f32 %v898, %v939
        %v963 = vmul.f32 %v899, %v939
        %v964 = vmul.f32 %v900, %v940
        %v965 = vmul.f32 %v901, %v940
        %v966 = vmul.f32 %v902, %v941
        %v967 = vmul.f32 %v903, %v941
        %v968 = vmul.f32 %v904, %v942
        %v969 = vmul.f32 %v905, %v942
        %v970 = vmul.f32 %v906, %v943
        %v971 = vmul.f32 %v907, %v943
        %v972 = vmul.f32 %v908, %v944
        %v973 = vmul.f32 %v909, %v944
        %v974 = vmul.f32 %v910, %v945
        %v975 = vmul.f32 %v911, %v945
        %v976 = vmul.f32 %v912, %v946
        %v977 = vmul.f32 %v913, %v946
        %v978 = vmul.f32 %v914, %v947
        %v979 = vmul.f32 %v915, %v947
        %v980 = vlaneseq
        %v981 = vshrl.u32 %v980, 7
        %v982 = vsub.s32 1, %v981
        %v983 = vrot.slane %v301, %v982
        %v984 = vlaneseq
        %v985 = vshrl.u32 %v984, 7
        %v986 = vsub.s32 5, %v985
        %v987 = vrot.slane %v301, %v986
        %v990 = vlaneseq
        %v991 = vshrl.u32 %v990, 7
        %v992 = vsub.s32 1, %v991
        %v993 = vrot.slane %v983, %v992
        %v994 = vlaneseq
        %v995 = vshrl.u32 %v994, 7
        %v996 = vsub.s32 1, %v995
        %v997 = vrot.slane %v987, %v996
        %v998 = vmul.f32 %v948, %v993
        %v999 = vmul.f32 %v949, %v997
        %v1000 = vmul.f32 %v950, %v993
        %v1001 = vmul.f32 %v951, %v997
        %v1002 = vmul.f32 %v952, %v993
        %v1003 = vmul.f32 %v953, %v997
        %v1004 = vmul.f32 %v954, %v993
        %v1005 = vmul.f32 %v955, %v997
        %v1006 = vmul.f32 %v956, %v993
        %v1007 = vmul.f32 %v957, %v997
        %v1008 = vmul.f32 %v958, %v993
        %v1009 = vmul.f32 %v959, %v997
        %v1010 = vmul.f32 %v960, %v993
        %v1011 = vmul.f32 %v961, %v997
        %v1012 = vmul.f32 %v962, %v993
        %v1013 = vmul.f32 %v963, %v997
        %v1014 = vmul.f32 %v964, %v993
        %v1015 = vmul.f32 %v965, %v997
        %v1016 = vmul.f32 %v966, %v993
        %v1017 = vmul.f32 %v967, %v997
        %v1018 = vmul.f32 %v968, %v993
        %v1019 = vmul.f32 %v969, %v997
        %v1020 = vmul.f32 %v970, %v993
        %v1021 = vmul.f32 %v971, %v997
        %v1022 = vmul.f32 %v972, %v993
        %v1023 = vmul.f32 %v973, %v997
        %v1024 = vmul.f32 %v974, %v993
        %v1025 = vmul.f32 %v975, %v997
        %v1026 = vmul.f32 %v976, %v993
        %v1027 = vmul.f32 %v977, %v997
        %v1028 = vmul.f32 %v978, %v993
        %v1029 = vmul.f32 %v979, %v997
        %v1030 = vlaneseq
        %v1031 = vshrl.u32 %v1030, 7
        %v1032 = vsub.s32 2, %v1031
        %v1033 = vrot.slane %v301, %v1032
        %v1034 = vlaneseq
        %v1035 = vshrl.u32 %v1034, 7
        %v1036 = vsub.s32 6, %v1035
        %v1037 = vrot.slane %v301, %v1036
        %v1040 = vlaneseq
        %v1041 = vshrl.u32 %v1040, 7
        %v1042 = vsub.s32 2, %v1041
        %v1043 = vrot.slane %v1033, %v1042
        %v1044 = vlaneseq
        %v1045 = vshrl.u32 %v1044, 7
        %v1046 = vsub.s32 2, %v1045
        %v1047 = vrot.slane %v1037, %v1046
        %v1048 = vadd.f32 %v998, %v1043
        %v1049 = vadd.f32 %v999, %v1047
        %v1050 = vadd.f32 %v1000, %v1043
        %v1051 = vadd.f32 %v1001, %v1047
        %v1052 = vadd.f32 %v1002, %v1043
        %v1053 = vadd.f32 %v1003, %v1047
        %v1054 = vadd.f32 %v1004, %v1043
        %v1055 = vadd.f32 %v1005, %v1047
        %v1056 = vadd.f32 %v1006, %v1043
        %v1057 = vadd.f32 %v1007, %v1047
        %v1058 = vadd.f32 %v1008, %v1043
        %v1059 = vadd.f32 %v1009, %v1047
        %v1060 = vadd.f32 %v1010, %v1043
        %v1061 = vadd.f32 %v1011, %v1047
        %v1062 = vadd.f32 %v1012, %v1043
        %v1063 = vadd.f32 %v1013, %v1047
        %v1064 = vadd.f32 %v1014, %v1043
        %v1065 = vadd.f32 %v1015, %v1047
        %v1066 = vadd.f32 %v1016, %v1043
        %v1067 = vadd.f32 %v1017, %v1047
        %v1068 = vadd.f32 %v1018, %v1043
        %v1069 = vadd.f32 %v1019, %v1047
        %v1070 = vadd.f32 %v1020, %v1043
        %v1071 = vadd.f32 %v1021, %v1047
        %v1072 = vadd.f32 %v1022, %v1043
        %v1073 = vadd.f32 %v1023, %v1047
        %v1074 = vadd.f32 %v1024, %v1043
        %v1075 = vadd.f32 %v1025, %v1047
        %v1076 = vadd.f32 %v1026, %v1043
        %v1077 = vadd.f32 %v1027, %v1047
        %v1078 = vadd.f32 %v1028, %v1043
        %v1079 = vadd.f32 %v1029, %v1047
        %v1080 = vmax.f32 %v1048, 0.0
        %v1081 = vmax.f32 %v1049, 0.0
        %v1082 = vmax.f32 %v1050, 0.0
        %v1083 = vmax.f32 %v1051, 0.0
        %v1084 = vmax.f32 %v1052, 0.0
        %v1085 = vmax.f32 %v1053, 0.0
        %v1086 = vmax.f32 %v1054, 0.0
        %v1087 = vmax.f32 %v1055, 0.0
        %v1088 = vmax.f32 %v1056, 0.0
        %v1089 = vmax.f32 %v1057, 0.0
        %v1090 = vmax.f32 %v1058, 0.0
        %v1091 = vmax.f32 %v1059, 0.0
        %v1092 = vmax.f32 %v1060, 0.0
        %v1093 = vmax.f32 %v1061, 0.0
        %v1094 = vmax.f32 %v1062, 0.0
        %v1095 = vmax.f32 %v1063, 0.0
        %v1096 = vmax.f32 %v1064, 0.0
        %v1097 = vmax.f32 %v1065, 0.0
        %v1098 = vmax.f32 %v1066, 0.0
        %v1099 = vmax.f32 %v1067, 0.0
        %v1100 = vmax.f32 %v1068, 0.0
        %v1101 = vmax.f32 %v1069, 0.0
        %v1102 = vmax.f32 %v1070, 0.0
        %v1103 = vmax.f32 %v1071, 0.0
        %v1104 = vmax.f32 %v1072, 0.0
        %v1105 = vmax.f32 %v1073, 0.0
        %v1106 = vmax.f32 %v1074, 0.0
        %v1107 = vmax.f32 %v1075, 0.0
        %v1108 = vmax.f32 %v1076, 0.0
        %v1109 = vmax.f32 %v1077, 0.0
        %v1110 = vmax.f32 %v1078, 0.0
        %v1111 = vmax.f32 %v1079, 0.0
        %v1112 = vpack.c.bf16 %v1082, %v1080
        %v1113 = vpack.c.bf16 %v1083, %v1081
        %v1114 = vpack.c.bf16 %v1086, %v1084
        %v1115 = vpack.c.bf16 %v1087, %v1085
        %v1116 = vpack.c.bf16 %v1090, %v1088
        %v1117 = vpack.c.bf16 %v1091, %v1089
        %v1118 = vpack.c.bf16 %v1094, %v1092
        %v1119 = vpack.c.bf16 %v1095, %v1093
        %v1120 = vpack.c.bf16 %v1098, %v1096
        %v1121 = vpack.c.bf16 %v1099, %v1097
        %v1122 = vpack.c.bf16 %v1102, %v1100
        %v1123 = vpack.c.bf16 %v1103, %v1101
        %v1124 = vpack.c.bf16 %v1106, %v1104
        %v1125 = vpack.c.bf16 %v1107, %v1105
        %v1126 = vpack.c.bf16 %v1110, %v1108
        %v1127 = vpack.c.bf16 %v1111, %v1109
        %v1128 = vld [vmem:[#allocation8] sm:$0xf]
        %v1129 = vld [vmem:[#allocation8 + $0x4] sm:$0xf]
        %v1130 = vld [vmem:[#allocation8 + $0x8] sm:$0xf]
        %v1131 = vld [vmem:[#allocation8 + $0xc] sm:$0xf]
        %v1132 = vld [vmem:[#allocation8 + $0x10] sm:$0xf]
        %v1133 = vld [vmem:[#allocation8 + $0x14] sm:$0xf]
        %v1134 = vld [vmem:[#allocation8 + $0x18] sm:$0xf]
        %v1135 = vld [vmem:[#allocation8 + $0x1c] sm:$0xf]
        %v1136 = vld [vmem:[#allocation8 + $0x20] sm:$0xf]
        %v1137 = vld [vmem:[#allocation8 + $0x24] sm:$0xf]
        %v1138 = vld [vmem:[#allocation8 + $0x28] sm:$0xf]
        %v1139 = vld [vmem:[#allocation8 + $0x2c] sm:$0xf]
        %v1140 = vld [vmem:[#allocation8 + $0x30] sm:$0xf]
        %v1141 = vld [vmem:[#allocation8 + $0x34] sm:$0xf]
        %v1142 = vld [vmem:[#allocation8 + $0x38] sm:$0xf]
        %v1143 = vld [vmem:[#allocation8 + $0x3c] sm:$0xf]
        %v1144 = vld [vmem:[#allocation8 + $0x40] sm:$0xf]
        %v1145 = vld [vmem:[#allocation8 + $0x44] sm:$0xf]
        %v1146 = vld [vmem:[#allocation8 + $0x48] sm:$0xf]
        %v1147 = vld [vmem:[#allocation8 + $0x4c] sm:$0xf]
        %v1148 = vld [vmem:[#allocation8 + $0x50] sm:$0xf]
        %v1149 = vld [vmem:[#allocation8 + $0x54] sm:$0xf]
        %v1150 = vld [vmem:[#allocation8 + $0x58] sm:$0xf]
        %v1151 = vld [vmem:[#allocation8 + $0x5c] sm:$0xf]
        %v1152 = vld [vmem:[#allocation8 + $0x60] sm:$0xf]
        %v1153 = vld [vmem:[#allocation8 + $0x64] sm:$0xf]
        %v1154 = vld [vmem:[#allocation8 + $0x68] sm:$0xf]
        %v1155 = vld [vmem:[#allocation8 + $0x6c] sm:$0xf]
        %v1156 = vld [vmem:[#allocation8 + $0x70] sm:$0xf]
        %v1157 = vld [vmem:[#allocation8 + $0x74] sm:$0xf]
        %v1158 = vld [vmem:[#allocation8 + $0x78] sm:$0xf]
        %v1159 = vld [vmem:[#allocation8 + $0x7c] sm:$0xf]
        %v1160 = vlaneseq
        %v1161 = vshrl.u32 %v1160, 7
        %v1162 = vsub.s32 0, %v1161
        %v1163 = vrot.slane %v302, %v1162
        %v1196 = vunpack.c.l.b16 %v1128
        %v1197 = vunpack.c.l.b16 %v1129
        %v1198 = vunpack.c.l.b16 %v1130
        %v1199 = vunpack.c.l.b16 %v1131
        %v1200 = vunpack.c.l.b16 %v1132
        %v1201 = vunpack.c.l.b16 %v1133
        %v1202 = vunpack.c.l.b16 %v1134
        %v1203 = vunpack.c.l.b16 %v1135
        %v1204 = vunpack.c.l.b16 %v1136
        %v1205 = vunpack.c.l.b16 %v1137
        %v1206 = vunpack.c.l.b16 %v1138
        %v1207 = vunpack.c.l.b16 %v1139
        %v1208 = vunpack.c.l.b16 %v1140
        %v1209 = vunpack.c.l.b16 %v1141
        %v1210 = vunpack.c.l.b16 %v1142
        %v1211 = vunpack.c.l.b16 %v1143
        %v1212 = vunpack.c.l.b16 %v1144
        %v1213 = vunpack.c.l.b16 %v1145
        %v1214 = vunpack.c.l.b16 %v1146
        %v1215 = vunpack.c.l.b16 %v1147
        %v1216 = vunpack.c.l.b16 %v1148
        %v1217 = vunpack.c.l.b16 %v1149
        %v1218 = vunpack.c.l.b16 %v1150
        %v1219 = vunpack.c.l.b16 %v1151
        %v1220 = vunpack.c.l.b16 %v1152
        %v1221 = vunpack.c.l.b16 %v1153
        %v1222 = vunpack.c.l.b16 %v1154
        %v1223 = vunpack.c.l.b16 %v1155
        %v1224 = vunpack.c.l.b16 %v1156
        %v1225 = vunpack.c.l.b16 %v1157
        %v1226 = vunpack.c.l.b16 %v1158
        %v1227 = vunpack.c.l.b16 %v1159
        %v1228 = vpack.c.b16 %v1197, %v1196
        %v1229 = vpack.c.b16 %v1199, %v1198
        %v1230 = vpack.c.b16 %v1201, %v1200
        %v1231 = vpack.c.b16 %v1203, %v1202
        %v1232 = vpack.c.b16 %v1205, %v1204
        %v1233 = vpack.c.b16 %v1207, %v1206
        %v1234 = vpack.c.b16 %v1209, %v1208
        %v1235 = vpack.c.b16 %v1211, %v1210
        %v1236 = vpack.c.b16 %v1213, %v1212
        %v1237 = vpack.c.b16 %v1215, %v1214
        %v1238 = vpack.c.b16 %v1217, %v1216
        %v1239 = vpack.c.b16 %v1219, %v1218
        %v1240 = vpack.c.b16 %v1221, %v1220
        %v1241 = vpack.c.b16 %v1223, %v1222
        %v1242 = vpack.c.b16 %v1225, %v1224
        %v1243 = vpack.c.b16 %v1227, %v1226
        %1260 = vmatprep.subr.bf16.mxu0 0
        %1261 = vmatpush1.bf16.msra.mxu0 %v1235
        %1262 = vmatprep.subr.bf16.mxu0 0
        %1263 = vmatpush1.bf16.msra.mxu0 %v1234
        %1264 = vmatprep.subr.bf16.mxu0 0
        %1265 = vmatpush1.bf16.msra.mxu0 %v1233
        %1266 = vmatprep.subr.bf16.mxu0 0
        %1267 = vmatpush1.bf16.msra.mxu0 %v1232
        %1268 = vmatprep.subr.bf16.mxu0 0
        %1269 = vmatpush1.bf16.msra.mxu0 %v1231
        %1270 = vmatprep.subr.bf16.mxu0 0
        %1271 = vmatpush1.bf16.msra.mxu0 %v1230
        %1272 = vmatprep.subr.bf16.mxu0 0
        %1273 = vmatpush1.bf16.msra.mxu0 %v1229
        %1274 = vmatprep.subr.bf16.mxu0 0
        %1275 = vmatpush1.bf16.msra.mxu0 %v1228
        %1276 = vmatprep.subr.bf16.mxu0 0
        %1277 = vmatpush2.bf16.msra.mxu0 %v1243
        %1278 = vmatprep.subr.bf16.mxu0 0
        %1279 = vmatpush2.bf16.msra.mxu0 %v1242
        %1280 = vmatprep.subr.bf16.mxu0 0
        %1281 = vmatpush2.bf16.msra.mxu0 %v1241
        %1282 = vmatprep.subr.bf16.mxu0 0
        %1283 = vmatpush2.bf16.msra.mxu0 %v1240
        %1284 = vmatprep.subr.bf16.mxu0 0
        %1285 = vmatpush2.bf16.msra.mxu0 %v1239
        %1286 = vmatprep.subr.bf16.mxu0 0
        %1287 = vmatpush2.bf16.msra.mxu0 %v1238
        %1288 = vmatprep.subr.bf16.mxu0 0
        %1289 = vmatpush2.bf16.msra.mxu0 %v1237
        %1290 = vmatprep.subr.bf16.mxu0 0
        %1291 = vmatpush2.bf16.msra.mxu0 %v1236
        %1292 = vmatprep.mubr.bf16.mxu0 %v1113
        %1293 = vmatmul.mubr.bf16.gmra.mxu0 %v1112
        %v1294 = vpop.f32.mrf.mxu0
        %v1295 = vadd.f32 %v1163, %v1294
        %v1296 = vpop.f32.mrf.mxu0
        %v1297 = vpop.f32.mrf.mxu0
        %v1298 = vadd.f32 %v1163, %v1297
        %v1299 = vpop.f32.mrf.mxu0
        %1300 = vmatprep.mubr.bf16.mxu0 %v1115
        %1301 = vmatmul.mubr.bf16.gmra.mxu0 %v1114
        %v1302 = vpop.f32.mrf.mxu0
        %v1303 = vadd.f32 %v1163, %v1302
        %v1304 = vpop.f32.mrf.mxu0
        %v1305 = vpop.f32.mrf.mxu0
        %v1306 = vadd.f32 %v1163, %v1305
        %v1307 = vpop.f32.mrf.mxu0
        %1308 = vmatprep.mubr.bf16.mxu0 %v1117
        %1309 = vmatmul.mubr.bf16.gmra.mxu0 %v1116
        %v1310 = vpop.f32.mrf.mxu0
        %v1311 = vadd.f32 %v1163, %v1310
        %v1312 = vpop.f32.mrf.mxu0
        %v1313 = vpop.f32.mrf.mxu0
        %v1314 = vadd.f32 %v1163, %v1313
        %v1315 = vpop.f32.mrf.mxu0
        %1316 = vmatprep.mubr.bf16.mxu0 %v1119
        %1317 = vmatmul.mubr.bf16.gmra.mxu0 %v1118
        %v1318 = vpop.f32.mrf.mxu0
        %v1319 = vadd.f32 %v1163, %v1318
        %v1320 = vpop.f32.mrf.mxu0
        %v1321 = vpop.f32.mrf.mxu0
        %v1322 = vadd.f32 %v1163, %v1321
        %v1323 = vpop.f32.mrf.mxu0
        %1324 = vmatprep.mubr.bf16.mxu0 %v1121
        %1325 = vmatmul.mubr.bf16.gmra.mxu0 %v1120
        %v1326 = vpop.f32.mrf.mxu0
        %v1327 = vadd.f32 %v1163, %v1326
        %v1328 = vpop.f32.mrf.mxu0
        %v1329 = vpop.f32.mrf.mxu0
        %v1330 = vadd.f32 %v1163, %v1329
        %v1331 = vpop.f32.mrf.mxu0
        %1332 = vmatprep.mubr.bf16.mxu0 %v1123
        %1333 = vmatmul.mubr.bf16.gmra.mxu0 %v1122
        %v1334 = vpop.f32.mrf.mxu0
        %v1335 = vadd.f32 %v1163, %v1334
        %v1336 = vpop.f32.mrf.mxu0
        %v1337 = vpop.f32.mrf.mxu0
        %v1338 = vadd.f32 %v1163, %v1337
        %v1339 = vpop.f32.mrf.mxu0
        %1340 = vmatprep.mubr.bf16.mxu0 %v1125
        %1341 = vmatmul.mubr.bf16.gmra.mxu0 %v1124
        %v1342 = vpop.f32.mrf.mxu0
        %v1343 = vadd.f32 %v1163, %v1342
        %v1344 = vpop.f32.mrf.mxu0
        %v1345 = vpop.f32.mrf.mxu0
        %v1346 = vadd.f32 %v1163, %v1345
        %v1347 = vpop.f32.mrf.mxu0
        %1348 = vmatprep.mubr.bf16.mxu0 %v1127
        %1349 = vmatmul.mubr.bf16.gmra.mxu0 %v1126
        %v1350 = vpop.f32.mrf.mxu0
        %v1351 = vadd.f32 %v1163, %v1350
        %v1352 = vpop.f32.mrf.mxu0
        %v1353 = vpop.f32.mrf.mxu0
        %v1354 = vadd.f32 %v1163, %v1353
        %v1355 = vpop.f32.mrf.mxu0
        %1356 = vdwg.mxu0
        %1357 = vadd.xlane.f32.xlu0 %v1295
        %v1358 = vpop.xlane.xlu0 %1357
        %1359 = vadd.xlane.f32.xlu0 %v1298
        %v1360 = vpop.xlane.xlu0 %1359
        %1361 = vadd.xlane.f32.xlu0 %v1303
        %v1362 = vpop.xlane.xlu0 %1361
        %1363 = vadd.xlane.f32.xlu0 %v1306
        %v1364 = vpop.xlane.xlu0 %1363
        %1365 = vadd.xlane.f32.xlu0 %v1311
        %v1366 = vpop.xlane.xlu0 %1365
        %1367 = vadd.xlane.f32.xlu0 %v1314
        %v1368 = vpop.xlane.xlu0 %1367
        %1369 = vadd.xlane.f32.xlu0 %v1319
        %v1370 = vpop.xlane.xlu0 %1369
        %1371 = vadd.xlane.f32.xlu0 %v1322
        %v1372 = vpop.xlane.xlu0 %1371
        %1373 = vadd.xlane.f32.xlu0 %v1327
        %v1374 = vpop.xlane.xlu0 %1373
        %1375 = vadd.xlane.f32.xlu0 %v1330
        %v1376 = vpop.xlane.xlu0 %1375
        %1377 = vadd.xlane.f32.xlu0 %v1335
        %v1378 = vpop.xlane.xlu0 %1377
        %1379 = vadd.xlane.f32.xlu0 %v1338
        %v1380 = vpop.xlane.xlu0 %1379
        %1381 = vadd.xlane.f32.xlu0 %v1343
        %v1382 = vpop.xlane.xlu0 %1381
        %1383 = vadd.xlane.f32.xlu0 %v1346
        %v1384 = vpop.xlane.xlu0 %1383
        %1385 = vadd.xlane.f32.xlu0 %v1351
        %v1386 = vpop.xlane.xlu0 %1385
        %1387 = vadd.xlane.f32.xlu0 %v1354
        %v1388 = vpop.xlane.xlu0 %1387
        %v1389 = vrcp.pop 128.0
        %v1390 = vmul.f32 %v1358, %v1389
        %v1391 = vmul.f32 %v1360, %v1389
        %v1392 = vmul.f32 %v1362, %v1389
        %v1393 = vmul.f32 %v1364, %v1389
        %v1394 = vmul.f32 %v1366, %v1389
        %v1395 = vmul.f32 %v1368, %v1389
        %v1396 = vmul.f32 %v1370, %v1389
        %v1397 = vmul.f32 %v1372, %v1389
        %v1398 = vmul.f32 %v1374, %v1389
        %v1399 = vmul.f32 %v1376, %v1389
        %v1400 = vmul.f32 %v1378, %v1389
        %v1401 = vmul.f32 %v1380, %v1389
        %v1402 = vmul.f32 %v1382, %v1389
        %v1403 = vmul.f32 %v1384, %v1389
        %v1404 = vmul.f32 %v1386, %v1389
        %v1405 = vmul.f32 %v1388, %v1389
        %v1406 = vmul.f32 %v1295, %v1295
        %v1407 = vmul.f32 %v1298, %v1298
        %v1408 = vmul.f32 %v1303, %v1303
        %v1409 = vmul.f32 %v1306, %v1306
        %v1410 = vmul.f32 %v1311, %v1311
        %v1411 = vmul.f32 %v1314, %v1314
        %v1412 = vmul.f32 %v1319, %v1319
        %v1413 = vmul.f32 %v1322, %v1322
        %v1414 = vmul.f32 %v1327, %v1327
        %v1415 = vmul.f32 %v1330, %v1330
        %v1416 = vmul.f32 %v1335, %v1335
        %v1417 = vmul.f32 %v1338, %v1338
        %v1418 = vmul.f32 %v1343, %v1343
        %v1419 = vmul.f32 %v1346, %v1346
        %v1420 = vmul.f32 %v1351, %v1351
        %v1421 = vmul.f32 %v1354, %v1354
        %1422 = vadd.xlane.f32.xlu0 %v1406
        %v1423 = vpop.xlane.xlu0 %1422
        %1424 = vadd.xlane.f32.xlu0 %v1407
        %v1425 = vpop.xlane.xlu0 %1424
        %1426 = vadd.xlane.f32.xlu0 %v1408
        %v1427 = vpop.xlane.xlu0 %1426
        %1428 = vadd.xlane.f32.xlu0 %v1409
        %v1429 = vpop.xlane.xlu0 %1428
        %1430 = vadd.xlane.f32.xlu0 %v1410
        %v1431 = vpop.xlane.xlu0 %1430
        %1432 = vadd.xlane.f32.xlu0 %v1411
        %v1433 = vpop.xlane.xlu0 %1432
        %1434 = vadd.xlane.f32.xlu0 %v1412
        %v1435 = vpop.xlane.xlu0 %1434
        %1436 = vadd.xlane.f32.xlu0 %v1413
        %v1437 = vpop.xlane.xlu0 %1436
        %1438 = vadd.xlane.f32.xlu0 %v1414
        %v1439 = vpop.xlane.xlu0 %1438
        %1440 = vadd.xlane.f32.xlu0 %v1415
        %v1441 = vpop.xlane.xlu0 %1440
        %1442 = vadd.xlane.f32.xlu0 %v1416
        %v1443 = vpop.xlane.xlu0 %1442
        %1444 = vadd.xlane.f32.xlu0 %v1417
        %v1445 = vpop.xlane.xlu0 %1444
        %1446 = vadd.xlane.f32.xlu0 %v1418
        %v1447 = vpop.xlane.xlu0 %1446
        %1448 = vadd.xlane.f32.xlu0 %v1419
        %v1449 = vpop.xlane.xlu0 %1448
        %1450 = vadd.xlane.f32.xlu0 %v1420
        %v1451 = vpop.xlane.xlu0 %1450
        %1452 = vadd.xlane.f32.xlu0 %v1421
        %v1453 = vpop.xlane.xlu0 %1452
        %v1454 = vmul.f32 %v1423, %v1389
        %v1455 = vmul.f32 %v1425, %v1389
        %v1456 = vmul.f32 %v1427, %v1389
        %v1457 = vmul.f32 %v1429, %v1389
        %v1458 = vmul.f32 %v1431, %v1389
        %v1459 = vmul.f32 %v1433, %v1389
        %v1460 = vmul.f32 %v1435, %v1389
        %v1461 = vmul.f32 %v1437, %v1389
        %v1462 = vmul.f32 %v1439, %v1389
        %v1463 = vmul.f32 %v1441, %v1389
        %v1464 = vmul.f32 %v1443, %v1389
        %v1465 = vmul.f32 %v1445, %v1389
        %v1466 = vmul.f32 %v1447, %v1389
        %v1467 = vmul.f32 %v1449, %v1389
        %v1468 = vmul.f32 %v1451, %v1389
        %v1469 = vmul.f32 %v1453, %v1389
        %v1470 = vmul.f32 %v1390, %v1390
        %v1471 = vmul.f32 %v1391, %v1391
        %v1472 = vmul.f32 %v1392, %v1392
        %v1473 = vmul.f32 %v1393, %v1393
        %v1474 = vmul.f32 %v1394, %v1394
        %v1475 = vmul.f32 %v1395, %v1395
        %v1476 = vmul.f32 %v1396, %v1396
        %v1477 = vmul.f32 %v1397, %v1397
        %v1478 = vmul.f32 %v1398, %v1398
        %v1479 = vmul.f32 %v1399, %v1399
        %v1480 = vmul.f32 %v1400, %v1400
        %v1481 = vmul.f32 %v1401, %v1401
        %v1482 = vmul.f32 %v1402, %v1402
        %v1483 = vmul.f32 %v1403, %v1403
        %v1484 = vmul.f32 %v1404, %v1404
        %v1485 = vmul.f32 %v1405, %v1405
        %v1486 = vsub.f32 %v1454, %v1470
        %v1487 = vsub.f32 %v1455, %v1471
        %v1488 = vsub.f32 %v1456, %v1472
        %v1489 = vsub.f32 %v1457, %v1473
        %v1490 = vsub.f32 %v1458, %v1474
        %v1491 = vsub.f32 %v1459, %v1475
        %v1492 = vsub.f32 %v1460, %v1476
        %v1493 = vsub.f32 %v1461, %v1477
        %v1494 = vsub.f32 %v1462, %v1478
        %v1495 = vsub.f32 %v1463, %v1479
        %v1496 = vsub.f32 %v1464, %v1480
        %v1497 = vsub.f32 %v1465, %v1481
        %v1498 = vsub.f32 %v1466, %v1482
        %v1499 = vsub.f32 %v1467, %v1483
        %v1500 = vsub.f32 %v1468, %v1484
        %v1501 = vsub.f32 %v1469, %v1485
        %v1502 = vmax.f32 %v1486, 0.0
        %v1503 = vmax.f32 %v1487, 0.0
        %v1504 = vmax.f32 %v1488, 0.0
        %v1505 = vmax.f32 %v1489, 0.0
        %v1506 = vmax.f32 %v1490, 0.0
        %v1507 = vmax.f32 %v1491, 0.0
        %v1508 = vmax.f32 %v1492, 0.0
        %v1509 = vmax.f32 %v1493, 0.0
        %v1510 = vmax.f32 %v1494, 0.0
        %v1511 = vmax.f32 %v1495, 0.0
        %v1512 = vmax.f32 %v1496, 0.0
        %v1513 = vmax.f32 %v1497, 0.0
        %v1514 = vmax.f32 %v1498, 0.0
        %v1515 = vmax.f32 %v1499, 0.0
        %v1516 = vmax.f32 %v1500, 0.0
        %v1517 = vmax.f32 %v1501, 0.0
        %v1518 = vsub.f32 %v1295, %v1390
        %v1519 = vsub.f32 %v1298, %v1391
        %v1520 = vsub.f32 %v1303, %v1392
        %v1521 = vsub.f32 %v1306, %v1393
        %v1522 = vsub.f32 %v1311, %v1394
        %v1523 = vsub.f32 %v1314, %v1395
        %v1524 = vsub.f32 %v1319, %v1396
        %v1525 = vsub.f32 %v1322, %v1397
        %v1526 = vsub.f32 %v1327, %v1398
        %v1527 = vsub.f32 %v1330, %v1399
        %v1528 = vsub.f32 %v1335, %v1400
        %v1529 = vsub.f32 %v1338, %v1401
        %v1530 = vsub.f32 %v1343, %v1402
        %v1531 = vsub.f32 %v1346, %v1403
        %v1532 = vsub.f32 %v1351, %v1404
        %v1533 = vsub.f32 %v1354, %v1405
        %v1534 = vadd.f32 %v1502, 1e-05
        %v1535 = vadd.f32 %v1503, 1e-05
        %v1536 = vadd.f32 %v1504, 1e-05
        %v1537 = vadd.f32 %v1505, 1e-05
        %v1538 = vadd.f32 %v1506, 1e-05
        %v1539 = vadd.f32 %v1507, 1e-05
        %v1540 = vadd.f32 %v1508, 1e-05
        %v1541 = vadd.f32 %v1509, 1e-05
        %v1542 = vadd.f32 %v1510, 1e-05
        %v1543 = vadd.f32 %v1511, 1e-05
        %v1544 = vadd.f32 %v1512, 1e-05
        %v1545 = vadd.f32 %v1513, 1e-05
        %v1546 = vadd.f32 %v1514, 1e-05
        %v1547 = vadd.f32 %v1515, 1e-05
        %v1548 = vadd.f32 %v1516, 1e-05
        %v1549 = vadd.f32 %v1517, 1e-05
        %v1550 = vrsqrt.pop %v1534
        %v1551 = vrsqrt.pop %v1535
        %v1552 = vrsqrt.pop %v1536
        %v1553 = vrsqrt.pop %v1537
        %v1554 = vrsqrt.pop %v1538
        %v1555 = vrsqrt.pop %v1539
        %v1556 = vrsqrt.pop %v1540
        %v1557 = vrsqrt.pop %v1541
        %v1558 = vrsqrt.pop %v1542
        %v1559 = vrsqrt.pop %v1543
        %v1560 = vrsqrt.pop %v1544
        %v1561 = vrsqrt.pop %v1545
        %v1562 = vrsqrt.pop %v1546
        %v1563 = vrsqrt.pop %v1547
        %v1564 = vrsqrt.pop %v1548
        %v1565 = vrsqrt.pop %v1549
        %v1566 = vmul.f32 %v1518, %v1550
        %v1567 = vmul.f32 %v1519, %v1551
        %v1568 = vmul.f32 %v1520, %v1552
        %v1569 = vmul.f32 %v1521, %v1553
        %v1570 = vmul.f32 %v1522, %v1554
        %v1571 = vmul.f32 %v1523, %v1555
        %v1572 = vmul.f32 %v1524, %v1556
        %v1573 = vmul.f32 %v1525, %v1557
        %v1574 = vmul.f32 %v1526, %v1558
        %v1575 = vmul.f32 %v1527, %v1559
        %v1576 = vmul.f32 %v1528, %v1560
        %v1577 = vmul.f32 %v1529, %v1561
        %v1578 = vmul.f32 %v1530, %v1562
        %v1579 = vmul.f32 %v1531, %v1563
        %v1580 = vmul.f32 %v1532, %v1564
        %v1581 = vmul.f32 %v1533, %v1565
        %v1582 = vlaneseq
        %v1583 = vshrl.u32 %v1582, 7
        %v1584 = vsub.s32 1, %v1583
        %v1585 = vrot.slane %v302, %v1584
        %v1586 = vmul.f32 %v1566, %v1585
        %v1587 = vmul.f32 %v1567, %v1585
        %v1588 = vmul.f32 %v1568, %v1585
        %v1589 = vmul.f32 %v1569, %v1585
        %v1590 = vmul.f32 %v1570, %v1585
        %v1591 = vmul.f32 %v1571, %v1585
        %v1592 = vmul.f32 %v1572, %v1585
        %v1593 = vmul.f32 %v1573, %v1585
        %v1594 = vmul.f32 %v1574, %v1585
        %v1595 = vmul.f32 %v1575, %v1585
        %v1596 = vmul.f32 %v1576, %v1585
        %v1597 = vmul.f32 %v1577, %v1585
        %v1598 = vmul.f32 %v1578, %v1585
        %v1599 = vmul.f32 %v1579, %v1585
        %v1600 = vmul.f32 %v1580, %v1585
        %v1601 = vmul.f32 %v1581, %v1585
        %v1602 = vlaneseq
        %v1603 = vshrl.u32 %v1602, 7
        %v1604 = vsub.s32 2, %v1603
        %v1605 = vrot.slane %v302, %v1604
        %v1606 = vadd.f32 %v1586, %v1605
        %v1607 = vadd.f32 %v1587, %v1605
        %v1608 = vadd.f32 %v1588, %v1605
        %v1609 = vadd.f32 %v1589, %v1605
        %v1610 = vadd.f32 %v1590, %v1605
        %v1611 = vadd.f32 %v1591, %v1605
        %v1612 = vadd.f32 %v1592, %v1605
        %v1613 = vadd.f32 %v1593, %v1605
        %v1614 = vadd.f32 %v1594, %v1605
        %v1615 = vadd.f32 %v1595, %v1605
        %v1616 = vadd.f32 %v1596, %v1605
        %v1617 = vadd.f32 %v1597, %v1605
        %v1618 = vadd.f32 %v1598, %v1605
        %v1619 = vadd.f32 %v1599, %v1605
        %v1620 = vadd.f32 %v1600, %v1605
        %v1621 = vadd.f32 %v1601, %v1605
        %v1622 = vmax.f32 %v1606, 0.0
        %v1623 = vmax.f32 %v1607, 0.0
        %v1624 = vmax.f32 %v1608, 0.0
        %v1625 = vmax.f32 %v1609, 0.0
        %v1626 = vmax.f32 %v1610, 0.0
        %v1627 = vmax.f32 %v1611, 0.0
        %v1628 = vmax.f32 %v1612, 0.0
        %v1629 = vmax.f32 %v1613, 0.0
        %v1630 = vmax.f32 %v1614, 0.0
        %v1631 = vmax.f32 %v1615, 0.0
        %v1632 = vmax.f32 %v1616, 0.0
        %v1633 = vmax.f32 %v1617, 0.0
        %v1634 = vmax.f32 %v1618, 0.0
        %v1635 = vmax.f32 %v1619, 0.0
        %v1636 = vmax.f32 %v1620, 0.0
        %v1637 = vmax.f32 %v1621, 0.0
        %1638 = vst [vmem:[%s297] sm:$0xff] %v1622
        %1639 = vst [vmem:[%s297 + $0x8] sm:$0xff] %v1623
        %1640 = vst [vmem:[%s297 + $0x10] sm:$0xff] %v1624
        %1641 = vst [vmem:[%s297 + $0x18] sm:$0xff] %v1625
        %1642 = vst [vmem:[%s297 + $0x20] sm:$0xff] %v1626
        %1643 = vst [vmem:[%s297 + $0x28] sm:$0xff] %v1627
        %1644 = vst [vmem:[%s297 + $0x30] sm:$0xff] %v1628
        %1645 = vst [vmem:[%s297 + $0x38] sm:$0xff] %v1629
        %1646 = vst [vmem:[%s297 + $0x40] sm:$0xff] %v1630
        %1647 = vst [vmem:[%s297 + $0x48] sm:$0xff] %v1631
        %1648 = vst [vmem:[%s297 + $0x50] sm:$0xff] %v1632
        %1649 = vst [vmem:[%s297 + $0x58] sm:$0xff] %v1633
        %1650 = vst [vmem:[%s297 + $0x60] sm:$0xff] %v1634
        %1651 = vst [vmem:[%s297 + $0x68] sm:$0xff] %v1635
        %1652 = vst [vmem:[%s297 + $0x70] sm:$0xff] %v1636
        %1653 = vst [vmem:[%s297 + $0x78] sm:$0xff] %v1637
        %s1654 = sand.u32 %s142, 1
        %s1655 = scalar_lea.sflag [#allocation4], %s1654
        %s1656 = sand.u32 %s142, 1
        %s1657 = smul.addr %s1656, 128
        %s1658 = scalar_lea.vmem [#allocation11], %s1657
        // Predicated region
        $region61: #{_fnn_forward.1} parent=39 // pred_check
          %p1659 = pneg %p152
        $region62: #{_fnn_forward.1} parent=39 // pred_check_branch
          %1661 = sbr.rel (%p1659) target = $region64
        $region63: #{_fnn_forward.1} parent=39 // pred_region
          %s1662 = smul.u32 16, %s24
          %s1664 = ssub.s32 2048, 2048
          %1665 = vsyncadd %s1655, %s1664
          %s1666 = smul.addr %s1662, 128
          %s1667 = scalar_lea.hbm %s5, %s1666
          %s1668 = sshll.u32 %s1658, 4
          %s1669 = int_to_ptr.vmem [resolvable:$true] %s1668
          %1674 = dma.vmem_to_hbm [thread:$0]  %s1669, 2048, %s1667, %s1655, 128, 128, 8
        $region64: #{_fnn_forward.1} parent=39 // pred_fallthru
          _
      $region40: #{_fnn_forward.1} parent=5 // pred_fallthru
        _
      %p1675 = scmp.le.s32.totalorder 2, %s19
      // Predicated region
      $region65: #{_fnn_forward.1} parent=5 // pred_check
        %p1676 = pneg %p1675
      $region66: #{_fnn_forward.1} parent=5 // pred_check_branch
        %1678 = sbr.rel (%p1676) target = $region68
      $region67: #{_fnn_forward.1} parent=5 // pred_region
        %s1679 = ssub.s32 %s19, 2
        // Predicated region
        $region69: #{_fnn_forward.1} parent=67 // pred_check
          %p1680 = pneg %p158
        $region70: #{_fnn_forward.1} parent=67 // pred_check_branch
          %1682 = sbr.rel (%p1680) target = $region72
        $region71: #{_fnn_forward.1} parent=67 // pred_region
          %s1683 = sand.u32 %s143, 1
          %s1684 = scalar_lea.sflag [#allocation4], %s1683
          %s1685 = sand.u32 %s143, 1
          %s1686 = smul.addr %s1685, 128
          %s1687 = scalar_lea.vmem [#allocation11], %s1686
          %1688 = dma.done %s1684, 2048
        $region72: #{_fnn_forward.1} parent=67 // pred_fallthru
          _
      $region68: #{_fnn_forward.1} parent=5 // pred_fallthru
        _
    $region6: #{_fnn_forward.1} parent=1 // loop_footer
      %s23 = sadd.s32 1, %s19
    $region7: #{_fnn_forward.1} parent=1 // loop_footer_branch
      %18 = sbr.rel target = $region3
    $region8: #{_fnn_forward.1} parent=1 // loop_exit
      _
    %1689 = vsyncpa [#allocation3], 1
    %s1690 = scalar_lea.sflag [#allocation3], 1
    %1691 = vsyncpa %s1690, 1
    %1692 = vsyncpa [#allocation6], 1
    %1693 = vsyncpa [#allocation9], 1
    %1694 = vsyncpa [#allocation4], 1
    %s1695 = scalar_lea.sflag [#allocation4], 1
    %1696 = vsyncpa %s1695, 1

// kernel: _fnn_forward.1
$region0: #{_fnn_forward.1}
  #allocation0 [shape = 'u32[]', space=smem, size = 0x4, offset = 0x4, fixed_abs, tag = 'smem constant byte address 0x4 - core index']
  #allocation1 [shape = 'u32[144,128]{1,0:T(1,128)}', space=vmem, size = 0x12000, scoped, tag = 'internal scratch']
  %s0 = inlined_call_operand.hbm [shape: f32[256,256], index: 0, kind: input, shape index: {}]
  %s1 = inlined_call_operand.hbm [shape: bf16[256,256], index: 1, kind: input, shape index: {}]
  %s2 = inlined_call_operand.hbm [shape: f32[3,256], index: 2, kind: input, shape index: {}]
  %s3 = inlined_call_operand.hbm [shape: bf16[256,128], index: 3, kind: input, shape index: {}]
  %s4 = inlined_call_operand.hbm [shape: f32[3,128], index: 4, kind: input, shape index: {}]
  %s5 = inlined_call_operand.hbm [shape: f32[256,128], index: 5, kind: output, shape index: {}]
  %s6 = sld [smem:[#allocation0]]
  $region73: #{_fnn_forward.1} parent=0
    _
  %s8 = ssub.s32 1, %s6
  %s9 = scalar_select 0, %s8, %s6
  $region1: #{_fnn_forward.1} parent=0
    #allocation2 [shape = 'u8[262144]{0}', space=vmem, size = 0x40000, scoped, tag = 'input window, operand 0']
    #allocation3 [shape = 's32[2]{0}', space=sflag, size = 0x8, scoped, tag = 'scoped memory for _fnn_forward.1']
    #allocation4 [shape = 's32[2]{0}', space=sflag, size = 0x8, scoped, tag = 'scoped memory for _fnn_forward.1']
    #allocation5 [shape = 'u8[131072]{0}', space=vmem, size = 0x20000, scoped, tag = 'input window, operand 1, single buffered']
    #allocation6 [shape = 's32[1]{0}', space=sflag, size = 0x4, scoped, tag = 'scoped memory for _fnn_forward.1']
    #allocation7 [shape = 'u8[4096]{0}', space=vmem, size = 0x1000, scoped, tag = 'input window, operand 2, single buffered']
    #allocation8 [shape = 'u8[65536]{0}', space=vmem, size = 0x10000, scoped, tag = 'input window, operand 3, single buffered']
    #allocation9 [shape = 's32[1]{0}', space=sflag, size = 0x4, scoped, tag = 'scoped memory for _fnn_forward.1']
    #allocation10 [shape = 'u8[2048]{0}', space=vmem, size = 0x800, scoped, tag = 'input window, operand 4, single buffered']
    #allocation11 [shape = 'u8[131072]{0}', space=vmem, size = 0x20000, scoped, tag = 'output window, operand 0']
    %10 = vsyncpa [#allocation3], 0
    %s11 = scalar_lea.sflag [#allocation3], 1
    %12 = vsyncpa %s11, 0
    %13 = vsyncpa [#allocation6], 0
    %14 = vsyncpa [#allocation9], 0
    %15 = vsyncpa [#allocation4], 0
    %s16 = scalar_lea.sflag [#allocation4], 1
    %17 = vsyncpa %s16, 0
    loop: start=0, step=1, limit=4
    $region2: #{_fnn_forward.1} parent=1 // loop_pre_header
      _
    $region3: #{_fnn_forward.1} parent=1 // loop_header
      %s19 = sphi 0, %s23
      %p20 = scmp.ge.s32.totalorder %s19, 4
      %s29 = sphi 0, %s31
      %s32 = sphi 0, %s29
      %s33 = sphi 0, %s32
      %s49 = sphi 0, %s33
      %s53 = sphi 0, %s53
      %s55 = sphi 0, %s53
      %s56 = sphi 0, %s55
      %s70 = sphi 0, %s56
      %s74 = sphi 0, %s74
      %s76 = sphi 0, %s74
      %s77 = sphi 0, %s76
      %s91 = sphi 0, %s77
      %s95 = sphi 0, %s95
      %s97 = sphi 0, %s95
      %s98 = sphi 0, %s97
      %s112 = sphi 0, %s98
      %s116 = sphi 0, %s116
      %s118 = sphi 0, %s116
      %s119 = sphi 0, %s118
      %s133 = sphi 0, %s119
      %s139 = sphi 0, %s141
      %s142 = sphi 0, %s139
      %s143 = sphi 0, %s142
      %s159 = sphi 0, %s143
    $region4: #{_fnn_forward.1} parent=1 // loop_header_branch
      %22 = sbr.rel (%p20) target = $region8
    $region5: #{_fnn_forward.1} parent=1 // loop_body
      %s24 = ssub.s32 %s19, 1
      %s25 = ssub.s32 %s19, 2
      %s26 = sadd.s32 %s19, 1
      %s27 = ssub.s32 %s19, %s26
      %p28 = scmp.eq.s32.totalorder %s27, 0
      %s30 = sadd.s32 %s29, 1
      %s31 = scalar_select %p28, %s29, %s30
      %p34 = pneg %p28
      %p35 = scmp.eq.s32.totalorder %s19, 1
      %p36 = por %p34, %p35
      %p37 = scmp.ne.s32.totalorder %s29, %s32
      %p38 = scmp.eq.s32.totalorder %s19, 0
      %p39 = por %p37, %p38
      %p40 = scmp.ne.s32.totalorder %s29, %s32
      %p41 = scmp.eq.s32.totalorder %s24, 1
      %p42 = por %p40, %p41
      %p43 = scmp.ne.s32.totalorder %s32, %s33
      %p44 = scmp.eq.s32.totalorder %s24, 0
      %p45 = por %p43, %p44
      %p46 = scmp.ne.s32.totalorder %s32, %s33
      %p47 = scmp.eq.s32.totalorder %s25, 1
      %p48 = por %p46, %p47
      %p50 = scmp.ne.s32.totalorder %s33, %s49
      %p51 = scmp.eq.s32.totalorder %s25, 0
      %p52 = por %p50, %p51
      %s54 = sadd.s32 %s53, 1
      %p57 = scmp.eq.s32.totalorder %s19, 1
      %p58 = scmp.ne.s32.totalorder %s53, %s55
      %p59 = scmp.eq.s32.totalorder %s19, 0
      %p60 = por %p58, %p59
      %p61 = scmp.ne.s32.totalorder %s53, %s55
      %p62 = scmp.eq.s32.totalorder %s24, 1
      %p63 = por %p61, %p62
      %p64 = scmp.ne.s32.totalorder %s55, %s56
      %p65 = scmp.eq.s32.totalorder %s24, 0
      %p66 = por %p64, %p65
      %p67 = scmp.ne.s32.totalorder %s55, %s56
      %p68 = scmp.eq.s32.totalorder %s25, 1
      %p69 = por %p67, %p68
      %p71 = scmp.ne.s32.totalorder %s56, %s70
      %p72 = scmp.eq.s32.totalorder %s25, 0
      %p73 = por %p71, %p72
      %s75 = sadd.s32 %s74, 1
      %p78 = scmp.eq.s32.totalorder %s19, 1
      %p79 = scmp.ne.s32.totalorder %s74, %s76
      %p80 = scmp.eq.s32.totalorder %s19, 0
      %p81 = por %p79, %p80
      %p82 = scmp.ne.s32.totalorder %s74, %s76
      %p83 = scmp.eq.s32.totalorder %s24, 1
      %p84 = por %p82, %p83
      %p85 = scmp.ne.s32.totalorder %s76, %s77
      %p86 = scmp.eq.s32.totalorder %s24, 0
      %p87 = por %p85, %p86
      %p88 = scmp.ne.s32.totalorder %s76, %s77
      %p89 = scmp.eq.s32.totalorder %s25, 1
      %p90 = por %p88, %p89
      %p92 = scmp.ne.s32.totalorder %s77, %s91
      %p93 = scmp.eq.s32.totalorder %s25, 0
      %p94 = por %p92, %p93
      %s96 = sadd.s32 %s95, 1
      %p99 = scmp.eq.s32.totalorder %s19, 1
      %p100 = scmp.ne.s32.totalorder %s95, %s97
      %p101 = scmp.eq.s32.totalorder %s19, 0
      %p102 = por %p100, %p101
      %p103 = scmp.ne.s32.totalorder %s95, %s97
      %p104 = scmp.eq.s32.totalorder %s24, 1
      %p105 = por %p103, %p104
      %p106 = scmp.ne.s32.totalorder %s97, %s98
      %p107 = scmp.eq.s32.totalorder %s24, 0
      %p108 = por %p106, %p107
      %p109 = scmp.ne.s32.totalorder %s97, %s98
      %p110 = scmp.eq.s32.totalorder %s25, 1
      %p111 = por %p109, %p110
      %p113 = scmp.ne.s32.totalorder %s98, %s112
      %p114 = scmp.eq.s32.totalorder %s25, 0
      %p115 = por %p113, %p114
      %s117 = sadd.s32 %s116, 1
      %p120 = scmp.eq.s32.totalorder %s19, 1
      %p121 = scmp.ne.s32.totalorder %s116, %s118
      %p122 = scmp.eq.s32.totalorder %s19, 0
      %p123 = por %p121, %p122
      %p124 = scmp.ne.s32.totalorder %s116, %s118
      %p125 = scmp.eq.s32.totalorder %s24, 1
      %p126 = por %p124, %p125
      %p127 = scmp.ne.s32.totalorder %s118, %s119
      %p128 = scmp.eq.s32.totalorder %s24, 0
      %p129 = por %p127, %p128
      %p130 = scmp.ne.s32.totalorder %s118, %s119
      %p131 = scmp.eq.s32.totalorder %s25, 1
      %p132 = por %p130, %p131
      %p134 = scmp.ne.s32.totalorder %s119, %s133
      %p135 = scmp.eq.s32.totalorder %s25, 0
      %p136 = por %p134, %p135
      %s137 = ssub.s32 %s19, %s26
      %p138 = scmp.eq.s32.totalorder %s137, 0
      %s140 = sadd.s32 %s139, 1
      %s141 = scalar_select %p138, %s139, %s140
      %p144 = pneg %p138
      %p145 = scmp.eq.s32.totalorder %s19, 1
      %p146 = por %p144, %p145
      %p147 = scmp.ne.s32.totalorder %s139, %s142
      %p148 = scmp.eq.s32.totalorder %s19, 0
      %p149 = por %p147, %p148
      %p150 = scmp.ne.s32.totalorder %s139, %s142
      %p151 = scmp.eq.s32.totalorder %s24, 1
      %p152 = por %p150, %p151
      %p153 = scmp.ne.s32.totalorder %s142, %s143
      %p154 = scmp.eq.s32.totalorder %s24, 0
      %p155 = por %p153, %p154
      %p156 = scmp.ne.s32.totalorder %s142, %s143
      %p157 = scmp.eq.s32.totalorder %s25, 1
      %p158 = por %p156, %p157
      %p160 = scmp.ne.s32.totalorder %s143, %s159
      %p161 = scmp.eq.s32.totalorder %s25, 0
      %p162 = por %p160, %p161
      %p163 = scmp.le.s32.totalorder 1, %s19
      %p164 = scmp.lt.s32.totalorder %s19, 3
      %p165 = pnand %p163, %p164
      %p166 = pneg %p165
      // Predicated region
      $region9: #{_fnn_forward.1} parent=5 // pred_check
        _
      $region10: #{_fnn_forward.1} parent=5 // pred_check_branch
        %168 = sbr.rel (%p165) target = $region12
      $region11: #{_fnn_forward.1} parent=5 // pred_region
        %s169 = ssub.s32 %s19, 1
        // Predicated region
        $region13: #{_fnn_forward.1} parent=11 // pred_check
          %p170 = pneg %p66
        $region14: #{_fnn_forward.1} parent=11 // pred_check_branch
          %172 = sbr.rel (%p170) target = $region16
        $region15: #{_fnn_forward.1} parent=11 // pred_region
          %s174 = ssub.s32 4096, 4096
          %175 = vsyncadd [#allocation6], %s174
          %s176 = sshll.u32 [#allocation5], 4
          %s177 = int_to_ptr.vmem [resolvable:$true] %s176
          %182 = dma.hbm_to_vmem [thread:$0]  %s1, 4096, %s177, [#allocation6], 128, 128, 8
        $region16: #{_fnn_forward.1} parent=11 // pred_fallthru
          _
        // Predicated region
        $region17: #{_fnn_forward.1} parent=11 // pred_check
          %p183 = pneg %p87
        $region18: #{_fnn_forward.1} parent=11 // pred_check_branch
          %185 = sbr.rel (%p183) target = $region20
        $region19: #{_fnn_forward.1} parent=11 // pred_region
          %s187 = ssub.s32 128, 128
          %188 = vsyncadd [#allocation6], %s187
          %s190 = sshll.u32 [#allocation7], 4
          %s191 = int_to_ptr.vmem [resolvable:$true] %s190
          %193 = dma.hbm_to_vmem [thread:$0]  %s2, 128, %s191, [#allocation6]
        $region20: #{_fnn_forward.1} parent=11 // pred_fallthru
          _
        // Predicated region
        $region21: #{_fnn_forward.1} parent=11 // pred_check
          %p194 = pneg %p108
        $region22: #{_fnn_forward.1} parent=11 // pred_check_branch
          %196 = sbr.rel (%p194) target = $region24
        $region23: #{_fnn_forward.1} parent=11 // pred_region
          %s198 = ssub.s32 2048, 2048
          %199 = vsyncadd [#allocation9], %s198
          %s200 = sshll.u32 [#allocation8], 4
          %s201 = int_to_ptr.vmem [resolvable:$true] %s200
          %206 = dma.hbm_to_vmem [thread:$0]  %s3, 2048, %s201, [#allocation9], 64, 64, 4
        $region24: #{_fnn_forward.1} parent=11 // pred_fallthru
          _
        // Predicated region
        $region25: #{_fnn_forward.1} parent=11 // pred_check
          %p207 = pneg %p129
        $region26: #{_fnn_forward.1} parent=11 // pred_check_branch
          %209 = sbr.rel (%p207) target = $region28
        $region27: #{_fnn_forward.1} parent=11 // pred_region
          %s211 = ssub.s32 64, 64
          %212 = vsyncadd [#allocation9], %s211
          %s214 = sshll.u32 [#allocation10], 4
          %s215 = int_to_ptr.vmem [resolvable:$true] %s214
          %217 = dma.hbm_to_vmem [thread:$0]  %s4, 64, %s215, [#allocation9]
        $region28: #{_fnn_forward.1} parent=11 // pred_fallthru
          _
      $region12: #{_fnn_forward.1} parent=5 // pred_fallthru
        _
      %p218 = scmp.lt.s32.totalorder %s19, 2
      // Predicated region
      $region29: #{_fnn_forward.1} parent=5 // pred_check
        %p219 = pneg %p218
      $region30: #{_fnn_forward.1} parent=5 // pred_check_branch
        %221 = sbr.rel (%p219) target = $region32
      $region31: #{_fnn_forward.1} parent=5 // pred_region
        // Predicated region
        $region33: #{_fnn_forward.1} parent=31 // pred_check
          %p222 = pneg %p39
        $region34: #{_fnn_forward.1} parent=31 // pred_check_branch
          %224 = sbr.rel (%p222) target = $region36
        $region35: #{_fnn_forward.1} parent=31 // pred_region
          %s225 = sand.u32 %s29, 1
          %s226 = scalar_lea.sflag [#allocation3], %s225
          %s227 = sand.u32 %s29, 1
          %s228 = smul.addr %s227, 256
          %s229 = scalar_lea.vmem [#allocation2], %s228
          %s230 = smul.u32 16, %s19
          %s232 = ssub.s32 4096, 4096
          %233 = vsyncadd %s226, %s232
          %s234 = smul.addr %s230, 2
          %s235 = smul.addr %s234, 128
          %s236 = scalar_lea.hbm %s0, %s235
          %s237 = sshll.u32 %s229, 4
          %s238 = int_to_ptr.vmem [resolvable:$true] %s237
          %243 = dma.hbm_to_vmem [thread:$0]  %s236, 4096, %s238, %s226, 256, 256, 16
        $region36: #{_fnn_forward.1} parent=31 // pred_fallthru
          _
      $region32: #{_fnn_forward.1} parent=5 // pred_fallthru
        _
      %p244 = scmp.le.s32.totalorder 1, %s19
      %p245 = scmp.lt.s32.totalorder %s19, 3
      %p246 = pnand %p244, %p245
      %p247 = pneg %p246
      // Predicated region
      $region37: #{_fnn_forward.1} parent=5 // pred_check
        _
      $region38: #{_fnn_forward.1} parent=5 // pred_check_branch
        %249 = sbr.rel (%p246) target = $region40
      $region39: #{_fnn_forward.1} parent=5 // pred_region
        %s250 = ssub.s32 %s19, 1
        %s251 = sand.u32 %s32, 1
        %s252 = scalar_lea.sflag [#allocation3], %s251
        %s253 = sand.u32 %s32, 1
        %s254 = smul.addr %s253, 256
        %s255 = scalar_lea.vmem [#allocation2], %s254
        // Predicated region
        $region41: #{_fnn_forward.1} parent=39 // pred_check
          %p256 = pneg %p45
        $region42: #{_fnn_forward.1} parent=39 // pred_check_branch
          %258 = sbr.rel (%p256) target = $region44
        $region43: #{_fnn_forward.1} parent=39 // pred_region
          %259 = dma.done %s252, 4096
        $region44: #{_fnn_forward.1} parent=39 // pred_fallthru
          _
        // Predicated region
        $region45: #{_fnn_forward.1} parent=39 // pred_check
          %p260 = pneg %p66
        $region46: #{_fnn_forward.1} parent=39 // pred_check_branch
          %262 = sbr.rel (%p260) target = $region48
        $region47: #{_fnn_forward.1} parent=39 // pred_region
          %263 = dma.done [#allocation6], 4096
        $region48: #{_fnn_forward.1} parent=39 // pred_fallthru
          _
        // Predicated region
        $region49: #{_fnn_forward.1} parent=39 // pred_check
          %p264 = pneg %p87
        $region50: #{_fnn_forward.1} parent=39 // pred_check_branch
          %266 = sbr.rel (%p264) target = $region52
        $region51: #{_fnn_forward.1} parent=39 // pred_region
          %267 = dma.done [#allocation6], 128
        $region52: #{_fnn_forward.1} parent=39 // pred_fallthru
          _
        // Predicated region
        $region53: #{_fnn_forward.1} parent=39 // pred_check
          %p268 = pneg %p108
        $region54: #{_fnn_forward.1} parent=39 // pred_check_branch
          %270 = sbr.rel (%p268) target = $region56
        $region55: #{_fnn_forward.1} parent=39 // pred_region
          %271 = dma.done [#allocation9], 2048
        $region56: #{_fnn_forward.1} parent=39 // pred_fallthru
          _
        // Predicated region
        $region57: #{_fnn_forward.1} parent=39 // pred_check
          %p272 = pneg %p129
        $region58: #{_fnn_forward.1} parent=39 // pred_check_branch
          %274 = sbr.rel (%p272) target = $region60
        $region59: #{_fnn_forward.1} parent=39 // pred_region
          %275 = dma.done [#allocation9], 64
        $region60: #{_fnn_forward.1} parent=39 // pred_fallthru
          _
        %s276 = sand.u32 %s32, 1
        %s277 = scalar_lea.sflag [#allocation3], %s276
        %s278 = sand.u32 %s32, 1
        %s279 = smul.addr %s278, 256
        %s280 = scalar_lea.vmem [#allocation2], %s279
        %p281 = pneg %p45
        %p282 = pneg %p42
        %p283 = pneg %p66
        %p284 = pneg %p63
        %p285 = pneg %p87
        %p286 = pneg %p84
        %p287 = pneg %p108
        %p288 = pneg %p105
        %p289 = pneg %p129
        %p290 = pneg %p126
        %p291 = pneg %p155
        %p292 = pneg %p152
        %s293 = sand.u32 %s142, 1
        %s294 = scalar_lea.sflag [#allocation4], %s293
        %s295 = sand.u32 %s142, 1
        %s296 = smul.addr %s295, 128
        %s297 = scalar_lea.vmem [#allocation11], %s296
        %s298 = smul.u32 16, %s24
        %s299 = smul.u32 16, %s24
        %v301 = vld [vmem:[#allocation7] sm:$0x77]
        %v302 = vld [vmem:[#allocation10] sm:$0x7]
        %v303 = vld [vmem:[%s255] sm:$0xff]
        %v304 = vld [vmem:[%s255 + $0x8] sm:$0xff]
        %v305 = vld [vmem:[%s255 + $0x10] sm:$0xff]
        %v306 = vld [vmem:[%s255 + $0x18] sm:$0xff]
        %v307 = vld [vmem:[%s255 + $0x20] sm:$0xff]
        %v308 = vld [vmem:[%s255 + $0x28] sm:$0xff]
        %v309 = vld [vmem:[%s255 + $0x30] sm:$0xff]
        %v310 = vld [vmem:[%s255 + $0x38] sm:$0xff]
        %v311 = vld [vmem:[%s255 + $0x40] sm:$0xff]
        %v312 = vld [vmem:[%s255 + $0x48] sm:$0xff]
        %v313 = vld [vmem:[%s255 + $0x50] sm:$0xff]
        %v314 = vld [vmem:[%s255 + $0x58] sm:$0xff]
        %v315 = vld [vmem:[%s255 + $0x60] sm:$0xff]
        %v316 = vld [vmem:[%s255 + $0x68] sm:$0xff]
        %v317 = vld [vmem:[%s255 + $0x70] sm:$0xff]
        %v318 = vld [vmem:[%s255 + $0x78] sm:$0xff]
        %v319 = vld [vmem:[%s255 + $0x80] sm:$0xff]
        %v320 = vld [vmem:[%s255 + $0x88] sm:$0xff]
        %v321 = vld [vmem:[%s255 + $0x90] sm:$0xff]
        %v322 = vld [vmem:[%s255 + $0x98] sm:$0xff]
        %v323 = vld [vmem:[%s255 + $0xa0] sm:$0xff]
        %v324 = vld [vmem:[%s255 + $0xa8] sm:$0xff]
        %v325 = vld [vmem:[%s255 + $0xb0] sm:$0xff]
        %v326 = vld [vmem:[%s255 + $0xb8] sm:$0xff]
        %v327 = vld [vmem:[%s255 + $0xc0] sm:$0xff]
        %v328 = vld [vmem:[%s255 + $0xc8] sm:$0xff]
        %v329 = vld [vmem:[%s255 + $0xd0] sm:$0xff]
        %v330 = vld [vmem:[%s255 + $0xd8] sm:$0xff]
        %v331 = vld [vmem:[%s255 + $0xe0] sm:$0xff]
        %v332 = vld [vmem:[%s255 + $0xe8] sm:$0xff]
        %v333 = vld [vmem:[%s255 + $0xf0] sm:$0xff]
        %v334 = vld [vmem:[%s255 + $0xf8] sm:$0xff]
        %v335 = vpack.c.bf16 %v305, %v303
        %v336 = vpack.c.bf16 %v306, %v304
        %v337 = vpack.c.bf16 %v309, %v307
        %v338 = vpack.c.bf16 %v310, %v308
        %v339 = vpack.c.bf16 %v313, %v311
        %v340 = vpack.c.bf16 %v314, %v312
        %v341 = vpack.c.bf16 %v317, %v315
        %v342 = vpack.c.bf16 %v318, %v316
        %v343 = vpack.c.bf16 %v321, %v319
        %v344 = vpack.c.bf16 %v322, %v320
        %v345 = vpack.c.bf16 %v325, %v323
        %v346 = vpack.c.bf16 %v326, %v324
        %v347 = vpack.c.bf16 %v329, %v327
        %v348 = vpack.c.bf16 %v330, %v328
        %v349 = vpack.c.bf16 %v333, %v331
        %v350 = vpack.c.bf16 %v334, %v332
        %v351 = vld [vmem:[#allocation5] sm:$0xff]
        %v352 = vld [vmem:[#allocation5 + $0x8] sm:$0xff]
        %v353 = vld [vmem:[#allocation5 + $0x10] sm:$0xff]
        %v354 = vld [vmem:[#allocation5 + $0x18] sm:$0xff]
        %v355 = vld [vmem:[#allocation5 + $0x20] sm:$0xff]
        %v356 = vld [vmem:[#allocation5 + $0x28] sm:$0xff]
        %v357 = vld [vmem:[#allocation5 + $0x30] sm:$0xff]
        %v358 = vld [vmem:[#allocation5 + $0x38] sm:$0xff]
        %v359 = vld [vmem:[#allocation5 + $0x40] sm:$0xff]
        %v360 = vld [vmem:[#allocation5 + $0x48] sm:$0xff]
        %v361 = vld [vmem:[#allocation5 + $0x50] sm:$0xff]
        %v362 = vld [vmem:[#allocation5 + $0x58] sm:$0xff]
        %v363 = vld [vmem:[#allocation5 + $0x60] sm:$0xff]
        %v364 = vld [vmem:[#allocation5 + $0x68] sm:$0xff]
        %v365 = vld [vmem:[#allocation5 + $0x70] sm:$0xff]
        %v366 = vld [vmem:[#allocation5 + $0x78] sm:$0xff]
        %v367 = vld [vmem:[#allocation5 + $0x80] sm:$0xff]
        %v368 = vld [vmem:[#allocation5 + $0x88] sm:$0xff]
        %v369 = vld [vmem:[#allocation5 + $0x90] sm:$0xff]
        %v370 = vld [vmem:[#allocation5 + $0x98] sm:$0xff]
        %v371 = vld [vmem:[#allocation5 + $0xa0] sm:$0xff]
        %v372 = vld [vmem:[#allocation5 + $0xa8] sm:$0xff]
        %v373 = vld [vmem:[#allocation5 + $0xb0] sm:$0xff]
        %v374 = vld [vmem:[#allocation5 + $0xb8] sm:$0xff]
        %v375 = vld [vmem:[#allocation5 + $0xc0] sm:$0xff]
        %v376 = vld [vmem:[#allocation5 + $0xc8] sm:$0xff]
        %v377 = vld [vmem:[#allocation5 + $0xd0] sm:$0xff]
        %v378 = vld [vmem:[#allocation5 + $0xd8] sm:$0xff]
        %v379 = vld [vmem:[#allocation5 + $0xe0] sm:$0xff]
        %v380 = vld [vmem:[#allocation5 + $0xe8] sm:$0xff]
        %v381 = vld [vmem:[#allocation5 + $0xf0] sm:$0xff]
        %v382 = vld [vmem:[#allocation5 + $0xf8] sm:$0xff]
        %v384 = vlaneseq
        %v385 = vshrl.u32 %v384, 7
        %v386 = vsub.s32 0, %v385
        %v387 = vrot.slane %v301, %v386
        %v388 = vlaneseq
        %v389 = vshrl.u32 %v388, 7
        %v390 = vsub.s32 4, %v389
        %v391 = vrot.slane %v301, %v390
        %v394 = vlaneseq
        %v395 = vshrl.u32 %v394, 7
        %v396 = vsub.s32 0, %v395
        %v397 = vrot.slane %v387, %v396
        %v398 = vlaneseq
        %v399 = vshrl.u32 %v398, 7
        %v400 = vsub.s32 0, %v399
        %v401 = vrot.slane %v391, %v400
        %v434 = vunpack.c.l.b16 %v351
        %v435 = vunpack.c.h.b16 %v351
        %v436 = vunpack.c.l.b16 %v352
        %v437 = vunpack.c.h.b16 %v352
        %v438 = vunpack.c.l.b16 %v353
        %v439 = vunpack.c.h.b16 %v353
        %v440 = vunpack.c.l.b16 %v354
        %v441 = vunpack.c.h.b16 %v354
        %v442 = vunpack.c.l.b16 %v355
        %v443 = vunpack.c.h.b16 %v355
        %v444 = vunpack.c.l.b16 %v356
        %v445 = vunpack.c.h.b16 %v356
        %v446 = vunpack.c.l.b16 %v357
        %v447 = vunpack.c.h.b16 %v357
        %v448 = vunpack.c.l.b16 %v358
        %v449 = vunpack.c.h.b16 %v358
        %v450 = vunpack.c.l.b16 %v359
        %v451 = vunpack.c.h.b16 %v359
        %v452 = vunpack.c.l.b16 %v360
        %v453 = vunpack.c.h.b16 %v360
        %v454 = vunpack.c.l.b16 %v361
        %v455 = vunpack.c.h.b16 %v361
        %v456 = vunpack.c.l.b16 %v362
        %v457 = vunpack.c.h.b16 %v362
        %v458 = vunpack.c.l.b16 %v363
        %v459 = vunpack.c.h.b16 %v363
        %v460 = vunpack.c.l.b16 %v364
        %v461 = vunpack.c.h.b16 %v364
        %v462 = vunpack.c.l.b16 %v365
        %v463 = vunpack.c.h.b16 %v365
        %v464 = vunpack.c.l.b16 %v366
        %v465 = vunpack.c.h.b16 %v366
        %v466 = vunpack.c.l.b16 %v367
        %v467 = vunpack.c.h.b16 %v367
        %v468 = vunpack.c.l.b16 %v368
        %v469 = vunpack.c.h.b16 %v368
        %v470 = vunpack.c.l.b16 %v369
        %v471 = vunpack.c.h.b16 %v369
        %v472 = vunpack.c.l.b16 %v370
        %v473 = vunpack.c.h.b16 %v370
        %v474 = vunpack.c.l.b16 %v371
        %v475 = vunpack.c.h.b16 %v371
        %v476 = vunpack.c.l.b16 %v372
        %v477 = vunpack.c.h.b16 %v372
        %v478 = vunpack.c.l.b16 %v373
        %v479 = vunpack.c.h.b16 %v373
        %v480 = vunpack.c.l.b16 %v374
        %v481 = vunpack.c.h.b16 %v374
        %v482 = vunpack.c.l.b16 %v375
        %v483 = vunpack.c.h.b16 %v375
        %v484 = vunpack.c.l.b16 %v376
        %v485 = vunpack.c.h.b16 %v376
        %v486 = vunpack.c.l.b16 %v377
        %v487 = vunpack.c.h.b16 %v377
        %v488 = vunpack.c.l.b16 %v378
        %v489 = vunpack.c.h.b16 %v378
        %v490 = vunpack.c.l.b16 %v379
        %v491 = vunpack.c.h.b16 %v379
        %v492 = vunpack.c.l.b16 %v380
        %v493 = vunpack.c.h.b16 %v380
        %v494 = vunpack.c.l.b16 %v381
        %v495 = vunpack.c.h.b16 %v381
        %v496 = vunpack.c.l.b16 %v382
        %v497 = vunpack.c.h.b16 %v382
        %v498 = vpack.c.b16 %v436, %v434
        %v499 = vpack.c.b16 %v437, %v435
        %v500 = vpack.c.b16 %v440, %v438
        %v501 = vpack.c.b16 %v441, %v439
        %v502 = vpack.c.b16 %v444, %v442
        %v503 = vpack.c.b16 %v445, %v443
        %v504 = vpack.c.b16 %v448, %v446
        %v505 = vpack.c.b16 %v449, %v447
        %v506 = vpack.c.b16 %v452, %v450
        %v507 = vpack.c.b16 %v453, %v451
        %v508 = vpack.c.b16 %v456, %v454
        %v509 = vpack.c.b16 %v457, %v455
        %v510 = vpack.c.b16 %v460, %v458
        %v511 = vpack.c.b16 %v461, %v459
        %v512 = vpack.c.b16 %v464, %v462
        %v513 = vpack.c.b16 %v465, %v463
        %v514 = vpack.c.b16 %v468, %v466
        %v515 = vpack.c.b16 %v469, %v467
        %v516 = vpack.c.b16 %v472, %v470
        %v517 = vpack.c.b16 %v473, %v471
        %v518 = vpack.c.b16 %v476, %v474
        %v519 = vpack.c.b16 %v477, %v475
        %v520 = vpack.c.b16 %v480, %v478
        %v521 = vpack.c.b16 %v481, %v479
        %v522 = vpack.c.b16 %v484, %v482
        %v523 = vpack.c.b16 %v485, %v483
        %v524 = vpack.c.b16 %v488, %v486
        %v525 = vpack.c.b16 %v489, %v487
        %v526 = vpack.c.b16 %v492, %v490
        %v527 = vpack.c.b16 %v493, %v491
        %v528 = vpack.c.b16 %v496, %v494
        %v529 = vpack.c.b16 %v497, %v495
        %562 = vmatprep.subr.bf16.mxu0 %v513
        %563 = vmatpush1.bf16.msra.mxu0 %v512
        %564 = vmatprep.subr.bf16.mxu0 %v511
        %565 = vmatpush1.bf16.msra.mxu0 %v510
        %566 = vmatprep.subr.bf16.mxu0 %v509
        %567 = vmatpush1.bf16.msra.mxu0 %v508
        %568 = vmatprep.subr.bf16.mxu0 %v507
        %569 = vmatpush1.bf16.msra.mxu0 %v506
        %570 = vmatprep.subr.bf16.mxu0 %v505
        %571 = vmatpush1.bf16.msra.mxu0 %v504
        %572 = vmatprep.subr.bf16.mxu0 %v503
        %573 = vmatpush1.bf16.msra.mxu0 %v502
        %574 = vmatprep.subr.bf16.mxu0 %v501
        %575 = vmatpush1.bf16.msra.mxu0 %v500
        %576 = vmatprep.subr.bf16.mxu0 %v499
        %577 = vmatpush1.bf16.msra.mxu0 %v498
        %578 = vmatprep.subr.bf16.mxu0 %v529
        %579 = vmatpush2.bf16.msra.mxu0 %v528
        %580 = vmatprep.subr.bf16.mxu0 %v527
        %581 = vmatpush2.bf16.msra.mxu0 %v526
        %582 = vmatprep.subr.bf16.mxu0 %v525
        %583 = vmatpush2.bf16.msra.mxu0 %v524
        %584 = vmatprep.subr.bf16.mxu0 %v523
        %585 = vmatpush2.bf16.msra.mxu0 %v522
        %586 = vmatprep.subr.bf16.mxu0 %v521
        %587 = vmatpush2.bf16.msra.mxu0 %v520
        %588 = vmatprep.subr.bf16.mxu0 %v519
        %589 = vmatpush2.bf16.msra.mxu0 %v518
        %590 = vmatprep.subr.bf16.mxu0 %v517
        %591 = vmatpush2.bf16.msra.mxu0 %v516
        %592 = vmatprep.subr.bf16.mxu0 %v515
        %593 = vmatpush2.bf16.msra.mxu0 %v514
        %594 = vmatprep.mubr.bf16.mxu0 %v336
        %595 = vmatmul.mubr.bf16.gmra.mxu0 %v335
        %v596 = vpop.f32.mrf.mxu0
        %v597 = vadd.f32 %v397, %v596
        %v598 = vpop.f32.mrf.mxu0
        %v599 = vadd.f32 %v401, %v598
        %v600 = vpop.f32.mrf.mxu0
        %v601 = vadd.f32 %v397, %v600
        %v602 = vpop.f32.mrf.mxu0
        %v603 = vadd.f32 %v401, %v602
        %604 = vmatprep.mubr.bf16.mxu0 %v338
        %605 = vmatmul.mubr.bf16.gmra.mxu0 %v337
        %v606 = vpop.f32.mrf.mxu0
        %v607 = vadd.f32 %v397, %v606
        %v608 = vpop.f32.mrf.mxu0
        %v609 = vadd.f32 %v401, %v608
        %v610 = vpop.f32.mrf.mxu0
        %v611 = vadd.f32 %v397, %v610
        %v612 = vpop.f32.mrf.mxu0
        %v613 = vadd.f32 %v401, %v612
        %614 = vmatprep.mubr.bf16.mxu0 %v340
        %615 = vmatmul.mubr.bf16.gmra.mxu0 %v339
        %v616 = vpop.f32.mrf.mxu0
        %v617 = vadd.f32 %v397, %v616
        %v618 = vpop.f32.mrf.mxu0
        %v619 = vadd.f32 %v401, %v618
        %v620 = vpop.f32.mrf.mxu0
        %v621 = vadd.f32 %v397, %v620
        %v622 = vpop.f32.mrf.mxu0
        %v623 = vadd.f32 %v401, %v622
        %624 = vmatprep.mubr.bf16.mxu0 %v342
        %625 = vmatmul.mubr.bf16.gmra.mxu0 %v341
        %v626 = vpop.f32.mrf.mxu0
        %v627 = vadd.f32 %v397, %v626
        %v628 = vpop.f32.mrf.mxu0
        %v629 = vadd.f32 %v401, %v628
        %v630 = vpop.f32.mrf.mxu0
        %v631 = vadd.f32 %v397, %v630
        %v632 = vpop.f32.mrf.mxu0
        %v633 = vadd.f32 %v401, %v632
        %634 = vmatprep.mubr.bf16.mxu0 %v344
        %635 = vmatmul.mubr.bf16.gmra.mxu0 %v343
        %v636 = vpop.f32.mrf.mxu0
        %v637 = vadd.f32 %v397, %v636
        %v638 = vpop.f32.mrf.mxu0
        %v639 = vadd.f32 %v401, %v638
        %v640 = vpop.f32.mrf.mxu0
        %v641 = vadd.f32 %v397, %v640
        %v642 = vpop.f32.mrf.mxu0
        %v643 = vadd.f32 %v401, %v642
        %644 = vmatprep.mubr.bf16.mxu0 %v346
        %645 = vmatmul.mubr.bf16.gmra.mxu0 %v345
        %v646 = vpop.f32.mrf.mxu0
        %v647 = vadd.f32 %v397, %v646
        %v648 = vpop.f32.mrf.mxu0
        %v649 = vadd.f32 %v401, %v648
        %v650 = vpop.f32.mrf.mxu0
        %v651 = vadd.f32 %v397, %v650
        %v652 = vpop.f32.mrf.mxu0
        %v653 = vadd.f32 %v401, %v652
        %654 = vmatprep.mubr.bf16.mxu0 %v348
        %655 = vmatmul.mubr.bf16.gmra.mxu0 %v347
        %v656 = vpop.f32.mrf.mxu0
        %v657 = vadd.f32 %v397, %v656
        %v658 = vpop.f32.mrf.mxu0
        %v659 = vadd.f32 %v401, %v658
        %v660 = vpop.f32.mrf.mxu0
        %v661 = vadd.f32 %v397, %v660
        %v662 = vpop.f32.mrf.mxu0
        %v663 = vadd.f32 %v401, %v662
        %664 = vmatprep.mubr.bf16.mxu0 %v350
        %665 = vmatmul.mubr.bf16.gmra.mxu0 %v349
        %v666 = vpop.f32.mrf.mxu0
        %v667 = vadd.f32 %v397, %v666
        %v668 = vpop.f32.mrf.mxu0
        %v669 = vadd.f32 %v401, %v668
        %v670 = vpop.f32.mrf.mxu0
        %v671 = vadd.f32 %v397, %v670
        %v672 = vpop.f32.mrf.mxu0
        %v673 = vadd.f32 %v401, %v672
        %674 = vdwg.mxu0
        %v675 = vadd.f32 %v597, %v599
        %676 = vadd.xlane.f32.xlu0 %v675
        %v677 = vpop.xlane.xlu0 %676
        %v678 = vadd.f32 %v601, %v603
        %679 = vadd.xlane.f32.xlu0 %v678
        %v680 = vpop.xlane.xlu0 %679
        %v681 = vadd.f32 %v607, %v609
        %682 = vadd.xlane.f32.xlu0 %v681
        %v683 = vpop.xlane.xlu0 %682
        %v684 = vadd.f32 %v611, %v613
        %685 = vadd.xlane.f32.xlu0 %v684
        %v686 = vpop.xlane.xlu0 %685
        %v687 = vadd.f32 %v617, %v619
        %688 = vadd.xlane.f32.xlu0 %v687
        %v689 = vpop.xlane.xlu0 %688
        %v690 = vadd.f32 %v621, %v623
        %691 = vadd.xlane.f32.xlu0 %v690
        %v692 = vpop.xlane.xlu0 %691
        %v693 = vadd.f32 %v627, %v629
        %694 = vadd.xlane.f32.xlu0 %v693
        %v695 = vpop.xlane.xlu0 %694
        %v696 = vadd.f32 %v631, %v633
        %697 = vadd.xlane.f32.xlu0 %v696
        %v698 = vpop.xlane.xlu0 %697
        %v699 = vadd.f32 %v637, %v639
        %700 = vadd.xlane.f32.xlu0 %v699
        %v701 = vpop.xlane.xlu0 %700
        %v702 = vadd.f32 %v641, %v643
        %703 = vadd.xlane.f32.xlu0 %v702
        %v704 = vpop.xlane.xlu0 %703
        %v705 = vadd.f32 %v647, %v649
        %706 = vadd.xlane.f32.xlu0 %v705
        %v707 = vpop.xlane.xlu0 %706
        %v708 = vadd.f32 %v651, %v653
        %709 = vadd.xlane.f32.xlu0 %v708
        %v710 = vpop.xlane.xlu0 %709
        %v711 = vadd.f32 %v657, %v659
        %712 = vadd.xlane.f32.xlu0 %v711
        %v713 = vpop.xlane.xlu0 %712
        %v714 = vadd.f32 %v661, %v663
        %715 = vadd.xlane.f32.xlu0 %v714
        %v716 = vpop.xlane.xlu0 %715
        %v717 = vadd.f32 %v667, %v669
        %718 = vadd.xlane.f32.xlu0 %v717
        %v719 = vpop.xlane.xlu0 %718
        %v720 = vadd.f32 %v671, %v673
        %721 = vadd.xlane.f32.xlu0 %v720
        %v722 = vpop.xlane.xlu0 %721
        %v723 = vrcp.pop 256.0
        %v724 = vmul.f32 %v677, %v723
        %v725 = vmul.f32 %v680, %v723
        %v726 = vmul.f32 %v683, %v723
        %v727 = vmul.f32 %v686, %v723
        %v728 = vmul.f32 %v689, %v723
        %v729 = vmul.f32 %v692, %v723
        %v730 = vmul.f32 %v695, %v723
        %v731 = vmul.f32 %v698, %v723
        %v732 = vmul.f32 %v701, %v723
        %v733 = vmul.f32 %v704, %v723
        %v734 = vmul.f32 %v707, %v723
        %v735 = vmul.f32 %v710, %v723
        %v736 = vmul.f32 %v713, %v723
        %v737 = vmul.f32 %v716, %v723
        %v738 = vmul.f32 %v719, %v723
        %v739 = vmul.f32 %v722, %v723
        %v740 = vmul.f32 %v597, %v597
        %v741 = vmul.f32 %v599, %v599
        %v742 = vmul.f32 %v601, %v601
        %v743 = vmul.f32 %v603, %v603
        %v744 = vmul.f32 %v607, %v607
        %v745 = vmul.f32 %v609, %v609
        %v746 = vmul.f32 %v611, %v611
        %v747 = vmul.f32 %v613, %v613
        %v748 = vmul.f32 %v617, %v617
        %v749 = vmul.f32 %v619, %v619
        %v750 = vmul.f32 %v621, %v621
        %v751 = vmul.f32 %v623, %v623
        %v752 = vmul.f32 %v627, %v627
        %v753 = vmul.f32 %v629, %v629
        %v754 = vmul.f32 %v631, %v631
        %v755 = vmul.f32 %v633, %v633
        %v756 = vmul.f32 %v637, %v637
        %v757 = vmul.f32 %v639, %v639
        %v758 = vmul.f32 %v641, %v641
        %v759 = vmul.f32 %v643, %v643
        %v760 = vmul.f32 %v647, %v647
        %v761 = vmul.f32 %v649, %v649
        %v762 = vmul.f32 %v651, %v651
        %v763 = vmul.f32 %v653, %v653
        %v764 = vmul.f32 %v657, %v657
        %v765 = vmul.f32 %v659, %v659
        %v766 = vmul.f32 %v661, %v661
        %v767 = vmul.f32 %v663, %v663
        %v768 = vmul.f32 %v667, %v667
        %v769 = vmul.f32 %v669, %v669
        %v770 = vmul.f32 %v671, %v671
        %v771 = vmul.f32 %v673, %v673
        %v772 = vadd.f32 %v740, %v741
        %773 = vadd.xlane.f32.xlu0 %v772
        %v774 = vpop.xlane.xlu0 %773
        %v775 = vadd.f32 %v742, %v743
        %776 = vadd.xlane.f32.xlu0 %v775
        %v777 = vpop.xlane.xlu0 %776
        %v778 = vadd.f32 %v744, %v745
        %779 = vadd.xlane.f32.xlu0 %v778
        %v780 = vpop.xlane.xlu0 %779
        %v781 = vadd.f32 %v746, %v747
        %782 = vadd.xlane.f32.xlu0 %v781
        %v783 = vpop.xlane.xlu0 %782
        %v784 = vadd.f32 %v748, %v749
        %785 = vadd.xlane.f32.xlu0 %v784
        %v786 = vpop.xlane.xlu0 %785
        %v787 = vadd.f32 %v750, %v751
        %788 = vadd.xlane.f32.xlu0 %v787
        %v789 = vpop.xlane.xlu0 %788
        %v790 = vadd.f32 %v752, %v753
        %791 = vadd.xlane.f32.xlu0 %v790
        %v792 = vpop.xlane.xlu0 %791
        %v793 = vadd.f32 %v754, %v755
        %794 = vadd.xlane.f32.xlu0 %v793
        %v795 = vpop.xlane.xlu0 %794
        %v796 = vadd.f32 %v756, %v757
        %797 = vadd.xlane.f32.xlu0 %v796
        %v798 = vpop.xlane.xlu0 %797
        %v799 = vadd.f32 %v758, %v759
        %800 = vadd.xlane.f32.xlu0 %v799
        %v801 = vpop.xlane.xlu0 %800
        %v802 = vadd.f32 %v760, %v761
        %803 = vadd.xlane.f32.xlu0 %v802
        %v804 = vpop.xlane.xlu0 %803
        %v805 = vadd.f32 %v762, %v763
        %806 = vadd.xlane.f32.xlu0 %v805
        %v807 = vpop.xlane.xlu0 %806
        %v808 = vadd.f32 %v764, %v765
        %809 = vadd.xlane.f32.xlu0 %v808
        %v810 = vpop.xlane.xlu0 %809
        %v811 = vadd.f32 %v766, %v767
        %812 = vadd.xlane.f32.xlu0 %v811
        %v813 = vpop.xlane.xlu0 %812
        %v814 = vadd.f32 %v768, %v769
        %815 = vadd.xlane.f32.xlu0 %v814
        %v816 = vpop.xlane.xlu0 %815
        %v817 = vadd.f32 %v770, %v771
        %818 = vadd.xlane.f32.xlu0 %v817
        %v819 = vpop.xlane.xlu0 %818
        %v820 = vmul.f32 %v774, %v723
        %v821 = vmul.f32 %v777, %v723
        %v822 = vmul.f32 %v780, %v723
        %v823 = vmul.f32 %v783, %v723
        %v824 = vmul.f32 %v786, %v723
        %v825 = vmul.f32 %v789, %v723
        %v826 = vmul.f32 %v792, %v723
        %v827 = vmul.f32 %v795, %v723
        %v828 = vmul.f32 %v798, %v723
        %v829 = vmul.f32 %v801, %v723
        %v830 = vmul.f32 %v804, %v723
        %v831 = vmul.f32 %v807, %v723
        %v832 = vmul.f32 %v810, %v723
        %v833 = vmul.f32 %v813, %v723
        %v834 = vmul.f32 %v816, %v723
        %v835 = vmul.f32 %v819, %v723
        %v836 = vmul.f32 %v724, %v724
        %v837 = vmul.f32 %v725, %v725
        %v838 = vmul.f32 %v726, %v726
        %v839 = vmul.f32 %v727, %v727
        %v840 = vmul.f32 %v728, %v728
        %v841 = vmul.f32 %v729, %v729
        %v842 = vmul.f32 %v730, %v730
        %v843 = vmul.f32 %v731, %v731
        %v844 = vmul.f32 %v732, %v732
        %v845 = vmul.f32 %v733, %v733
        %v846 = vmul.f32 %v734, %v734
        %v847 = vmul.f32 %v735, %v735
        %v848 = vmul.f32 %v736, %v736
        %v849 = vmul.f32 %v737, %v737
        %v850 = vmul.f32 %v738, %v738
        %v851 = vmul.f32 %v739, %v739
        %v852 = vsub.f32 %v820, %v836
        %v853 = vsub.f32 %v821, %v837
        %v854 = vsub.f32 %v822, %v838
        %v855 = vsub.f32 %v823, %v839
        %v856 = vsub.f32 %v824, %v840
        %v857 = vsub.f32 %v825, %v841
        %v858 = vsub.f32 %v826, %v842
        %v859 = vsub.f32 %v827, %v843
        %v860 = vsub.f32 %v828, %v844
        %v861 = vsub.f32 %v829, %v845
        %v862 = vsub.f32 %v830, %v846
        %v863 = vsub.f32 %v831, %v847
        %v864 = vsub.f32 %v832, %v848
        %v865 = vsub.f32 %v833, %v849
        %v866 = vsub.f32 %v834, %v850
        %v867 = vsub.f32 %v835, %v851
        %v868 = vmax.f32 %v852, 0.0
        %v869 = vmax.f32 %v853, 0.0
        %v870 = vmax.f32 %v854, 0.0
        %v871 = vmax.f32 %v855, 0.0
        %v872 = vmax.f32 %v856, 0.0
        %v873 = vmax.f32 %v857, 0.0
        %v874 = vmax.f32 %v858, 0.0
        %v875 = vmax.f32 %v859, 0.0
        %v876 = vmax.f32 %v860, 0.0
        %v877 = vmax.f32 %v861, 0.0
        %v878 = vmax.f32 %v862, 0.0
        %v879 = vmax.f32 %v863, 0.0
        %v880 = vmax.f32 %v864, 0.0
        %v881 = vmax.f32 %v865, 0.0
        %v882 = vmax.f32 %v866, 0.0
        %v883 = vmax.f32 %v867, 0.0
        %v884 = vsub.f32 %v597, %v724
        %v885 = vsub.f32 %v599, %v724
        %v886 = vsub.f32 %v601, %v725
        %v887 = vsub.f32 %v603, %v725
        %v888 = vsub.f32 %v607, %v726
        %v889 = vsub.f32 %v609, %v726
        %v890 = vsub.f32 %v611, %v727
        %v891 = vsub.f32 %v613, %v727
        %v892 = vsub.f32 %v617, %v728
        %v893 = vsub.f32 %v619, %v728
        %v894 = vsub.f32 %v621, %v729
        %v895 = vsub.f32 %v623, %v729
        %v896 = vsub.f32 %v627, %v730
        %v897 = vsub.f32 %v629, %v730
        %v898 = vsub.f32 %v631, %v731
        %v899 = vsub.f32 %v633, %v731
        %v900 = vsub.f32 %v637, %v732
        %v901 = vsub.f32 %v639, %v732
        %v902 = vsub.f32 %v641, %v733
        %v903 = vsub.f32 %v643, %v733
        %v904 = vsub.f32 %v647, %v734
        %v905 = vsub.f32 %v649, %v734
        %v906 = vsub.f32 %v651, %v735
        %v907 = vsub.f32 %v653, %v735
        %v908 = vsub.f32 %v657, %v736
        %v909 = vsub.f32 %v659, %v736
        %v910 = vsub.f32 %v661, %v737
        %v911 = vsub.f32 %v663, %v737
        %v912 = vsub.f32 %v667, %v738
        %v913 = vsub.f32 %v669, %v738
        %v914 = vsub.f32 %v671, %v739
        %v915 = vsub.f32 %v673, %v739
        %v916 = vadd.f32 %v868, 1e-05
        %v917 = vadd.f32 %v869, 1e-05
        %v918 = vadd.f32 %v870, 1e-05
        %v919 = vadd.f32 %v871, 1e-05
        %v920 = vadd.f32 %v872, 1e-05
        %v921 = vadd.f32 %v873, 1e-05
        %v922 = vadd.f32 %v874, 1e-05
        %v923 = vadd.f32 %v875, 1e-05
        %v924 = vadd.f32 %v876, 1e-05
        %v925 = vadd.f32 %v877, 1e-05
        %v926 = vadd.f32 %v878, 1e-05
        %v927 = vadd.f32 %v879, 1e-05
        %v928 = vadd.f32 %v880, 1e-05
        %v929 = vadd.f32 %v881, 1e-05
        %v930 = vadd.f32 %v882, 1e-05
        %v931 = vadd.f32 %v883, 1e-05
        %v932 = vrsqrt.pop %v916
        %v933 = vrsqrt.pop %v917
        %v934 = vrsqrt.pop %v918
        %v935 = vrsqrt.pop %v919
        %v936 = vrsqrt.pop %v920
        %v937 = vrsqrt.pop %v921
        %v938 = vrsqrt.pop %v922
        %v939 = vrsqrt.pop %v923
        %v940 = vrsqrt.pop %v924
        %v941 = vrsqrt.pop %v925
        %v942 = vrsqrt.pop %v926
        %v943 = vrsqrt.pop %v927
        %v944 = vrsqrt.pop %v928
        %v945 = vrsqrt.pop %v929
        %v946 = vrsqrt.pop %v930
        %v947 = vrsqrt.pop %v931
        %v948 = vmul.f32 %v884, %v932
        %v949 = vmul.f32 %v885, %v932
        %v950 = vmul.f32 %v886, %v933
        %v951 = vmul.f32 %v887, %v933
        %v952 = vmul.f32 %v888, %v934
        %v953 = vmul.f32 %v889, %v934
        %v954 = vmul.f32 %v890, %v935
        %v955 = vmul.f32 %v891, %v935
        %v956 = vmul.f32 %v892, %v936
        %v957 = vmul.f32 %v893, %v936
        %v958 = vmul.f32 %v894, %v937
        %v959 = vmul.f32 %v895, %v937
        %v960 = vmul.f32 %v896, %v938
        %v961 = vmul.f32 %v897, %v938
        %v962 = vmul.f32 %v898, %v939
        %v963 = vmul.f32 %v899, %v939
        %v964 = vmul.f32 %v900, %v940
        %v965 = vmul.f32 %v901, %v940
        %v966 = vmul.f32 %v902, %v941
        %v967 = vmul.f32 %v903, %v941
        %v968 = vmul.f32 %v904, %v942
        %v969 = vmul.f32 %v905, %v942
        %v970 = vmul.f32 %v906, %v943
        %v971 = vmul.f32 %v907, %v943
        %v972 = vmul.f32 %v908, %v944
        %v973 = vmul.f32 %v909, %v944
        %v974 = vmul.f32 %v910, %v945
        %v975 = vmul.f32 %v911, %v945
        %v976 = vmul.f32 %v912, %v946
        %v977 = vmul.f32 %v913, %v946
        %v978 = vmul.f32 %v914, %v947
        %v979 = vmul.f32 %v915, %v947
        %v980 = vlaneseq
        %v981 = vshrl.u32 %v980, 7
        %v982 = vsub.s32 1, %v981
        %v983 = vrot.slane %v301, %v982
        %v984 = vlaneseq
        %v985 = vshrl.u32 %v984, 7
        %v986 = vsub.s32 5, %v985
        %v987 = vrot.slane %v301, %v986
        %v990 = vlaneseq
        %v991 = vshrl.u32 %v990, 7
        %v992 = vsub.s32 1, %v991
        %v993 = vrot.slane %v983, %v992
        %v994 = vlaneseq
        %v995 = vshrl.u32 %v994, 7
        %v996 = vsub.s32 1, %v995
        %v997 = vrot.slane %v987, %v996
        %v998 = vmul.f32 %v948, %v993
        %v999 = vmul.f32 %v949, %v997
        %v1000 = vmul.f32 %v950, %v993
        %v1001 = vmul.f32 %v951, %v997
        %v1002 = vmul.f32 %v952, %v993
        %v1003 = vmul.f32 %v953, %v997
        %v1004 = vmul.f32 %v954, %v993
        %v1005 = vmul.f32 %v955, %v997
        %v1006 = vmul.f32 %v956, %v993
        %v1007 = vmul.f32 %v957, %v997
        %v1008 = vmul.f32 %v958, %v993
        %v1009 = vmul.f32 %v959, %v997
        %v1010 = vmul.f32 %v960, %v993
        %v1011 = vmul.f32 %v961, %v997
        %v1012 = vmul.f32 %v962, %v993
        %v1013 = vmul.f32 %v963, %v997
        %v1014 = vmul.f32 %v964, %v993
        %v1015 = vmul.f32 %v965, %v997
        %v1016 = vmul.f32 %v966, %v993
        %v1017 = vmul.f32 %v967, %v997
        %v1018 = vmul.f32 %v968, %v993
        %v1019 = vmul.f32 %v969, %v997
        %v1020 = vmul.f32 %v970, %v993
        %v1021 = vmul.f32 %v971, %v997
        %v1022 = vmul.f32 %v972, %v993
        %v1023 = vmul.f32 %v973, %v997
        %v1024 = vmul.f32 %v974, %v993
        %v1025 = vmul.f32 %v975, %v997
        %v1026 = vmul.f32 %v976, %v993
        %v1027 = vmul.f32 %v977, %v997
        %v1028 = vmul.f32 %v978, %v993
        %v1029 = vmul.f32 %v979, %v997
        %v1030 = vlaneseq
        %v1031 = vshrl.u32 %v1030, 7
        %v1032 = vsub.s32 2, %v1031
        %v1033 = vrot.slane %v301, %v1032
        %v1034 = vlaneseq
        %v1035 = vshrl.u32 %v1034, 7
        %v1036 = vsub.s32 6, %v1035
        %v1037 = vrot.slane %v301, %v1036
        %v1040 = vlaneseq
        %v1041 = vshrl.u32 %v1040, 7
        %v1042 = vsub.s32 2, %v1041
        %v1043 = vrot.slane %v1033, %v1042
        %v1044 = vlaneseq
        %v1045 = vshrl.u32 %v1044, 7
        %v1046 = vsub.s32 2, %v1045
        %v1047 = vrot.slane %v1037, %v1046
        %v1048 = vadd.f32 %v998, %v1043
        %v1049 = vadd.f32 %v999, %v1047
        %v1050 = vadd.f32 %v1000, %v1043
        %v1051 = vadd.f32 %v1001, %v1047
        %v1052 = vadd.f32 %v1002, %v1043
        %v1053 = vadd.f32 %v1003, %v1047
        %v1054 = vadd.f32 %v1004, %v1043
        %v1055 = vadd.f32 %v1005, %v1047
        %v1056 = vadd.f32 %v1006, %v1043
        %v1057 = vadd.f32 %v1007, %v1047
        %v1058 = vadd.f32 %v1008, %v1043
        %v1059 = vadd.f32 %v1009, %v1047
        %v1060 = vadd.f32 %v1010, %v1043
        %v1061 = vadd.f32 %v1011, %v1047
        %v1062 = vadd.f32 %v1012, %v1043
        %v1063 = vadd.f32 %v1013, %v1047
        %v1064 = vadd.f32 %v1014, %v1043
        %v1065 = vadd.f32 %v1015, %v1047
        %v1066 = vadd.f32 %v1016, %v1043
        %v1067 = vadd.f32 %v1017, %v1047
        %v1068 = vadd.f32 %v1018, %v1043
        %v1069 = vadd.f32 %v1019, %v1047
        %v1070 = vadd.f32 %v1020, %v1043
        %v1071 = vadd.f32 %v1021, %v1047
        %v1072 = vadd.f32 %v1022, %v1043
        %v1073 = vadd.f32 %v1023, %v1047
        %v1074 = vadd.f32 %v1024, %v1043
        %v1075 = vadd.f32 %v1025, %v1047
        %v1076 = vadd.f32 %v1026, %v1043
        %v1077 = vadd.f32 %v1027, %v1047
        %v1078 = vadd.f32 %v1028, %v1043
        %v1079 = vadd.f32 %v1029, %v1047
        %v1080 = vmax.f32 %v1048, 0.0
        %v1081 = vmax.f32 %v1049, 0.0
        %v1082 = vmax.f32 %v1050, 0.0
        %v1083 = vmax.f32 %v1051, 0.0
        %v1084 = vmax.f32 %v1052, 0.0
        %v1085 = vmax.f32 %v1053, 0.0
        %v1086 = vmax.f32 %v1054, 0.0
        %v1087 = vmax.f32 %v1055, 0.0
        %v1088 = vmax.f32 %v1056, 0.0
        %v1089 = vmax.f32 %v1057, 0.0
        %v1090 = vmax.f32 %v1058, 0.0
        %v1091 = vmax.f32 %v1059, 0.0
        %v1092 = vmax.f32 %v1060, 0.0
        %v1093 = vmax.f32 %v1061, 0.0
        %v1094 = vmax.f32 %v1062, 0.0
        %v1095 = vmax.f32 %v1063, 0.0
        %v1096 = vmax.f32 %v1064, 0.0
        %v1097 = vmax.f32 %v1065, 0.0
        %v1098 = vmax.f32 %v1066, 0.0
        %v1099 = vmax.f32 %v1067, 0.0
        %v1100 = vmax.f32 %v1068, 0.0
        %v1101 = vmax.f32 %v1069, 0.0
        %v1102 = vmax.f32 %v1070, 0.0
        %v1103 = vmax.f32 %v1071, 0.0
        %v1104 = vmax.f32 %v1072, 0.0
        %v1105 = vmax.f32 %v1073, 0.0
        %v1106 = vmax.f32 %v1074, 0.0
        %v1107 = vmax.f32 %v1075, 0.0
        %v1108 = vmax.f32 %v1076, 0.0
        %v1109 = vmax.f32 %v1077, 0.0
        %v1110 = vmax.f32 %v1078, 0.0
        %v1111 = vmax.f32 %v1079, 0.0
        %v1112 = vpack.c.bf16 %v1082, %v1080
        %v1113 = vpack.c.bf16 %v1083, %v1081
        %v1114 = vpack.c.bf16 %v1086, %v1084
        %v1115 = vpack.c.bf16 %v1087, %v1085
        %v1116 = vpack.c.bf16 %v1090, %v1088
        %v1117 = vpack.c.bf16 %v1091, %v1089
        %v1118 = vpack.c.bf16 %v1094, %v1092
        %v1119 = vpack.c.bf16 %v1095, %v1093
        %v1120 = vpack.c.bf16 %v1098, %v1096
        %v1121 = vpack.c.bf16 %v1099, %v1097
        %v1122 = vpack.c.bf16 %v1102, %v1100
        %v1123 = vpack.c.bf16 %v1103, %v1101
        %v1124 = vpack.c.bf16 %v1106, %v1104
        %v1125 = vpack.c.bf16 %v1107, %v1105
        %v1126 = vpack.c.bf16 %v1110, %v1108
        %v1127 = vpack.c.bf16 %v1111, %v1109
        %v1128 = vld [vmem:[#allocation8] sm:$0xf]
        %v1129 = vld [vmem:[#allocation8 + $0x4] sm:$0xf]
        %v1130 = vld [vmem:[#allocation8 + $0x8] sm:$0xf]
        %v1131 = vld [vmem:[#allocation8 + $0xc] sm:$0xf]
        %v1132 = vld [vmem:[#allocation8 + $0x10] sm:$0xf]
        %v1133 = vld [vmem:[#allocation8 + $0x14] sm:$0xf]
        %v1134 = vld [vmem:[#allocation8 + $0x18] sm:$0xf]
        %v1135 = vld [vmem:[#allocation8 + $0x1c] sm:$0xf]
        %v1136 = vld [vmem:[#allocation8 + $0x20] sm:$0xf]
        %v1137 = vld [vmem:[#allocation8 + $0x24] sm:$0xf]
        %v1138 = vld [vmem:[#allocation8 + $0x28] sm:$0xf]
        %v1139 = vld [vmem:[#allocation8 + $0x2c] sm:$0xf]
        %v1140 = vld [vmem:[#allocation8 + $0x30] sm:$0xf]
        %v1141 = vld [vmem:[#allocation8 + $0x34] sm:$0xf]
        %v1142 = vld [vmem:[#allocation8 + $0x38] sm:$0xf]
        %v1143 = vld [vmem:[#allocation8 + $0x3c] sm:$0xf]
        %v1144 = vld [vmem:[#allocation8 + $0x40] sm:$0xf]
        %v1145 = vld [vmem:[#allocation8 + $0x44] sm:$0xf]
        %v1146 = vld [vmem:[#allocation8 + $0x48] sm:$0xf]
        %v1147 = vld [vmem:[#allocation8 + $0x4c] sm:$0xf]
        %v1148 = vld [vmem:[#allocation8 + $0x50] sm:$0xf]
        %v1149 = vld [vmem:[#allocation8 + $0x54] sm:$0xf]
        %v1150 = vld [vmem:[#allocation8 + $0x58] sm:$0xf]
        %v1151 = vld [vmem:[#allocation8 + $0x5c] sm:$0xf]
        %v1152 = vld [vmem:[#allocation8 + $0x60] sm:$0xf]
        %v1153 = vld [vmem:[#allocation8 + $0x64] sm:$0xf]
        %v1154 = vld [vmem:[#allocation8 + $0x68] sm:$0xf]
        %v1155 = vld [vmem:[#allocation8 + $0x6c] sm:$0xf]
        %v1156 = vld [vmem:[#allocation8 + $0x70] sm:$0xf]
        %v1157 = vld [vmem:[#allocation8 + $0x74] sm:$0xf]
        %v1158 = vld [vmem:[#allocation8 + $0x78] sm:$0xf]
        %v1159 = vld [vmem:[#allocation8 + $0x7c] sm:$0xf]
        %v1160 = vlaneseq
        %v1161 = vshrl.u32 %v1160, 7
        %v1162 = vsub.s32 0, %v1161
        %v1163 = vrot.slane %v302, %v1162
        %v1196 = vunpack.c.l.b16 %v1128
        %v1197 = vunpack.c.l.b16 %v1129
        %v1198 = vunpack.c.l.b16 %v1130
        %v1199 = vunpack.c.l.b16 %v1131
        %v1200 = vunpack.c.l.b16 %v1132
        %v1201 = vunpack.c.l.b16 %v1133
        %v1202 = vunpack.c.l.b16 %v1134
        %v1203 = vunpack.c.l.b16 %v1135
        %v1204 = vunpack.c.l.b16 %v1136
        %v1205 = vunpack.c.l.b16 %v1137
        %v1206 = vunpack.c.l.b16 %v1138
        %v1207 = vunpack.c.l.b16 %v1139
        %v1208 = vunpack.c.l.b16 %v1140
        %v1209 = vunpack.c.l.b16 %v1141
        %v1210 = vunpack.c.l.b16 %v1142
        %v1211 = vunpack.c.l.b16 %v1143
        %v1212 = vunpack.c.l.b16 %v1144
        %v1213 = vunpack.c.l.b16 %v1145
        %v1214 = vunpack.c.l.b16 %v1146
        %v1215 = vunpack.c.l.b16 %v1147
        %v1216 = vunpack.c.l.b16 %v1148
        %v1217 = vunpack.c.l.b16 %v1149
        %v1218 = vunpack.c.l.b16 %v1150
        %v1219 = vunpack.c.l.b16 %v1151
        %v1220 = vunpack.c.l.b16 %v1152
        %v1221 = vunpack.c.l.b16 %v1153
        %v1222 = vunpack.c.l.b16 %v1154
        %v1223 = vunpack.c.l.b16 %v1155
        %v1224 = vunpack.c.l.b16 %v1156
        %v1225 = vunpack.c.l.b16 %v1157
        %v1226 = vunpack.c.l.b16 %v1158
        %v1227 = vunpack.c.l.b16 %v1159
        %v1228 = vpack.c.b16 %v1197, %v1196
        %v1229 = vpack.c.b16 %v1199, %v1198
        %v1230 = vpack.c.b16 %v1201, %v1200
        %v1231 = vpack.c.b16 %v1203, %v1202
        %v1232 = vpack.c.b16 %v1205, %v1204
        %v1233 = vpack.c.b16 %v1207, %v1206
        %v1234 = vpack.c.b16 %v1209, %v1208
        %v1235 = vpack.c.b16 %v1211, %v1210
        %v1236 = vpack.c.b16 %v1213, %v1212
        %v1237 = vpack.c.b16 %v1215, %v1214
        %v1238 = vpack.c.b16 %v1217, %v1216
        %v1239 = vpack.c.b16 %v1219, %v1218
        %v1240 = vpack.c.b16 %v1221, %v1220
        %v1241 = vpack.c.b16 %v1223, %v1222
        %v1242 = vpack.c.b16 %v1225, %v1224
        %v1243 = vpack.c.b16 %v1227, %v1226
        %1260 = vmatprep.subr.bf16.mxu0 0
        %1261 = vmatpush1.bf16.msra.mxu0 %v1235
        %1262 = vmatprep.subr.bf16.mxu0 0
        %1263 = vmatpush1.bf16.msra.mxu0 %v1234
        %1264 = vmatprep.subr.bf16.mxu0 0
        %1265 = vmatpush1.bf16.msra.mxu0 %v1233
        %1266 = vmatprep.subr.bf16.mxu0 0
        %1267 = vmatpush1.bf16.msra.mxu0 %v1232
        %1268 = vmatprep.subr.bf16.mxu0 0
        %1269 = vmatpush1.bf16.msra.mxu0 %v1231
        %1270 = vmatprep.subr.bf16.mxu0 0
        %1271 = vmatpush1.bf16.msra.mxu0 %v1230
        %1272 = vmatprep.subr.bf16.mxu0 0
        %1273 = vmatpush1.bf16.msra.mxu0 %v1229
        %1274 = vmatprep.subr.bf16.mxu0 0
        %1275 = vmatpush1.bf16.msra.mxu0 %v1228
        %1276 = vmatprep.subr.bf16.mxu0 0
        %1277 = vmatpush2.bf16.msra.mxu0 %v1243
        %1278 = vmatprep.subr.bf16.mxu0 0
        %1279 = vmatpush2.bf16.msra.mxu0 %v1242
        %1280 = vmatprep.subr.bf16.mxu0 0
        %1281 = vmatpush2.bf16.msra.mxu0 %v1241
        %1282 = vmatprep.subr.bf16.mxu0 0
        %1283 = vmatpush2.bf16.msra.mxu0 %v1240
        %1284 = vmatprep.subr.bf16.mxu0 0
        %1285 = vmatpush2.bf16.msra.mxu0 %v1239
        %1286 = vmatprep.subr.bf16.mxu0 0
        %1287 = vmatpush2.bf16.msra.mxu0 %v1238
        %1288 = vmatprep.subr.bf16.mxu0 0
        %1289 = vmatpush2.bf16.msra.mxu0 %v1237
        %1290 = vmatprep.subr.bf16.mxu0 0
        %1291 = vmatpush2.bf16.msra.mxu0 %v1236
        %1292 = vmatprep.mubr.bf16.mxu0 %v1113
        %1293 = vmatmul.mubr.bf16.gmra.mxu0 %v1112
        %v1294 = vpop.f32.mrf.mxu0
        %v1295 = vadd.f32 %v1163, %v1294
        %v1296 = vpop.f32.mrf.mxu0
        %v1297 = vpop.f32.mrf.mxu0
        %v1298 = vadd.f32 %v1163, %v1297
        %v1299 = vpop.f32.mrf.mxu0
        %1300 = vmatprep.mubr.bf16.mxu0 %v1115
        %1301 = vmatmul.mubr.bf16.gmra.mxu0 %v1114
        %v1302 = vpop.f32.mrf.mxu0
        %v1303 = vadd.f32 %v1163, %v1302
        %v1304 = vpop.f32.mrf.mxu0
        %v1305 = vpop.f32.mrf.mxu0
        %v1306 = vadd.f32 %v1163, %v1305
        %v1307 = vpop.f32.mrf.mxu0
        %1308 = vmatprep.mubr.bf16.mxu0 %v1117
        %1309 = vmatmul.mubr.bf16.gmra.mxu0 %v1116
        %v1310 = vpop.f32.mrf.mxu0
        %v1311 = vadd.f32 %v1163, %v1310
        %v1312 = vpop.f32.mrf.mxu0
        %v1313 = vpop.f32.mrf.mxu0
        %v1314 = vadd.f32 %v1163, %v1313
        %v1315 = vpop.f32.mrf.mxu0
        %1316 = vmatprep.mubr.bf16.mxu0 %v1119
        %1317 = vmatmul.mubr.bf16.gmra.mxu0 %v1118
        %v1318 = vpop.f32.mrf.mxu0
        %v1319 = vadd.f32 %v1163, %v1318
        %v1320 = vpop.f32.mrf.mxu0
        %v1321 = vpop.f32.mrf.mxu0
        %v1322 = vadd.f32 %v1163, %v1321
        %v1323 = vpop.f32.mrf.mxu0
        %1324 = vmatprep.mubr.bf16.mxu0 %v1121
        %1325 = vmatmul.mubr.bf16.gmra.mxu0 %v1120
        %v1326 = vpop.f32.mrf.mxu0
        %v1327 = vadd.f32 %v1163, %v1326
        %v1328 = vpop.f32.mrf.mxu0
        %v1329 = vpop.f32.mrf.mxu0
        %v1330 = vadd.f32 %v1163, %v1329
        %v1331 = vpop.f32.mrf.mxu0
        %1332 = vmatprep.mubr.bf16.mxu0 %v1123
        %1333 = vmatmul.mubr.bf16.gmra.mxu0 %v1122
        %v1334 = vpop.f32.mrf.mxu0
        %v1335 = vadd.f32 %v1163, %v1334
        %v1336 = vpop.f32.mrf.mxu0
        %v1337 = vpop.f32.mrf.mxu0
        %v1338 = vadd.f32 %v1163, %v1337
        %v1339 = vpop.f32.mrf.mxu0
        %1340 = vmatprep.mubr.bf16.mxu0 %v1125
        %1341 = vmatmul.mubr.bf16.gmra.mxu0 %v1124
        %v1342 = vpop.f32.mrf.mxu0
        %v1343 = vadd.f32 %v1163, %v1342
        %v1344 = vpop.f32.mrf.mxu0
        %v1345 = vpop.f32.mrf.mxu0
        %v1346 = vadd.f32 %v1163, %v1345
        %v1347 = vpop.f32.mrf.mxu0
        %1348 = vmatprep.mubr.bf16.mxu0 %v1127
        %1349 = vmatmul.mubr.bf16.gmra.mxu0 %v1126
        %v1350 = vpop.f32.mrf.mxu0
        %v1351 = vadd.f32 %v1163, %v1350
        %v1352 = vpop.f32.mrf.mxu0
        %v1353 = vpop.f32.mrf.mxu0
        %v1354 = vadd.f32 %v1163, %v1353
        %v1355 = vpop.f32.mrf.mxu0
        %1356 = vdwg.mxu0
        %1357 = vadd.xlane.f32.xlu0 %v1295
        %v1358 = vpop.xlane.xlu0 %1357
        %1359 = vadd.xlane.f32.xlu0 %v1298
        %v1360 = vpop.xlane.xlu0 %1359
        %1361 = vadd.xlane.f32.xlu0 %v1303
        %v1362 = vpop.xlane.xlu0 %1361
        %1363 = vadd.xlane.f32.xlu0 %v1306
        %v1364 = vpop.xlane.xlu0 %1363
        %1365 = vadd.xlane.f32.xlu0 %v1311
        %v1366 = vpop.xlane.xlu0 %1365
        %1367 = vadd.xlane.f32.xlu0 %v1314
        %v1368 = vpop.xlane.xlu0 %1367
        %1369 = vadd.xlane.f32.xlu0 %v1319
        %v1370 = vpop.xlane.xlu0 %1369
        %1371 = vadd.xlane.f32.xlu0 %v1322
        %v1372 = vpop.xlane.xlu0 %1371
        %1373 = vadd.xlane.f32.xlu0 %v1327
        %v1374 = vpop.xlane.xlu0 %1373
        %1375 = vadd.xlane.f32.xlu0 %v1330
        %v1376 = vpop.xlane.xlu0 %1375
        %1377 = vadd.xlane.f32.xlu0 %v1335
        %v1378 = vpop.xlane.xlu0 %1377
        %1379 = vadd.xlane.f32.xlu0 %v1338
        %v1380 = vpop.xlane.xlu0 %1379
        %1381 = vadd.xlane.f32.xlu0 %v1343
        %v1382 = vpop.xlane.xlu0 %1381
        %1383 = vadd.xlane.f32.xlu0 %v1346
        %v1384 = vpop.xlane.xlu0 %1383
        %1385 = vadd.xlane.f32.xlu0 %v1351
        %v1386 = vpop.xlane.xlu0 %1385
        %1387 = vadd.xlane.f32.xlu0 %v1354
        %v1388 = vpop.xlane.xlu0 %1387
        %v1389 = vrcp.pop 128.0
        %v1390 = vmul.f32 %v1358, %v1389
        %v1391 = vmul.f32 %v1360, %v1389
        %v1392 = vmul.f32 %v1362, %v1389
        %v1393 = vmul.f32 %v1364, %v1389
        %v1394 = vmul.f32 %v1366, %v1389
        %v1395 = vmul.f32 %v1368, %v1389
        %v1396 = vmul.f32 %v1370, %v1389
        %v1397 = vmul.f32 %v1372, %v1389
        %v1398 = vmul.f32 %v1374, %v1389
        %v1399 = vmul.f32 %v1376, %v1389
        %v1400 = vmul.f32 %v1378, %v1389
        %v1401 = vmul.f32 %v1380, %v1389
        %v1402 = vmul.f32 %v1382, %v1389
        %v1403 = vmul.f32 %v1384, %v1389
        %v1404 = vmul.f32 %v1386, %v1389
        %v1405 = vmul.f32 %v1388, %v1389
        %v1406 = vmul.f32 %v1295, %v1295
        %v1407 = vmul.f32 %v1298, %v1298
        %v1408 = vmul.f32 %v1303, %v1303
        %v1409 = vmul.f32 %v1306, %v1306
        %v1410 = vmul.f32 %v1311, %v1311
        %v1411 = vmul.f32 %v1314, %v1314
        %v1412 = vmul.f32 %v1319, %v1319
        %v1413 = vmul.f32 %v1322, %v1322
        %v1414 = vmul.f32 %v1327, %v1327
        %v1415 = vmul.f32 %v1330, %v1330
        %v1416 = vmul.f32 %v1335, %v1335
        %v1417 = vmul.f32 %v1338, %v1338
        %v1418 = vmul.f32 %v1343, %v1343
        %v1419 = vmul.f32 %v1346, %v1346
        %v1420 = vmul.f32 %v1351, %v1351
        %v1421 = vmul.f32 %v1354, %v1354
        %1422 = vadd.xlane.f32.xlu0 %v1406
        %v1423 = vpop.xlane.xlu0 %1422
        %1424 = vadd.xlane.f32.xlu0 %v1407
        %v1425 = vpop.xlane.xlu0 %1424
        %1426 = vadd.xlane.f32.xlu0 %v1408
        %v1427 = vpop.xlane.xlu0 %1426
        %1428 = vadd.xlane.f32.xlu0 %v1409
        %v1429 = vpop.xlane.xlu0 %1428
        %1430 = vadd.xlane.f32.xlu0 %v1410
        %v1431 = vpop.xlane.xlu0 %1430
        %1432 = vadd.xlane.f32.xlu0 %v1411
        %v1433 = vpop.xlane.xlu0 %1432
        %1434 = vadd.xlane.f32.xlu0 %v1412
        %v1435 = vpop.xlane.xlu0 %1434
        %1436 = vadd.xlane.f32.xlu0 %v1413
        %v1437 = vpop.xlane.xlu0 %1436
        %1438 = vadd.xlane.f32.xlu0 %v1414
        %v1439 = vpop.xlane.xlu0 %1438
        %1440 = vadd.xlane.f32.xlu0 %v1415
        %v1441 = vpop.xlane.xlu0 %1440
        %1442 = vadd.xlane.f32.xlu0 %v1416
        %v1443 = vpop.xlane.xlu0 %1442
        %1444 = vadd.xlane.f32.xlu0 %v1417
        %v1445 = vpop.xlane.xlu0 %1444
        %1446 = vadd.xlane.f32.xlu0 %v1418
        %v1447 = vpop.xlane.xlu0 %1446
        %1448 = vadd.xlane.f32.xlu0 %v1419
        %v1449 = vpop.xlane.xlu0 %1448
        %1450 = vadd.xlane.f32.xlu0 %v1420
        %v1451 = vpop.xlane.xlu0 %1450
        %1452 = vadd.xlane.f32.xlu0 %v1421
        %v1453 = vpop.xlane.xlu0 %1452
        %v1454 = vmul.f32 %v1423, %v1389
        %v1455 = vmul.f32 %v1425, %v1389
        %v1456 = vmul.f32 %v1427, %v1389
        %v1457 = vmul.f32 %v1429, %v1389
        %v1458 = vmul.f32 %v1431, %v1389
        %v1459 = vmul.f32 %v1433, %v1389
        %v1460 = vmul.f32 %v1435, %v1389
        %v1461 = vmul.f32 %v1437, %v1389
        %v1462 = vmul.f32 %v1439, %v1389
        %v1463 = vmul.f32 %v1441, %v1389
        %v1464 = vmul.f32 %v1443, %v1389
        %v1465 = vmul.f32 %v1445, %v1389
        %v1466 = vmul.f32 %v1447, %v1389
        %v1467 = vmul.f32 %v1449, %v1389
        %v1468 = vmul.f32 %v1451, %v1389
        %v1469 = vmul.f32 %v1453, %v1389
        %v1470 = vmul.f32 %v1390, %v1390
        %v1471 = vmul.f32 %v1391, %v1391
        %v1472 = vmul.f32 %v1392, %v1392
        %v1473 = vmul.f32 %v1393, %v1393
        %v1474 = vmul.f32 %v1394, %v1394
        %v1475 = vmul.f32 %v1395, %v1395
        %v1476 = vmul.f32 %v1396, %v1396
        %v1477 = vmul.f32 %v1397, %v1397
        %v1478 = vmul.f32 %v1398, %v1398
        %v1479 = vmul.f32 %v1399, %v1399
        %v1480 = vmul.f32 %v1400, %v1400
        %v1481 = vmul.f32 %v1401, %v1401
        %v1482 = vmul.f32 %v1402, %v1402
        %v1483 = vmul.f32 %v1403, %v1403
        %v1484 = vmul.f32 %v1404, %v1404
        %v1485 = vmul.f32 %v1405, %v1405
        %v1486 = vsub.f32 %v1454, %v1470
        %v1487 = vsub.f32 %v1455, %v1471
        %v1488 = vsub.f32 %v1456, %v1472
        %v1489 = vsub.f32 %v1457, %v1473
        %v1490 = vsub.f32 %v1458, %v1474
        %v1491 = vsub.f32 %v1459, %v1475
        %v1492 = vsub.f32 %v1460, %v1476
        %v1493 = vsub.f32 %v1461, %v1477
        %v1494 = vsub.f32 %v1462, %v1478
        %v1495 = vsub.f32 %v1463, %v1479
        %v1496 = vsub.f32 %v1464, %v1480
        %v1497 = vsub.f32 %v1465, %v1481
        %v1498 = vsub.f32 %v1466, %v1482
        %v1499 = vsub.f32 %v1467, %v1483
        %v1500 = vsub.f32 %v1468, %v1484
        %v1501 = vsub.f32 %v1469, %v1485
        %v1502 = vmax.f32 %v1486, 0.0
        %v1503 = vmax.f32 %v1487, 0.0
        %v1504 = vmax.f32 %v1488, 0.0
        %v1505 = vmax.f32 %v1489, 0.0
        %v1506 = vmax.f32 %v1490, 0.0
        %v1507 = vmax.f32 %v1491, 0.0
        %v1508 = vmax.f32 %v1492, 0.0
        %v1509 = vmax.f32 %v1493, 0.0
        %v1510 = vmax.f32 %v1494, 0.0
        %v1511 = vmax.f32 %v1495, 0.0
        %v1512 = vmax.f32 %v1496, 0.0
        %v1513 = vmax.f32 %v1497, 0.0
        %v1514 = vmax.f32 %v1498, 0.0
        %v1515 = vmax.f32 %v1499, 0.0
        %v1516 = vmax.f32 %v1500, 0.0
        %v1517 = vmax.f32 %v1501, 0.0
        %v1518 = vsub.f32 %v1295, %v1390
        %v1519 = vsub.f32 %v1298, %v1391
        %v1520 = vsub.f32 %v1303, %v1392
        %v1521 = vsub.f32 %v1306, %v1393
        %v1522 = vsub.f32 %v1311, %v1394
        %v1523 = vsub.f32 %v1314, %v1395
        %v1524 = vsub.f32 %v1319, %v1396
        %v1525 = vsub.f32 %v1322, %v1397
        %v1526 = vsub.f32 %v1327, %v1398
        %v1527 = vsub.f32 %v1330, %v1399
        %v1528 = vsub.f32 %v1335, %v1400
        %v1529 = vsub.f32 %v1338, %v1401
        %v1530 = vsub.f32 %v1343, %v1402
        %v1531 = vsub.f32 %v1346, %v1403
        %v1532 = vsub.f32 %v1351, %v1404
        %v1533 = vsub.f32 %v1354, %v1405
        %v1534 = vadd.f32 %v1502, 1e-05
        %v1535 = vadd.f32 %v1503, 1e-05
        %v1536 = vadd.f32 %v1504, 1e-05
        %v1537 = vadd.f32 %v1505, 1e-05
        %v1538 = vadd.f32 %v1506, 1e-05
        %v1539 = vadd.f32 %v1507, 1e-05
        %v1540 = vadd.f32 %v1508, 1e-05
        %v1541 = vadd.f32 %v1509, 1e-05
        %v1542 = vadd.f32 %v1510, 1e-05
        %v1543 = vadd.f32 %v1511, 1e-05
        %v1544 = vadd.f32 %v1512, 1e-05
        %v1545 = vadd.f32 %v1513, 1e-05
        %v1546 = vadd.f32 %v1514, 1e-05
        %v1547 = vadd.f32 %v1515, 1e-05
        %v1548 = vadd.f32 %v1516, 1e-05
        %v1549 = vadd.f32 %v1517, 1e-05
        %v1550 = vrsqrt.pop %v1534
        %v1551 = vrsqrt.pop %v1535
        %v1552 = vrsqrt.pop %v1536
        %v1553 = vrsqrt.pop %v1537
        %v1554 = vrsqrt.pop %v1538
        %v1555 = vrsqrt.pop %v1539
        %v1556 = vrsqrt.pop %v1540
        %v1557 = vrsqrt.pop %v1541
        %v1558 = vrsqrt.pop %v1542
        %v1559 = vrsqrt.pop %v1543
        %v1560 = vrsqrt.pop %v1544
        %v1561 = vrsqrt.pop %v1545
        %v1562 = vrsqrt.pop %v1546
        %v1563 = vrsqrt.pop %v1547
        %v1564 = vrsqrt.pop %v1548
        %v1565 = vrsqrt.pop %v1549
        %v1566 = vmul.f32 %v1518, %v1550
        %v1567 = vmul.f32 %v1519, %v1551
        %v1568 = vmul.f32 %v1520, %v1552
        %v1569 = vmul.f32 %v1521, %v1553
        %v1570 = vmul.f32 %v1522, %v1554
        %v1571 = vmul.f32 %v1523, %v1555
        %v1572 = vmul.f32 %v1524, %v1556
        %v1573 = vmul.f32 %v1525, %v1557
        %v1574 = vmul.f32 %v1526, %v1558
        %v1575 = vmul.f32 %v1527, %v1559
        %v1576 = vmul.f32 %v1528, %v1560
        %v1577 = vmul.f32 %v1529, %v1561
        %v1578 = vmul.f32 %v1530, %v1562
        %v1579 = vmul.f32 %v1531, %v1563
        %v1580 = vmul.f32 %v1532, %v1564
        %v1581 = vmul.f32 %v1533, %v1565
        %v1582 = vlaneseq
        %v1583 = vshrl.u32 %v1582, 7
        %v1584 = vsub.s32 1, %v1583
        %v1585 = vrot.slane %v302, %v1584
        %v1586 = vmul.f32 %v1566, %v1585
        %v1587 = vmul.f32 %v1567, %v1585
        %v1588 = vmul.f32 %v1568, %v1585
        %v1589 = vmul.f32 %v1569, %v1585
        %v1590 = vmul.f32 %v1570, %v1585
        %v1591 = vmul.f32 %v1571, %v1585
        %v1592 = vmul.f32 %v1572, %v1585
        %v1593 = vmul.f32 %v1573, %v1585
        %v1594 = vmul.f32 %v1574, %v1585
        %v1595 = vmul.f32 %v1575, %v1585
        %v1596 = vmul.f32 %v1576, %v1585
        %v1597 = vmul.f32 %v1577, %v1585
        %v1598 = vmul.f32 %v1578, %v1585
        %v1599 = vmul.f32 %v1579, %v1585
        %v1600 = vmul.f32 %v1580, %v1585
        %v1601 = vmul.f32 %v1581, %v1585
        %v1602 = vlaneseq
        %v1603 = vshrl.u32 %v1602, 7
        %v1604 = vsub.s32 2, %v1603
        %v1605 = vrot.slane %v302, %v1604
        %v1606 = vadd.f32 %v1586, %v1605
        %v1607 = vadd.f32 %v1587, %v1605
        %v1608 = vadd.f32 %v1588, %v1605
        %v1609 = vadd.f32 %v1589, %v1605
        %v1610 = vadd.f32 %v1590, %v1605
        %v1611 = vadd.f32 %v1591, %v1605
        %v1612 = vadd.f32 %v1592, %v1605
        %v1613 = vadd.f32 %v1593, %v1605
        %v1614 = vadd.f32 %v1594, %v1605
        %v1615 = vadd.f32 %v1595, %v1605
        %v1616 = vadd.f32 %v1596, %v1605
        %v1617 = vadd.f32 %v1597, %v1605
        %v1618 = vadd.f32 %v1598, %v1605
        %v1619 = vadd.f32 %v1599, %v1605
        %v1620 = vadd.f32 %v1600, %v1605
        %v1621 = vadd.f32 %v1601, %v1605
        %v1622 = vmax.f32 %v1606, 0.0
        %v1623 = vmax.f32 %v1607, 0.0
        %v1624 = vmax.f32 %v1608, 0.0
        %v1625 = vmax.f32 %v1609, 0.0
        %v1626 = vmax.f32 %v1610, 0.0
        %v1627 = vmax.f32 %v1611, 0.0
        %v1628 = vmax.f32 %v1612, 0.0
        %v1629 = vmax.f32 %v1613, 0.0
        %v1630 = vmax.f32 %v1614, 0.0
        %v1631 = vmax.f32 %v1615, 0.0
        %v1632 = vmax.f32 %v1616, 0.0
        %v1633 = vmax.f32 %v1617, 0.0
        %v1634 = vmax.f32 %v1618, 0.0
        %v1635 = vmax.f32 %v1619, 0.0
        %v1636 = vmax.f32 %v1620, 0.0
        %v1637 = vmax.f32 %v1621, 0.0
        %1638 = vst [vmem:[%s297] sm:$0xff] %v1622
        %1639 = vst [vmem:[%s297 + $0x8] sm:$0xff] %v1623
        %1640 = vst [vmem:[%s297 + $0x10] sm:$0xff] %v1624
        %1641 = vst [vmem:[%s297 + $0x18] sm:$0xff] %v1625
        %1642 = vst [vmem:[%s297 + $0x20] sm:$0xff] %v1626
        %1643 = vst [vmem:[%s297 + $0x28] sm:$0xff] %v1627
        %1644 = vst [vmem:[%s297 + $0x30] sm:$0xff] %v1628
        %1645 = vst [vmem:[%s297 + $0x38] sm:$0xff] %v1629
        %1646 = vst [vmem:[%s297 + $0x40] sm:$0xff] %v1630
        %1647 = vst [vmem:[%s297 + $0x48] sm:$0xff] %v1631
        %1648 = vst [vmem:[%s297 + $0x50] sm:$0xff] %v1632
        %1649 = vst [vmem:[%s297 + $0x58] sm:$0xff] %v1633
        %1650 = vst [vmem:[%s297 + $0x60] sm:$0xff] %v1634
        %1651 = vst [vmem:[%s297 + $0x68] sm:$0xff] %v1635
        %1652 = vst [vmem:[%s297 + $0x70] sm:$0xff] %v1636
        %1653 = vst [vmem:[%s297 + $0x78] sm:$0xff] %v1637
        %s1654 = sand.u32 %s142, 1
        %s1655 = scalar_lea.sflag [#allocation4], %s1654
        %s1656 = sand.u32 %s142, 1
        %s1657 = smul.addr %s1656, 128
        %s1658 = scalar_lea.vmem [#allocation11], %s1657
        // Predicated region
        $region61: #{_fnn_forward.1} parent=39 // pred_check
          %p1659 = pneg %p152
        $region62: #{_fnn_forward.1} parent=39 // pred_check_branch
          %1661 = sbr.rel (%p1659) target = $region64
        $region63: #{_fnn_forward.1} parent=39 // pred_region
          %s1662 = smul.u32 16, %s24
          %s1664 = ssub.s32 2048, 2048
          %1665 = vsyncadd %s1655, %s1664
          %s1666 = smul.addr %s1662, 128
          %s1667 = scalar_lea.hbm %s5, %s1666
          %s1668 = sshll.u32 %s1658, 4
          %s1669 = int_to_ptr.vmem [resolvable:$true] %s1668
          %1674 = dma.vmem_to_hbm [thread:$0]  %s1669, 2048, %s1667, %s1655, 128, 128, 8
        $region64: #{_fnn_forward.1} parent=39 // pred_fallthru
          _
      $region40: #{_fnn_forward.1} parent=5 // pred_fallthru
        _
      %p1675 = scmp.le.s32.totalorder 2, %s19
      // Predicated region
      $region65: #{_fnn_forward.1} parent=5 // pred_check
        %p1676 = pneg %p1675
      $region66: #{_fnn_forward.1} parent=5 // pred_check_branch
        %1678 = sbr.rel (%p1676) target = $region68
      $region67: #{_fnn_forward.1} parent=5 // pred_region
        %s1679 = ssub.s32 %s19, 2
        // Predicated region
        $region69: #{_fnn_forward.1} parent=67 // pred_check
          %p1680 = pneg %p158
        $region70: #{_fnn_forward.1} parent=67 // pred_check_branch
          %1682 = sbr.rel (%p1680) target = $region72
        $region71: #{_fnn_forward.1} parent=67 // pred_region
          %s1683 = sand.u32 %s143, 1
          %s1684 = scalar_lea.sflag [#allocation4], %s1683
          %s1685 = sand.u32 %s143, 1
          %s1686 = smul.addr %s1685, 128
          %s1687 = scalar_lea.vmem [#allocation11], %s1686
          %1688 = dma.done %s1684, 2048
        $region72: #{_fnn_forward.1} parent=67 // pred_fallthru
          _
      $region68: #{_fnn_forward.1} parent=5 // pred_fallthru
        _
    $region6: #{_fnn_forward.1} parent=1 // loop_footer
      %s23 = sadd.s32 1, %s19
    $region7: #{_fnn_forward.1} parent=1 // loop_footer_branch
      %18 = sbr.rel target = $region3
    $region8: #{_fnn_forward.1} parent=1 // loop_exit
      _
    %1689 = vsyncpa [#allocation3], 1
    %s1690 = scalar_lea.sflag [#allocation3], 1
    %1691 = vsyncpa %s1690, 1
    %1692 = vsyncpa [#allocation6], 1
    %1693 = vsyncpa [#allocation9], 1
    %1694 = vsyncpa [#allocation4], 1
    %s1695 = scalar_lea.sflag [#allocation4], 1
    %1696 = vsyncpa %s1695, 1

</llo_original>
